<compile_context>
chip_gen: v7x
topology: tpu7x:2x2x1
jax: 0.10.0
libtpu: 0.0.40
codegen_flags: <defaults>
</compile_context>

<pallas_src>
import jax
import jax.numpy as jnp
from jax.experimental import pallas as pl
from jax.experimental.pallas import tpu as pltpu


def _round_up(c, m=128):
    return ((c + m - 1) // m) * m


def _vmem_limit_bytes():
    # ~3/4 of physical VMEM: ~48 MiB on v7x (64 MiB/TC), ~96 MiB on v5e/v6e.
    try:
        cap = pltpu.get_tpu_info().vmem_capacity_bytes
    except Exception:
        cap = 64 * 1024 * 1024
    return int(min(cap * 3 // 4, 100 * 1024 * 1024))


_VMEM_LIMIT = _vmem_limit_bytes()


def _choose_tiling(N, H, W):
    """Pick (#images per grid step, #H-stripes)."""
    n_stripes = 1
    if H * W > 1024:                                   # stripe big feature maps
        for cand in range(2, H + 1):
            if H % cand:
                continue
            hs = H // cand
            if hs * W <= 1024 and (hs * W) % 8 == 0:   # keep reshapes tile-aligned
                n_stripes = cand
                break
    hs = H // n_stripes
    b_blk = 1                                          # batch small feature maps
    while 2 * b_blk <= N and N % (2 * b_blk) == 0 and b_blk * hs * W < 512:
        b_blk *= 2
    return b_blk, n_stripes


def _bottleneck_kernel(x_ref, w1_ref, b1_ref, w2_ref, b2_ref, w3_ref, b3_ref,
                       o_ref, pad_ref):
    B, Hh, W, Cin = x_ref.shape            # Hh = Hs + 2 (stripe + 1-row halo)
    Hs = Hh - 2
    Wd = w1_ref.shape[1]                   # bottleneck width (padded)
    Cout = w3_ref.shape[1]                 # output channels (padded)
    M = B * Hs * W                         # output pixels this step
    Mh = B * Hh * W                        # haloed pixels (conv1 domain)
    s = pl.program_id(1)

    # ---- conv1 (1x1, BN folded) + bias + ReLU over the haloed stripe --------
    xh = x_ref[...].reshape(Mh, Cin)
    out1 = jnp.dot(xh.astype(jnp.bfloat16), w1_ref[...],
                   preferred_element_type=jnp.float32)
    out1 = jnp.maximum(out1 + b1_ref[...], 0.0)

    # Write straight into the bf16 halo scratch (interior columns only).
    pad_ref[:, :, pl.ds(1, W), :] = out1.astype(jnp.bfloat16).reshape(B, Hh, W, Wd)
    # Zero only the border: left/right columns every step (tiny); top/bottom
    # rows only where the stripe touches the image boundary — conv2 zero-pads
    # in out1 space (the host-side zero x rows would otherwise give relu(b1)).
    zcol = jnp.zeros((B, Hh, 1, Wd), jnp.bfloat16)
    pad_ref[:, :, pl.ds(0, 1), :] = zcol
    pad_ref[:, :, pl.ds(W + 1, 1), :] = zcol
    zrow = jnp.zeros((B, 1, W + 2, Wd), jnp.bfloat16)

    @pl.when(s == 0)
    def _():
        pad_ref[:, pl.ds(0, 1), :, :] = zrow

    @pl.when(s == pl.num_programs(1) - 1)
    def _():
        pad_ref[:, pl.ds(Hs + 1, 1), :, :] = zrow

    # ---- conv2 (3x3, stride=1, pad=1): 9 per-tap matmuls, f32 accumulator ---
    # TODO(synk): on v6e/v7x, pairing taps into K=256 chunks would fully fill
    #             the 256-deep MXU; K=128 per tap is MXU-native on v5e.
    acc = jnp.zeros((M, Wd), jnp.float32)
    for tap in range(9):
        dy, dx = tap // 3, tap % 3
        slab = pad_ref[:, pl.ds(dy, Hs), pl.ds(dx, W), :].reshape(M, Wd)
        acc = acc + jnp.dot(slab, w2_ref[pl.ds(tap * Wd, Wd), :],
                            preferred_element_type=jnp.float32)
    out2 = jnp.maximum(acc + b2_ref[...], 0.0)

    # ---- conv3 (1x1) + bias + identity residual + ReLU ----------------------
    out3 = jnp.dot(out2.astype(jnp.bfloat16), w3_ref[...],
                   preferred_element_type=jnp.float32)
    resid = x_ref[:, pl.ds(1, Hs), :, :].reshape(M, Cout)   # reload residual late
    out3 = out3 + b3_ref[...] + resid
    o_ref[...] = jnp.maximum(out3, 0.0).reshape(B, Hs, W, Cout)


def _fold_bn(gamma, beta, mean, var, eps=1e-5):
    scale = gamma / jnp.sqrt(var + eps)
    bias = beta - mean * scale
    return scale.astype(jnp.float32), bias.astype(jnp.float32)


@jax.jit
def bottleneck_forward(x_nchw, w1_oihw, w2_oihw, w3_oihw, bn1, bn2, bn3):
    """PyTorch-convention inputs: x NCHW, conv weights OIHW, bn* = (g, b, mean, var)."""
    x = jnp.transpose(x_nchw, (0, 2, 3, 1)).astype(jnp.float32)       # NHWC
    N, H, W, Cin = x.shape
    Wd = w1_oihw.shape[0]
    Cout = w3_oihw.shape[0]
    if Cin != Cout:
        raise ValueError("identity residual path requires inplanes == planes*4")

    # NOTE: channels are zero-padded to multiples of 128 for lane-dense stores;
    # for real ResNet widths (64..512) that is at most 2x MXU waste, but tiny
    # demo widths (e.g. 8) are mostly padding.
    Cin_p, Wd_p, Cout_p = _round_up(Cin), _round_up(Wd), _round_up(Cout)

    B_blk, n_stripes = _choose_tiling(N, H, W)
    Hs = H // n_stripes
    nbb = N // B_blk                      # number of batch blocks

    s1, b1 = _fold_bn(*bn1)
    s2, b2 = _fold_bn(*bn2)
    s3, b3 = _fold_bn(*bn3)

    # Channel-last matmul weights with BN scale folded into the output channel.
    w1 = jnp.transpose(w1_oihw[:, :, 0, 0], (1, 0)) * s1[None, :]          # (Cin, Wd)
    w2 = jnp.transpose(w2_oihw, (2, 3, 1, 0)) * s2[None, None, None, :]    # (3,3,Wd,Wd) HWIO
    w3 = jnp.transpose(w3_oihw[:, :, 0, 0], (1, 0)) * s3[None, :]          # (Wd, Cout)

    w1p = jnp.zeros((Cin_p, Wd_p), jnp.float32).at[:Cin, :Wd].set(w1).astype(jnp.bfloat16)
    w2p = jnp.zeros((3, 3, Wd_p, Wd_p), jnp.float32).at[:, :, :Wd, :Wd].set(w2)
    w2p = w2p.reshape(9 * Wd_p, Wd_p).astype(jnp.bfloat16)
    w3p = jnp.zeros((Wd_p, Cout_p), jnp.float32).at[:Wd, :Cout].set(w3).astype(jnp.bfloat16)
    b1p = jnp.zeros((1, Wd_p), jnp.float32).at[0, :Wd].set(b1)
    b2p = jnp.zeros((1, Wd_p), jnp.float32).at[0, :Wd].set(b2)
    b3p = jnp.zeros((1, Cout_p), jnp.float32).at[0, :Cout].set(b3)

    # Zero-pad channels, add a 1-row zero halo, gather overlapping H-stripes
    # (stripe-major so one grid step sees B_blk images of the SAME stripe).
    xp = jnp.zeros((N, H, W, Cin_p), jnp.float32).at[..., :Cin].set(x)
    xpad = jnp.pad(xp, ((0, 0), (1, 1), (0, 0), (0, 0)))
    x_str = jnp.stack(
        [xpad[:, i * Hs:i * Hs + Hs + 2] for i in range(n_stripes)],
        axis=0).reshape(n_stripes * N, Hs + 2, W, Cin_p)

    flops = 2 * N * (n_stripes * (Hs + 2) * W * Cin_p * Wd_p
                     + H * W * (9 * Wd_p * Wd_p + Wd_p * Cout_p))
    bytes_accessed = (x_str.size * 4 + N * H * W * Cout_p * 4
                      + (w1p.size + w2p.size + w3p.size) * 2
                      + (b1p.size + b2p.size + b3p.size) * 4)

    out_nhwc = pl.pallas_call(
        _bottleneck_kernel,
        out_shape=jax.ShapeDtypeStruct((N, H, W, Cout_p), jnp.float32),
        grid_spec=pltpu.PrefetchScalarGridSpec(
            num_scalar_prefetch=0,
            grid=(nbb, n_stripes),
            in_specs=[
                pl.BlockSpec((B_blk, Hs + 2, W, Cin_p),
                             lambda n, s: (s * nbb + n, 0, 0, 0)),
                pl.BlockSpec((Cin_p, Wd_p), lambda n, s: (0, 0)),
                pl.BlockSpec((1, Wd_p), lambda n, s: (0, 0)),
                pl.BlockSpec((9 * Wd_p, Wd_p), lambda n, s: (0, 0)),
                pl.BlockSpec((1, Wd_p), lambda n, s: (0, 0)),
                pl.BlockSpec((Wd_p, Cout_p), lambda n, s: (0, 0)),
                pl.BlockSpec((1, Cout_p), lambda n, s: (0, 0)),
            ],
            out_specs=pl.BlockSpec((B_blk, Hs, W, Cout_p),
                                   lambda n, s: (n, s, 0, 0)),
            scratch_shapes=[pltpu.VMEM((B_blk, Hs + 2, W + 2, Wd_p), jnp.bfloat16)],
        ),
        compiler_params=pltpu.CompilerParams(
            dimension_semantics=("parallel", "parallel"),
            vmem_limit_bytes=_VMEM_LIMIT,
        ),
        cost_estimate=pl.CostEstimate(
            flops=flops, transcendentals=0, bytes_accessed=bytes_accessed),
    )(x_str, w1p, b1p, w2p, b2p, w3p, b3p)

    out = out_nhwc[..., :Cout]                     # drop channel padding
    return jnp.transpose(out, (0, 3, 1, 2))        # -> NCHW


# ------------------------- pure-JAX reference (NCHW) -------------------------
def _reference_forward(x, w1, w2, w3, bn1, bn2, bn3):
    def bn(y, p):
        g, b, m, v = p
        sh = (1, -1, 1, 1)
        return (y - m.reshape(sh)) / jnp.sqrt(v.reshape(sh) + 1e-5) * g.reshape(sh) + b.reshape(sh)

    def conv(y, w, pad):
        return jax.lax.conv_general_dilated(
            y, w, (1, 1), pad, dimension_numbers=('NCHW', 'OIHW', 'NCHW'))

    out = jax.nn.relu(bn(conv(x, w1, 'VALID'), bn1))
    out = jax.nn.relu(bn(conv(out, w2, ((1, 1), (1, 1))), bn2))
    out = bn(conv(out, w3, 'VALID'), bn3)
    return jax.nn.relu(out + x)


if __name__ == "__main__":
    key = jax.random.PRNGKey(0)
    # Bottleneck(inplanes=32, planes=8): width=8, out=32, stride=1, downsample=None.
    inplanes, planes = 32, 8
    width = planes
    cout = planes * 4

    ks = jax.random.split(key, 8)
    w1 = jax.random.normal(ks[1], (width, inplanes, 1, 1), jnp.float32) * 0.1
    w2 = jax.random.normal(ks[2], (width, width, 3, 3), jnp.float32) * 0.1
    w3 = jax.random.normal(ks[3], (cout, width, 1, 1), jnp.float32) * 0.1

    def make_bn(k, c):
        k1, k2, k3, k4 = jax.random.split(k, 4)
        gamma = 0.5 + jax.random.uniform(k1, (c,), jnp.float32)
        beta = jax.random.normal(k2, (c,), jnp.float32) * 0.1
        mean = jax.random.normal(k3, (c,), jnp.float32) * 0.1
        var = 0.5 + jax.random.uniform(k4, (c,), jnp.float32)
        return (gamma, beta, mean, var)

    bn1 = make_bn(ks[4], width)
    bn2 = make_bn(ks[5], width)
    bn3 = make_bn(ks[6], cout)

    # Test 1: small spatial map -> multi-image batching path (B_blk=2, 1 stripe).
    x = jax.random.normal(ks[0], (2, inplanes, 8, 8), jnp.float32)
    out = jax.block_until_ready(bottleneck_forward(x, w1, w2, w3, bn1, bn2, bn3))
    ref = _reference_forward(x, w1, w2, w3, bn1, bn2, bn3)
    assert out.shape == (2, cout, 8, 8)
    # Tolerance accounts for bf16 MXU operands (f32 accumulation) in the kernel.
    assert jnp.allclose(out, ref, rtol=3e-2, atol=3e-2), float(jnp.max(jnp.abs(out - ref)))

    # Test 2: larger spatial map -> H-stripe tiling path (2 stripes, N=1).
    x2 = jax.random.normal(ks[7], (1, inplanes, 40, 40), jnp.float32)
    out2 = jax.block_until_ready(bottleneck_forward(x2, w1, w2, w3, bn1, bn2, bn3))
    ref2 = _reference_forward(x2, w1, w2, w3, bn1, bn2, bn3)
    assert out2.shape == (1, cout, 40, 40)
    assert jnp.allclose(out2, ref2, rtol=3e-2, atol=3e-2), float(jnp.max(jnp.abs(out2 - ref2)))

    print("KERNEL_OK")
</pallas_src>

<mosaic_0001>
module attributes {stable_mosaic.version = 11 : i64} {
  func.func @_bottleneck_kernel(%arg0: i32, %arg1: i32, %arg2: memref<2x10x8x128xf32, #tpu.memory_space<vmem>>, %arg3: memref<128x128xbf16, #tpu.memory_space<vmem>>, %arg4: memref<1x128xf32, #tpu.memory_space<vmem>>, %arg5: memref<1152x128xbf16, #tpu.memory_space<vmem>>, %arg6: memref<1x128xf32, #tpu.memory_space<vmem>>, %arg7: memref<128x128xbf16, #tpu.memory_space<vmem>>, %arg8: memref<1x128xf32, #tpu.memory_space<vmem>>, %arg9: memref<2x8x8x128xf32, #tpu.memory_space<vmem>>, %arg10: memref<2x10x10x128xbf16, #tpu.memory_space<vmem>>) attributes {dimension_semantics = [#tpu.dimension_semantics<parallel>, #tpu.dimension_semantics<parallel>], iteration_bounds = array<i64: 1, 1>, scalar_prefetch = 0 : i64, scratch_operands = 1 : i64, tpu.core_type = #tpu.core_type<tc>, window_params = [{transform_indices = @transform_0, window_bounds = array<i64: 2, 10, 8, 128>}, {pipeline_mode = #tpu.pipeline_mode<synchronous>, transform_indices = @transform_1, window_bounds = array<i64: 128, 128>}, {pipeline_mode = #tpu.pipeline_mode<synchronous>, transform_indices = @transform_2, window_bounds = array<i64: 1, 128>}, {pipeline_mode = #tpu.pipeline_mode<synchronous>, transform_indices = @transform_3, window_bounds = array<i64: 1152, 128>}, {pipeline_mode = #tpu.pipeline_mode<synchronous>, transform_indices = @transform_4, window_bounds = array<i64: 1, 128>}, {pipeline_mode = #tpu.pipeline_mode<synchronous>, transform_indices = @transform_5, window_bounds = array<i64: 128, 128>}, {pipeline_mode = #tpu.pipeline_mode<synchronous>, transform_indices = @transform_6, window_bounds = array<i64: 1, 128>}, {transform_indices = @transform_7, window_bounds = array<i64: 2, 8, 8, 128>}]} {
    %c0 = arith.constant 0 : index
    %c0_0 = arith.constant 0 : index
    %c0_1 = arith.constant 0 : index
    %c0_2 = arith.constant 0 : index
    %0 = vector.load %arg2[%c0, %c0_0, %c0_1, %c0_2] : memref<2x10x8x128xf32, #tpu.memory_space<vmem>>, vector<2x10x8x128xf32>
    %1 = vector.shape_cast %0 : vector<2x10x8x128xf32> to vector<160x128xf32>
    %2 = arith.truncf %1 : vector<160x128xf32> to vector<160x128xbf16>
    %c0_3 = arith.constant 0 : index
    %c0_4 = arith.constant 0 : index
    %3 = vector.load %arg3[%c0_3, %c0_4] : memref<128x128xbf16, #tpu.memory_space<vmem>>, vector<128x128xbf16>
    %cst = arith.constant dense<0.000000e+00> : vector<160x128xf32>
    %4 = tpu.matmul %2, %3, %cst {dimension_numbers = #tpu.dot_dimension_numbers<[1], [0], [0], [1], [0, 0, 1, 1], [], []>} : vector<160x128xbf16>, vector<128x128xbf16>, vector<160x128xf32> -> vector<160x128xf32>
    %c0_5 = arith.constant 0 : index
    %c0_6 = arith.constant 0 : index
    %5 = vector.load %arg4[%c0_5, %c0_6] : memref<1x128xf32, #tpu.memory_space<vmem>>, vector<1x128xf32>
    %6 = vector.broadcast %5 : vector<1x128xf32> to vector<160x128xf32>
    %7 = arith.addf %4, %6 : vector<160x128xf32>
    %cst_7 = arith.constant 0.000000e+00 : f32
    %8 = vector.broadcast %cst_7 : f32 to vector<160x128xf32>
    %9 = arith.maximumf %7, %8 : vector<160x128xf32>
    %10 = arith.truncf %9 : vector<160x128xf32> to vector<160x128xbf16>
    %11 = vector.shape_cast %10 : vector<160x128xbf16> to vector<2x10x8x128xbf16>
    %c0_8 = arith.constant 0 : index
    %c0_9 = arith.constant 0 : index
    %c1 = arith.constant 1 : index
    %c0_10 = arith.constant 0 : index
    %12 = vector.load %arg10[%c0_8, %c0_9, %c1, %c0_10] : memref<2x10x10x128xbf16, #tpu.memory_space<vmem>>, vector<2x10x8x128xbf16>
    tpu.vector_store %arg10[%c0_8, %c0_9, %c1, %c0_10], %11 {strides = array<i32>} : memref<2x10x10x128xbf16, #tpu.memory_space<vmem>>, vector<2x10x8x128xbf16>,
    %cst_11 = arith.constant 0.000000e+00 : bf16
    %13 = vector.broadcast %cst_11 : bf16 to vector<2x10x1x128xbf16>
    %c0_12 = arith.constant 0 : index
    %c0_13 = arith.constant 0 : index
    %c0_14 = arith.constant 0 : index
    %c0_15 = arith.constant 0 : index
    %14 = vector.load %arg10[%c0_12, %c0_13, %c0_14, %c0_15] : memref<2x10x10x128xbf16, #tpu.memory_space<vmem>>, vector<2x10x1x128xbf16>
    tpu.vector_store %arg10[%c0_12, %c0_13, %c0_14, %c0_15], %13 {strides = array<i32>} : memref<2x10x10x128xbf16, #tpu.memory_space<vmem>>, vector<2x10x1x128xbf16>,
    %c0_16 = arith.constant 0 : index
    %c0_17 = arith.constant 0 : index
    %c9 = arith.constant 9 : index
    %c0_18 = arith.constant 0 : index
    %15 = vector.load %arg10[%c0_16, %c0_17, %c9, %c0_18] : memref<2x10x10x128xbf16, #tpu.memory_space<vmem>>, vector<2x10x1x128xbf16>
    tpu.vector_store %arg10[%c0_16, %c0_17, %c9, %c0_18], %13 {strides = array<i32>} : memref<2x10x10x128xbf16, #tpu.memory_space<vmem>>, vector<2x10x1x128xbf16>,
    %cst_19 = arith.constant 0.000000e+00 : bf16
    %16 = vector.broadcast %cst_19 : bf16 to vector<2x1x10x128xbf16>
    %c0_i32 = arith.constant 0 : i32
    %17 = arith.cmpi eq, %arg1, %c0_i32 : i32
    %18 = arith.extui %17 : i1 to i32
    %c0_i32_20 = arith.constant 0 : i32
    %19 = arith.cmpi ne, %18, %c0_i32_20 : i32
    scf.if %19 {
      %c0_95 = arith.constant 0 : index
      %c0_96 = arith.constant 0 : index
      %c0_97 = arith.constant 0 : index
      %c0_98 = arith.constant 0 : index
      %87 = vector.load %arg10[%c0_95, %c0_96, %c0_97, %c0_98] : memref<2x10x10x128xbf16, #tpu.memory_space<vmem>>, vector<2x1x10x128xbf16>
      tpu.vector_store %arg10[%c0_95, %c0_96, %c0_97, %c0_98], %16 {strides = array<i32>} : memref<2x10x10x128xbf16, #tpu.memory_space<vmem>>, vector<2x1x10x128xbf16>,
    } else {
    }
    %c0_i32_21 = arith.constant 0 : i32
    %20 = arith.cmpi eq, %arg1, %c0_i32_21 : i32
    %21 = arith.extui %20 : i1 to i32
    %c0_i32_22 = arith.constant 0 : i32
    %22 = arith.cmpi ne, %21, %c0_i32_22 : i32
    scf.if %22 {
      %c0_95 = arith.constant 0 : index
      %c9_96 = arith.constant 9 : index
      %c0_97 = arith.constant 0 : index
      %c0_98 = arith.constant 0 : index
      %87 = vector.load %arg10[%c0_95, %c9_96, %c0_97, %c0_98] : memref<2x10x10x128xbf16, #tpu.memory_space<vmem>>, vector<2x1x10x128xbf16>
      tpu.vector_store %arg10[%c0_95, %c9_96, %c0_97, %c0_98], %16 {strides = array<i32>} : memref<2x10x10x128xbf16, #tpu.memory_space<vmem>>, vector<2x1x10x128xbf16>,
    } else {
    }
    %cst_23 = arith.constant 0.000000e+00 : f32
    %23 = vector.broadcast %cst_23 : f32 to vector<128x128xf32>
    %c0_24 = arith.constant 0 : index
    %c0_25 = arith.constant 0 : index
    %c0_26 = arith.constant 0 : index
    %c0_27 = arith.constant 0 : index
    %24 = vector.load %arg10[%c0_24, %c0_25, %c0_26, %c0_27] : memref<2x10x10x128xbf16, #tpu.memory_space<vmem>>, vector<2x8x8x128xbf16>
    %25 = vector.shape_cast %24 : vector<2x8x8x128xbf16> to vector<128x128xbf16>
    %c0_28 = arith.constant 0 : index
    %c0_29 = arith.constant 0 : index
    %26 = vector.load %arg5[%c0_28, %c0_29] : memref<1152x128xbf16, #tpu.memory_space<vmem>>, vector<128x128xbf16>
    %cst_30 = arith.constant dense<0.000000e+00> : vector<128x128xf32>
    %27 = tpu.matmul %25, %26, %cst_30 {dimension_numbers = #tpu.dot_dimension_numbers<[1], [0], [0], [1], [0, 0, 1, 1], [], []>} : vector<128x128xbf16>, vector<128x128xbf16>, vector<128x128xf32> -> vector<128x128xf32>
    %28 = arith.addf %23, %27 : vector<128x128xf32>
    %c0_31 = arith.constant 0 : index
    %c0_32 = arith.constant 0 : index
    %c1_33 = arith.constant 1 : index
    %c0_34 = arith.constant 0 : index
    %29 = vector.load %arg10[%c0_31, %c0_32, %c1_33, %c0_34] : memref<2x10x10x128xbf16, #tpu.memory_space<vmem>>, vector<2x8x8x128xbf16>
    %30 = vector.shape_cast %29 : vector<2x8x8x128xbf16> to vector<128x128xbf16>
    %c128 = arith.constant 128 : index
    %c0_35 = arith.constant 0 : index
    %31 = vector.load %arg5[%c128, %c0_35] : memref<1152x128xbf16, #tpu.memory_space<vmem>>, vector<128x128xbf16>
    %cst_36 = arith.constant dense<0.000000e+00> : vector<128x128xf32>
    %32 = tpu.matmul %30, %31, %cst_36 {dimension_numbers = #tpu.dot_dimension_numbers<[1], [0], [0], [1], [0, 0, 1, 1], [], []>} : vector<128x128xbf16>, vector<128x128xbf16>, vector<128x128xf32> -> vector<128x128xf32>
    %33 = arith.addf %28, %32 : vector<128x128xf32>
    %c0_37 = arith.constant 0 : index
    %c0_38 = arith.constant 0 : index
    %c2 = arith.constant 2 : index
    %c0_39 = arith.constant 0 : index
    %34 = vector.load %arg10[%c0_37, %c0_38, %c2, %c0_39] : memref<2x10x10x128xbf16, #tpu.memory_space<vmem>>, vector<2x8x8x128xbf16>
    %35 = vector.shape_cast %34 : vector<2x8x8x128xbf16> to vector<128x128xbf16>
    %c256 = arith.constant 256 : index
    %c0_40 = arith.constant 0 : index
    %36 = vector.load %arg5[%c256, %c0_40] : memref<1152x128xbf16, #tpu.memory_space<vmem>>, vector<128x128xbf16>
    %cst_41 = arith.constant dense<0.000000e+00> : vector<128x128xf32>
    %37 = tpu.matmul %35, %36, %cst_41 {dimension_numbers = #tpu.dot_dimension_numbers<[1], [0], [0], [1], [0, 0, 1, 1], [], []>} : vector<128x128xbf16>, vector<128x128xbf16>, vector<128x128xf32> -> vector<128x128xf32>
    %38 = arith.addf %33, %37 : vector<128x128xf32>
    %c0_42 = arith.constant 0 : index
    %c1_43 = arith.constant 1 : index
    %c0_44 = arith.constant 0 : index
    %c0_45 = arith.constant 0 : index
    %39 = vector.load %arg10[%c0_42, %c1_43, %c0_44, %c0_45] : memref<2x10x10x128xbf16, #tpu.memory_space<vmem>>, vector<2x8x8x128xbf16>
    %40 = vector.shape_cast %39 : vector<2x8x8x128xbf16> to vector<128x128xbf16>
    %c384 = arith.constant 384 : index
    %c0_46 = arith.constant 0 : index
    %41 = vector.load %arg5[%c384, %c0_46] : memref<1152x128xbf16, #tpu.memory_space<vmem>>, vector<128x128xbf16>
    %cst_47 = arith.constant dense<0.000000e+00> : vector<128x128xf32>
    %42 = tpu.matmul %40, %41, %cst_47 {dimension_numbers = #tpu.dot_dimension_numbers<[1], [0], [0], [1], [0, 0, 1, 1], [], []>} : vector<128x128xbf16>, vector<128x128xbf16>, vector<128x128xf32> -> vector<128x128xf32>
    %43 = arith.addf %38, %42 : vector<128x128xf32>
    %c0_48 = arith.constant 0 : index
    %c1_49 = arith.constant 1 : index
    %c1_50 = arith.constant 1 : index
    %c0_51 = arith.constant 0 : index
    %44 = vector.load %arg10[%c0_48, %c1_49, %c1_50, %c0_51] : memref<2x10x10x128xbf16, #tpu.memory_space<vmem>>, vector<2x8x8x128xbf16>
    %45 = vector.shape_cast %44 : vector<2x8x8x128xbf16> to vector<128x128xbf16>
    %c512 = arith.constant 512 : index
    %c0_52 = arith.constant 0 : index
    %46 = vector.load %arg5[%c512, %c0_52] : memref<1152x128xbf16, #tpu.memory_space<vmem>>, vector<128x128xbf16>
    %cst_53 = arith.constant dense<0.000000e+00> : vector<128x128xf32>
    %47 = tpu.matmul %45, %46, %cst_53 {dimension_numbers = #tpu.dot_dimension_numbers<[1], [0], [0], [1], [0, 0, 1, 1], [], []>} : vector<128x128xbf16>, vector<128x128xbf16>, vector<128x128xf32> -> vector<128x128xf32>
    %48 = arith.addf %43, %47 : vector<128x128xf32>
    %c0_54 = arith.constant 0 : index
    %c1_55 = arith.constant 1 : index
    %c2_56 = arith.constant 2 : index
    %c0_57 = arith.constant 0 : index
    %49 = vector.load %arg10[%c0_54, %c1_55, %c2_56, %c0_57] : memref<2x10x10x128xbf16, #tpu.memory_space<vmem>>, vector<2x8x8x128xbf16>
    %50 = vector.shape_cast %49 : vector<2x8x8x128xbf16> to vector<128x128xbf16>
    %c640 = arith.constant 640 : index
    %c0_58 = arith.constant 0 : index
    %51 = vector.load %arg5[%c640, %c0_58] : memref<1152x128xbf16, #tpu.memory_space<vmem>>, vector<128x128xbf16>
    %cst_59 = arith.constant dense<0.000000e+00> : vector<128x128xf32>
    %52 = tpu.matmul %50, %51, %cst_59 {dimension_numbers = #tpu.dot_dimension_numbers<[1], [0], [0], [1], [0, 0, 1, 1], [], []>} : vector<128x128xbf16>, vector<128x128xbf16>, vector<128x128xf32> -> vector<128x128xf32>
    %53 = arith.addf %48, %52 : vector<128x128xf32>
    %c0_60 = arith.constant 0 : index
    %c2_61 = arith.constant 2 : index
    %c0_62 = arith.constant 0 : index
    %c0_63 = arith.constant 0 : index
    %54 = vector.load %arg10[%c0_60, %c2_61, %c0_62, %c0_63] : memref<2x10x10x128xbf16, #tpu.memory_space<vmem>>, vector<2x8x8x128xbf16>
    %55 = vector.shape_cast %54 : vector<2x8x8x128xbf16> to vector<128x128xbf16>
    %c768 = arith.constant 768 : index
    %c0_64 = arith.constant 0 : index
    %56 = vector.load %arg5[%c768, %c0_64] : memref<1152x128xbf16, #tpu.memory_space<vmem>>, vector<128x128xbf16>
    %cst_65 = arith.constant dense<0.000000e+00> : vector<128x128xf32>
    %57 = tpu.matmul %55, %56, %cst_65 {dimension_numbers = #tpu.dot_dimension_numbers<[1], [0], [0], [1], [0, 0, 1, 1], [], []>} : vector<128x128xbf16>, vector<128x128xbf16>, vector<128x128xf32> -> vector<128x128xf32>
    %58 = arith.addf %53, %57 : vector<128x128xf32>
    %c0_66 = arith.constant 0 : index
    %c2_67 = arith.constant 2 : index
    %c1_68 = arith.constant 1 : index
    %c0_69 = arith.constant 0 : index
    %59 = vector.load %arg10[%c0_66, %c2_67, %c1_68, %c0_69] : memref<2x10x10x128xbf16, #tpu.memory_space<vmem>>, vector<2x8x8x128xbf16>
    %60 = vector.shape_cast %59 : vector<2x8x8x128xbf16> to vector<128x128xbf16>
    %c896 = arith.constant 896 : index
    %c0_70 = arith.constant 0 : index
    %61 = vector.load %arg5[%c896, %c0_70] : memref<1152x128xbf16, #tpu.memory_space<vmem>>, vector<128x128xbf16>
    %cst_71 = arith.constant dense<0.000000e+00> : vector<128x128xf32>
    %62 = tpu.matmul %60, %61, %cst_71 {dimension_numbers = #tpu.dot_dimension_numbers<[1], [0], [0], [1], [0, 0, 1, 1], [], []>} : vector<128x128xbf16>, vector<128x128xbf16>, vector<128x128xf32> -> vector<128x128xf32>
    %63 = arith.addf %58, %62 : vector<128x128xf32>
    %c0_72 = arith.constant 0 : index
    %c2_73 = arith.constant 2 : index
    %c2_74 = arith.constant 2 : index
    %c0_75 = arith.constant 0 : index
    %64 = vector.load %arg10[%c0_72, %c2_73, %c2_74, %c0_75] : memref<2x10x10x128xbf16, #tpu.memory_space<vmem>>, vector<2x8x8x128xbf16>
    %65 = vector.shape_cast %64 : vector<2x8x8x128xbf16> to vector<128x128xbf16>
    %c1024 = arith.constant 1024 : index
    %c0_76 = arith.constant 0 : index
    %66 = vector.load %arg5[%c1024, %c0_76] : memref<1152x128xbf16, #tpu.memory_space<vmem>>, vector<128x128xbf16>
    %cst_77 = arith.constant dense<0.000000e+00> : vector<128x128xf32>
    %67 = tpu.matmul %65, %66, %cst_77 {dimension_numbers = #tpu.dot_dimension_numbers<[1], [0], [0], [1], [0, 0, 1, 1], [], []>} : vector<128x128xbf16>, vector<128x128xbf16>, vector<128x128xf32> -> vector<128x128xf32>
    %68 = arith.addf %63, %67 : vector<128x128xf32>
    %c0_78 = arith.constant 0 : index
    %c0_79 = arith.constant 0 : index
    %69 = vector.load %arg6[%c0_78, %c0_79] : memref<1x128xf32, #tpu.memory_space<vmem>>, vector<1x128xf32>
    %70 = vector.broadcast %69 : vector<1x128xf32> to vector<128x128xf32>
    %71 = arith.addf %68, %70 : vector<128x128xf32>
    %cst_80 = arith.constant 0.000000e+00 : f32
    %72 = vector.broadcast %cst_80 : f32 to vector<128x128xf32>
    %73 = arith.maximumf %71, %72 : vector<128x128xf32>
    %74 = arith.truncf %73 : vector<128x128xf32> to vector<128x128xbf16>
    %c0_81 = arith.constant 0 : index
    %c0_82 = arith.constant 0 : index
    %75 = vector.load %arg7[%c0_81, %c0_82] : memref<128x128xbf16, #tpu.memory_space<vmem>>, vector<128x128xbf16>
    %cst_83 = arith.constant dense<0.000000e+00> : vector<128x128xf32>
    %76 = tpu.matmul %74, %75, %cst_83 {dimension_numbers = #tpu.dot_dimension_numbers<[1], [0], [0], [1], [0, 0, 1, 1], [], []>} : vector<128x128xbf16>, vector<128x128xbf16>, vector<128x128xf32> -> vector<128x128xf32>
    %c0_84 = arith.constant 0 : index
    %c1_85 = arith.constant 1 : index
    %c0_86 = arith.constant 0 : index
    %c0_87 = arith.constant 0 : index
    %77 = vector.load %arg2[%c0_84, %c1_85, %c0_86, %c0_87] : memref<2x10x8x128xf32, #tpu.memory_space<vmem>>, vector<2x8x8x128xf32>
    %78 = vector.shape_cast %77 : vector<2x8x8x128xf32> to vector<128x128xf32>
    %c0_88 = arith.constant 0 : index
    %c0_89 = arith.constant 0 : index
    %79 = vector.load %arg8[%c0_88, %c0_89] : memref<1x128xf32, #tpu.memory_space<vmem>>, vector<1x128xf32>
    %80 = vector.broadcast %79 : vector<1x128xf32> to vector<128x128xf32>
    %81 = arith.addf %76, %80 : vector<128x128xf32>
    %82 = arith.addf %81, %78 : vector<128x128xf32>
    %cst_90 = arith.constant 0.000000e+00 : f32
    %83 = vector.broadcast %cst_90 : f32 to vector<128x128xf32>
    %84 = arith.maximumf %82, %83 : vector<128x128xf32>
    %85 = vector.shape_cast %84 : vector<128x128xf32> to vector<2x8x8x128xf32>
    %c0_91 = arith.constant 0 : index
    %c0_92 = arith.constant 0 : index
    %c0_93 = arith.constant 0 : index
    %c0_94 = arith.constant 0 : index
    %86 = vector.load %arg9[%c0_91, %c0_92, %c0_93, %c0_94] : memref<2x8x8x128xf32, #tpu.memory_space<vmem>>, vector<2x8x8x128xf32>
    tpu.vector_store %arg9[%c0_91, %c0_92, %c0_93, %c0_94], %85 {strides = array<i32>} : memref<2x8x8x128xf32, #tpu.memory_space<vmem>>, vector<2x8x8x128xf32>,
    return
  }
  func.func @transform_0(%arg0: i32, %arg1: i32) -> (i32, i32, i32, i32) {
    %c1_i32 = arith.constant 1 : i32
    %0 = arith.muli %arg1, %c1_i32 : i32
    %1 = arith.addi %0, %arg0 : i32
    %c0_i32 = arith.constant 0 : i32
    %c0_i32_0 = arith.constant 0 : i32
    %c0_i32_1 = arith.constant 0 : i32
    %c0_i32_2 = arith.constant 0 : i32
    return %1, %c0_i32, %c0_i32_0, %c0_i32_1 : i32, i32, i32, i32
  }
  func.func @transform_1(%arg0: i32, %arg1: i32) -> (i32, i32) {
    %c0_i32 = arith.constant 0 : i32
    %c0_i32_0 = arith.constant 0 : i32
    %c0_i32_1 = arith.constant 0 : i32
    return %c0_i32, %c0_i32_0 : i32, i32
  }
  func.func @transform_2(%arg0: i32, %arg1: i32) -> (i32, i32) {
    %c0_i32 = arith.constant 0 : i32
    %c0_i32_0 = arith.constant 0 : i32
    %c0_i32_1 = arith.constant 0 : i32
    return %c0_i32, %c0_i32_0 : i32, i32
  }
  func.func @transform_3(%arg0: i32, %arg1: i32) -> (i32, i32) {
    %c0_i32 = arith.constant 0 : i32
    %c0_i32_0 = arith.constant 0 : i32
    %c0_i32_1 = arith.constant 0 : i32
    return %c0_i32, %c0_i32_0 : i32, i32
  }
  func.func @transform_4(%arg0: i32, %arg1: i32) -> (i32, i32) {
    %c0_i32 = arith.constant 0 : i32
    %c0_i32_0 = arith.constant 0 : i32
    %c0_i32_1 = arith.constant 0 : i32
    return %c0_i32, %c0_i32_0 : i32, i32
  }
  func.func @transform_5(%arg0: i32, %arg1: i32) -> (i32, i32) {
    %c0_i32 = arith.constant 0 : i32
    %c0_i32_0 = arith.constant 0 : i32
    %c0_i32_1 = arith.constant 0 : i32
    return %c0_i32, %c0_i32_0 : i32, i32
  }
  func.func @transform_6(%arg0: i32, %arg1: i32) -> (i32, i32) {
    %c0_i32 = arith.constant 0 : i32
    %c0_i32_0 = arith.constant 0 : i32
    %c0_i32_1 = arith.constant 0 : i32
    return %c0_i32, %c0_i32_0 : i32, i32
  }
  func.func @transform_7(%arg0: i32, %arg1: i32) -> (i32, i32, i32, i32) {
    %c0_i32 = arith.constant 0 : i32
    %c0_i32_0 = arith.constant 0 : i32
    %c0_i32_1 = arith.constant 0 : i32
    return %arg0, %arg1, %c0_i32, %c0_i32_0 : i32, i32, i32, i32
  }
}

</mosaic_0001>

<llo_original>
// kernel: bottleneck_forward.1
$region0: #{bottleneck_forward.1}
  #allocation0 [shape = 'u32[]', space=smem, size = 0x4, offset = 0x4, fixed_abs, tag = 'smem constant byte address 0x4 - core index']
  #allocation1 [shape = 'u32[144,128]{1,0:T(1,128)}', space=vmem, size = 0x12000, scoped, tag = 'internal scratch']
  #allocation2 [shape = 'bf16[2,10,10,128]{3,2,1,0:T(8,128)(2,1)}', space=vmem, size = 0x14000, scoped, tag = 'scratch operand']
  %s0 = inlined_call_operand.vmem [shape: f32[2,10,8,128], index: 0, kind: input, shape index: {}]
  %s1 = inlined_call_operand.vmem [shape: bf16[128,128], index: 1, kind: input, shape index: {}]
  %s2 = inlined_call_operand.vmem [shape: f32[1,128], index: 2, kind: input, shape index: {}]
  %s3 = inlined_call_operand.vmem [shape: bf16[1152,128], index: 3, kind: input, shape index: {}]
  %s4 = inlined_call_operand.vmem [shape: f32[1,128], index: 4, kind: input, shape index: {}]
  %s5 = inlined_call_operand.vmem [shape: bf16[128,128], index: 5, kind: input, shape index: {}]
  %s6 = inlined_call_operand.vmem [shape: f32[1,128], index: 6, kind: input, shape index: {}]
  %s7 = inlined_call_operand.vmem [shape: f32[2,8,8,128], index: 7, kind: output, shape index: {}]
  %s8 = sld [smem:[#allocation0]]
  $region42: #{bottleneck_forward.1} parent=0
    _
  %s10 = ssub.s32 1, %s8
  %s11 = scalar_select 0, %s10, %s8
  // Predicated region
  $region2: #{bottleneck_forward.1} parent=0 // pred_check
    _
  $region3: #{bottleneck_forward.1} parent=0 // pred_check_branch
    %13 = sbr.rel (0) target = $region5
  $region4: #{bottleneck_forward.1} parent=0 // pred_region
    %s14 = sadd.s32 0, 0
    %s15 = smul.u32 2, %s14
    %p16 = scmp.lt.s32.totalorder %s15, 1
    %s17 = scalar_select %p16, %s15, 1
    %s18 = smul.addr %s17, 10
    %s19 = smul.addr %s18, 8
    %s20 = scalar_lea.vmem %s0, %s19
    %s21 = sadd.s32 0, 0
    %s22 = smul.u32 2, %s21
  $region5: #{bottleneck_forward.1} parent=0 // pred_fallthru
    _
  // Predicated region
  $region6: #{bottleneck_forward.1} parent=0 // pred_check
    _
  $region7: #{bottleneck_forward.1} parent=0 // pred_check_branch
    %24 = sbr.rel (0) target = $region9
  $region8: #{bottleneck_forward.1} parent=0 // pred_region
    _
  $region9: #{bottleneck_forward.1} parent=0 // pred_fallthru
    _
  // Predicated region
  $region10: #{bottleneck_forward.1} parent=0 // pred_check
    _
  $region11: #{bottleneck_forward.1} parent=0 // pred_check_branch
    %26 = sbr.rel (0) target = $region13
  $region12: #{bottleneck_forward.1} parent=0 // pred_region
    _
  $region13: #{bottleneck_forward.1} parent=0 // pred_fallthru
    _
  // Predicated region
  $region14: #{bottleneck_forward.1} parent=0 // pred_check
    _
  $region15: #{bottleneck_forward.1} parent=0 // pred_check_branch
    %28 = sbr.rel (0) target = $region17
  $region16: #{bottleneck_forward.1} parent=0 // pred_region
    _
  $region17: #{bottleneck_forward.1} parent=0 // pred_fallthru
    _
  // Predicated region
  $region18: #{bottleneck_forward.1} parent=0 // pred_check
    _
  $region19: #{bottleneck_forward.1} parent=0 // pred_check_branch
    %30 = sbr.rel (0) target = $region21
  $region20: #{bottleneck_forward.1} parent=0 // pred_region
    _
  $region21: #{bottleneck_forward.1} parent=0 // pred_fallthru
    _
  // Predicated region
  $region22: #{bottleneck_forward.1} parent=0 // pred_check
    _
  $region23: #{bottleneck_forward.1} parent=0 // pred_check_branch
    %32 = sbr.rel (0) target = $region25
  $region24: #{bottleneck_forward.1} parent=0 // pred_region
    _
  $region25: #{bottleneck_forward.1} parent=0 // pred_fallthru
    _
  // Predicated region
  $region26: #{bottleneck_forward.1} parent=0 // pred_check
    _
  $region27: #{bottleneck_forward.1} parent=0 // pred_check_branch
    %34 = sbr.rel (0) target = $region29
  $region28: #{bottleneck_forward.1} parent=0 // pred_region
    _
  $region29: #{bottleneck_forward.1} parent=0 // pred_fallthru
    _
  %s35 = sadd.s32 0, 0
  %s36 = smul.u32 2, %s35
  %p37 = scmp.lt.s32.totalorder %s36, 1
  %s38 = scalar_select %p37, %s36, 1
  %s39 = smul.addr %s38, 10
  %s40 = smul.addr %s39, 8
  %s41 = scalar_lea.vmem %s0, %s40
  %s42 = sadd.s32 0, 0
  %s43 = smul.u32 2, %s42
  %p44 = scmp.lt.s32.totalorder %s43, 1
  %s45 = scalar_select %p44, %s43, 1
  %s46 = smul.addr %s45, 10
  %s47 = smul.addr %s46, 8
  %s48 = scalar_lea.vmem %s0, %s47
  %s49 = sadd.s32 0, 0
  %s50 = smul.u32 2, %s49
  %v52 = vld [vmem:[%s48] sm:$0xff]
  %v53 = vld [vmem:[%s48 + $0x8] sm:$0xff]
  %v54 = vld [vmem:[%s48 + $0x10] sm:$0xff]
  %v55 = vld [vmem:[%s48 + $0x18] sm:$0xff]
  %v56 = vld [vmem:[%s48 + $0x20] sm:$0xff]
  %v57 = vld [vmem:[%s48 + $0x28] sm:$0xff]
  %v58 = vld [vmem:[%s48 + $0x30] sm:$0xff]
  %v59 = vld [vmem:[%s48 + $0x38] sm:$0xff]
  %v60 = vld [vmem:[%s48 + $0x40] sm:$0xff]
  %v61 = vld [vmem:[%s48 + $0x48] sm:$0xff]
  %v62 = vld [vmem:[%s48 + $0x50] sm:$0xff]
  %v63 = vld [vmem:[%s48 + $0x58] sm:$0xff]
  %v64 = vld [vmem:[%s48 + $0x60] sm:$0xff]
  %v65 = vld [vmem:[%s48 + $0x68] sm:$0xff]
  %v66 = vld [vmem:[%s48 + $0x70] sm:$0xff]
  %v67 = vld [vmem:[%s48 + $0x78] sm:$0xff]
  %v68 = vld [vmem:[%s48 + $0x80] sm:$0xff]
  %v69 = vld [vmem:[%s48 + $0x88] sm:$0xff]
  %v70 = vld [vmem:[%s48 + $0x90] sm:$0xff]
  %v71 = vld [vmem:[%s48 + $0x98] sm:$0xff]
  %v72 = vpack.c.bf16 %v53, %v52
  %v73 = vpack.c.bf16 %v55, %v54
  %v74 = vpack.c.bf16 %v57, %v56
  %v75 = vpack.c.bf16 %v59, %v58
  %v76 = vpack.c.bf16 %v61, %v60
  %v77 = vpack.c.bf16 %v63, %v62
  %v78 = vpack.c.bf16 %v65, %v64
  %v79 = vpack.c.bf16 %v67, %v66
  %v80 = vpack.c.bf16 %v69, %v68
  %v81 = vpack.c.bf16 %v71, %v70
  %v82 = vld [vmem:[%s1] sm:$0xf]
  %v83 = vld [vmem:[%s1 + $0x4] sm:$0xf]
  %v84 = vld [vmem:[%s1 + $0x8] sm:$0xf]
  %v85 = vld [vmem:[%s1 + $0xc] sm:$0xf]
  %v86 = vld [vmem:[%s1 + $0x10] sm:$0xf]
  %v87 = vld [vmem:[%s1 + $0x14] sm:$0xf]
  %v88 = vld [vmem:[%s1 + $0x18] sm:$0xf]
  %v89 = vld [vmem:[%s1 + $0x1c] sm:$0xf]
  %v90 = vld [vmem:[%s1 + $0x20] sm:$0xf]
  %v91 = vld [vmem:[%s1 + $0x24] sm:$0xf]
  %v92 = vld [vmem:[%s1 + $0x28] sm:$0xf]
  %v93 = vld [vmem:[%s1 + $0x2c] sm:$0xf]
  %v94 = vld [vmem:[%s1 + $0x30] sm:$0xf]
  %v95 = vld [vmem:[%s1 + $0x34] sm:$0xf]
  %v96 = vld [vmem:[%s1 + $0x38] sm:$0xf]
  %v97 = vld [vmem:[%s1 + $0x3c] sm:$0xf]
  %v98 = vld [vmem:[%s2] sm:$0x1]
  %v100 = vlaneseq
  %v101 = vshrl.u32 %v100, 7
  %v102 = vsub.s32 0, %v101
  %v103 = vrot.slane %v98, %v102
  %v121 = vunpack.c.l.b16 %v82
  %v122 = vunpack.c.l.b16 %v83
  %v123 = vunpack.c.l.b16 %v84
  %v124 = vunpack.c.l.b16 %v85
  %v125 = vunpack.c.l.b16 %v86
  %v126 = vunpack.c.l.b16 %v87
  %v127 = vunpack.c.l.b16 %v88
  %v128 = vunpack.c.l.b16 %v89
  %v129 = vunpack.c.l.b16 %v90
  %v130 = vunpack.c.l.b16 %v91
  %v131 = vunpack.c.l.b16 %v92
  %v132 = vunpack.c.l.b16 %v93
  %v133 = vunpack.c.l.b16 %v94
  %v134 = vunpack.c.l.b16 %v95
  %v135 = vunpack.c.l.b16 %v96
  %v136 = vunpack.c.l.b16 %v97
  %v137 = vpack.c.b16 %v122, %v121
  %v138 = vpack.c.b16 %v124, %v123
  %v139 = vpack.c.b16 %v126, %v125
  %v140 = vpack.c.b16 %v128, %v127
  %v141 = vpack.c.b16 %v130, %v129
  %v142 = vpack.c.b16 %v132, %v131
  %v143 = vpack.c.b16 %v134, %v133
  %v144 = vpack.c.b16 %v136, %v135
  %153 = vmatprep.subr.bf16.mxu0 0
  %154 = vmatpush1.bf16.msra.mxu0 %v137
  %155 = vmatprep.subr.bf16.mxu0 0
  %156 = vmatpush1.bf16.msra.mxu0 %v138
  %157 = vmatprep.subr.bf16.mxu0 0
  %158 = vmatpush1.bf16.msra.mxu0 %v139
  %159 = vmatprep.subr.bf16.mxu0 0
  %160 = vmatpush1.bf16.msra.mxu0 %v140
  %161 = vmatprep.subr.bf16.mxu0 0
  %162 = vmatpush1.bf16.msra.mxu0 %v141
  %163 = vmatprep.subr.bf16.mxu0 0
  %164 = vmatpush1.bf16.msra.mxu0 %v142
  %165 = vmatprep.subr.bf16.mxu0 0
  %166 = vmatpush1.bf16.msra.mxu0 %v143
  %167 = vmatprep.subr.bf16.mxu0 0
  %168 = vmatpush1.bf16.msra.mxu0 %v144
  %169 = vmatprep.subr.bf16.mxu0 0
  %170 = vmatpush1.bf16.msra.mxu0 0
  %171 = vmatprep.subr.bf16.mxu0 0
  %172 = vmatpush1.bf16.msra.mxu0 0
  %173 = vmatprep.subr.bf16.mxu0 0
  %174 = vmatpush1.bf16.msra.mxu0 0
  %175 = vmatprep.subr.bf16.mxu0 0
  %176 = vmatpush1.bf16.msra.mxu0 0
  %177 = vmatprep.subr.bf16.mxu0 0
  %178 = vmatpush1.bf16.msra.mxu0 0
  %179 = vmatprep.subr.bf16.mxu0 0
  %180 = vmatpush1.bf16.msra.mxu0 0
  %181 = vmatprep.subr.bf16.mxu0 0
  %182 = vmatpush1.bf16.msra.mxu0 0
  %183 = vmatprep.subr.bf16.mxu0 0
  %184 = vmatpush1.bf16.msra.mxu0 0
  %185 = vmatprep.mubr.bf16.mxu0 0
  %186 = vmatmul.mubr.bf16.gmra.mrb[0].mxu0 %v72
  %v187 = vpop.f32.mrb[0].mxu0
  %v188 = vadd.f32 %v103, %v187
  %v189 = vpop.f32.mrb[0].mxu0
  %v190 = vpop.f32.mrb[0].mxu0
  %v191 = vadd.f32 %v103, %v190
  %v192 = vpop.f32.mrb[0].mxu0
  %193 = vmatprep.mubr.bf16.mxu0 0
  %194 = vmatmul.mubr.bf16.gmra.mrb[0].mxu0 %v73
  %v195 = vpop.f32.mrb[0].mxu0
  %v196 = vadd.f32 %v103, %v195
  %v197 = vpop.f32.mrb[0].mxu0
  %v198 = vpop.f32.mrb[0].mxu0
  %v199 = vadd.f32 %v103, %v198
  %v200 = vpop.f32.mrb[0].mxu0
  %201 = vmatprep.mubr.bf16.mxu0 0
  %202 = vmatmul.mubr.bf16.gmra.mrb[0].mxu0 %v74
  %v203 = vpop.f32.mrb[0].mxu0
  %v204 = vadd.f32 %v103, %v203
  %v205 = vpop.f32.mrb[0].mxu0
  %v206 = vpop.f32.mrb[0].mxu0
  %v207 = vadd.f32 %v103, %v206
  %v208 = vpop.f32.mrb[0].mxu0
  %209 = vmatprep.mubr.bf16.mxu0 0
  %210 = vmatmul.mubr.bf16.gmra.mrb[0].mxu0 %v75
  %v211 = vpop.f32.mrb[0].mxu0
  %v212 = vadd.f32 %v103, %v211
  %v213 = vpop.f32.mrb[0].mxu0
  %v214 = vpop.f32.mrb[0].mxu0
  %v215 = vadd.f32 %v103, %v214
  %v216 = vpop.f32.mrb[0].mxu0
  %217 = vmatprep.mubr.bf16.mxu0 0
  %218 = vmatmul.mubr.bf16.gmra.mrb[0].mxu0 %v76
  %v219 = vpop.f32.mrb[0].mxu0
  %v220 = vadd.f32 %v103, %v219
  %v221 = vpop.f32.mrb[0].mxu0
  %v222 = vpop.f32.mrb[0].mxu0
  %v223 = vadd.f32 %v103, %v222
  %v224 = vpop.f32.mrb[0].mxu0
  %225 = vmatprep.mubr.bf16.mxu0 0
  %226 = vmatmul.mubr.bf16.gmra.mrb[0].mxu0 %v77
  %v227 = vpop.f32.mrb[0].mxu0
  %v228 = vadd.f32 %v103, %v227
  %v229 = vpop.f32.mrb[0].mxu0
  %v230 = vpop.f32.mrb[0].mxu0
  %v231 = vadd.f32 %v103, %v230
  %v232 = vpop.f32.mrb[0].mxu0
  %233 = vmatprep.mubr.bf16.mxu0 0
  %234 = vmatmul.mubr.bf16.gmra.mrb[0].mxu0 %v78
  %v235 = vpop.f32.mrb[0].mxu0
  %v236 = vadd.f32 %v103, %v235
  %v237 = vpop.f32.mrb[0].mxu0
  %v238 = vpop.f32.mrb[0].mxu0
  %v239 = vadd.f32 %v103, %v238
  %v240 = vpop.f32.mrb[0].mxu0
  %241 = vmatprep.mubr.bf16.mxu0 0
  %242 = vmatmul.mubr.bf16.gmra.mrb[0].mxu0 %v79
  %v243 = vpop.f32.mrb[0].mxu0
  %v244 = vadd.f32 %v103, %v243
  %v245 = vpop.f32.mrb[0].mxu0
  %v246 = vpop.f32.mrb[0].mxu0
  %v247 = vadd.f32 %v103, %v246
  %v248 = vpop.f32.mrb[0].mxu0
  %249 = vmatprep.mubr.bf16.mxu0 0
  %250 = vmatmul.mubr.bf16.gmra.mrb[0].mxu0 %v80
  %v251 = vpop.f32.mrb[0].mxu0
  %v252 = vadd.f32 %v103, %v251
  %v253 = vpop.f32.mrb[0].mxu0
  %v254 = vpop.f32.mrb[0].mxu0
  %v255 = vadd.f32 %v103, %v254
  %v256 = vpop.f32.mrb[0].mxu0
  %257 = vmatprep.mubr.bf16.mxu0 0
  %258 = vmatmul.mubr.bf16.gmra.mrb[0].mxu0 %v81
  %v259 = vpop.f32.mrb[0].mxu0
  %v260 = vadd.f32 %v103, %v259
  %v261 = vpop.f32.mrb[0].mxu0
  %v262 = vpop.f32.mrb[0].mxu0
  %v263 = vadd.f32 %v103, %v262
  %v264 = vpop.f32.mrb[0].mxu0
  %265 = vdwg.mxu0
  %v266 = vmax.f32 %v188, 0.0
  %v267 = vmax.f32 %v191, 0.0
  %v268 = vmax.f32 %v196, 0.0
  %v269 = vmax.f32 %v199, 0.0
  %v270 = vmax.f32 %v204, 0.0
  %v271 = vmax.f32 %v207, 0.0
  %v272 = vmax.f32 %v212, 0.0
  %v273 = vmax.f32 %v215, 0.0
  %v274 = vmax.f32 %v220, 0.0
  %v275 = vmax.f32 %v223, 0.0
  %v276 = vmax.f32 %v228, 0.0
  %v277 = vmax.f32 %v231, 0.0
  %v278 = vmax.f32 %v236, 0.0
  %v279 = vmax.f32 %v239, 0.0
  %v280 = vmax.f32 %v244, 0.0
  %v281 = vmax.f32 %v247, 0.0
  %v282 = vmax.f32 %v252, 0.0
  %v283 = vmax.f32 %v255, 0.0
  %v284 = vmax.f32 %v260, 0.0
  %v285 = vmax.f32 %v263, 0.0
  %v286 = vpack.c.bf16 %v267, %v266
  %v287 = vpack.c.bf16 %v269, %v268
  %v288 = vpack.c.bf16 %v271, %v270
  %v289 = vpack.c.bf16 %v273, %v272
  %v290 = vpack.c.bf16 %v275, %v274
  %v291 = vpack.c.bf16 %v277, %v276
  %v292 = vpack.c.bf16 %v279, %v278
  %v293 = vpack.c.bf16 %v281, %v280
  %v294 = vpack.c.bf16 %v283, %v282
  %v295 = vpack.c.bf16 %v285, %v284
  %v306 = vunpack.c.l.b16 %v286
  %v307 = vunpack.c.h.b16 %v286
  %v308 = vunpack.c.l.b16 %v287
  %v309 = vunpack.c.h.b16 %v287
  %v310 = vunpack.c.l.b16 %v288
  %v311 = vunpack.c.h.b16 %v288
  %v312 = vunpack.c.l.b16 %v289
  %v313 = vunpack.c.h.b16 %v289
  %v314 = vunpack.c.l.b16 %v290
  %v315 = vunpack.c.h.b16 %v290
  %v316 = vunpack.c.l.b16 %v291
  %v317 = vunpack.c.h.b16 %v291
  %v318 = vunpack.c.l.b16 %v292
  %v319 = vunpack.c.h.b16 %v292
  %v320 = vunpack.c.l.b16 %v293
  %v321 = vunpack.c.h.b16 %v293
  %v322 = vunpack.c.l.b16 %v294
  %v323 = vunpack.c.h.b16 %v294
  %v324 = vunpack.c.l.b16 %v295
  %v325 = vunpack.c.h.b16 %v295
  %v326 = vpack.c.b16 %v306, %v306
  %v327 = vpack.c.b16 %v307, %v307
  %v328 = vpack.c.b16 %v308, %v308
  %v329 = vpack.c.b16 %v309, %v309
  %v330 = vpack.c.b16 %v310, %v310
  %v331 = vpack.c.b16 %v311, %v311
  %v332 = vpack.c.b16 %v312, %v312
  %v333 = vpack.c.b16 %v313, %v313
  %v334 = vpack.c.b16 %v314, %v314
  %v335 = vpack.c.b16 %v315, %v315
  %v336 = vpack.c.b16 %v316, %v316
  %v337 = vpack.c.b16 %v317, %v317
  %v338 = vpack.c.b16 %v318, %v318
  %v339 = vpack.c.b16 %v319, %v319
  %v340 = vpack.c.b16 %v320, %v320
  %v341 = vpack.c.b16 %v321, %v321
  %v342 = vpack.c.b16 %v322, %v322
  %v343 = vpack.c.b16 %v323, %v323
  %v344 = vpack.c.b16 %v324, %v324
  %v345 = vpack.c.b16 %v325, %v325
  %v347 = vshrl.u32 %v326, 16
  %v349 = vrot.slane %v347, 7
  %v350 = vshll.u32 %v326, 16
  %v352 = vor.u32 %v349, %v350
  %v353 = vrot.slane %v349, 4
  %v355 = vshrl.u32 %v327, 16
  %v357 = vrot.slane %v355, 7
  %v358 = vshll.u32 %v327, 16
  %v360 = vor.u32 %v357, %v358
  %v361 = vrot.slane %v357, 4
  %v363 = vshrl.u32 %v328, 16
  %v365 = vrot.slane %v363, 7
  %v366 = vshll.u32 %v328, 16
  %v368 = vor.u32 %v365, %v366
  %v369 = vrot.slane %v365, 4
  %v371 = vshrl.u32 %v329, 16
  %v373 = vrot.slane %v371, 7
  %v374 = vshll.u32 %v329, 16
  %v376 = vor.u32 %v373, %v374
  %v377 = vrot.slane %v373, 4
  %v379 = vshrl.u32 %v330, 16
  %v381 = vrot.slane %v379, 7
  %v382 = vshll.u32 %v330, 16
  %v384 = vor.u32 %v381, %v382
  %v385 = vrot.slane %v381, 4
  %v387 = vshrl.u32 %v331, 16
  %v389 = vrot.slane %v387, 7
  %v390 = vshll.u32 %v331, 16
  %v392 = vor.u32 %v389, %v390
  %v393 = vrot.slane %v389, 4
  %v395 = vshrl.u32 %v332, 16
  %v397 = vrot.slane %v395, 7
  %v398 = vshll.u32 %v332, 16
  %v400 = vor.u32 %v397, %v398
  %v401 = vrot.slane %v397, 4
  %v403 = vshrl.u32 %v333, 16
  %v405 = vrot.slane %v403, 7
  %v406 = vshll.u32 %v333, 16
  %v408 = vor.u32 %v405, %v406
  %v409 = vrot.slane %v405, 4
  %v411 = vshrl.u32 %v334, 16
  %v413 = vrot.slane %v411, 7
  %v414 = vshll.u32 %v334, 16
  %v416 = vor.u32 %v413, %v414
  %v417 = vrot.slane %v413, 4
  %v419 = vshrl.u32 %v335, 16
  %v421 = vrot.slane %v419, 7
  %v422 = vshll.u32 %v335, 16
  %v424 = vor.u32 %v421, %v422
  %v425 = vrot.slane %v421, 4
  %v427 = vshrl.u32 %v336, 16
  %v429 = vrot.slane %v427, 7
  %v430 = vshll.u32 %v336, 16
  %v432 = vor.u32 %v429, %v430
  %v433 = vrot.slane %v429, 4
  %v435 = vshrl.u32 %v337, 16
  %v437 = vrot.slane %v435, 7
  %v438 = vshll.u32 %v337, 16
  %v440 = vor.u32 %v437, %v438
  %v441 = vrot.slane %v437, 4
  %v443 = vshrl.u32 %v338, 16
  %v445 = vrot.slane %v443, 7
  %v446 = vshll.u32 %v338, 16
  %v448 = vor.u32 %v445, %v446
  %v449 = vrot.slane %v445, 4
  %v451 = vshrl.u32 %v339, 16
  %v453 = vrot.slane %v451, 7
  %v454 = vshll.u32 %v339, 16
  %v456 = vor.u32 %v453, %v454
  %v457 = vrot.slane %v453, 4
  %v459 = vshrl.u32 %v340, 16
  %v461 = vrot.slane %v459, 7
  %v462 = vshll.u32 %v340, 16
  %v464 = vor.u32 %v461, %v462
  %v465 = vrot.slane %v461, 4
  %v467 = vshrl.u32 %v341, 16
  %v469 = vrot.slane %v467, 7
  %v470 = vshll.u32 %v341, 16
  %v472 = vor.u32 %v469, %v470
  %v473 = vrot.slane %v469, 4
  %v475 = vshrl.u32 %v342, 16
  %v477 = vrot.slane %v475, 7
  %v478 = vshll.u32 %v342, 16
  %v480 = vor.u32 %v477, %v478
  %v481 = vrot.slane %v477, 4
  %v483 = vshrl.u32 %v343, 16
  %v485 = vrot.slane %v483, 7
  %v486 = vshll.u32 %v343, 16
  %v488 = vor.u32 %v485, %v486
  %v489 = vrot.slane %v485, 4
  %v491 = vshrl.u32 %v344, 16
  %v493 = vrot.slane %v491, 7
  %v494 = vshll.u32 %v344, 16
  %v496 = vor.u32 %v493, %v494
  %v497 = vrot.slane %v493, 4
  %v499 = vshrl.u32 %v345, 16
  %v501 = vrot.slane %v499, 7
  %v502 = vshll.u32 %v345, 16
  %v504 = vor.u32 %v501, %v502
  %v505 = vrot.slane %v501, 4
  %vm546 = vcmask 1043456
  %vm547 = vsmask.f32 7938
  %vm548 = vmand %vm546, %vm547
  %v549 = vld [vmem:[#allocation2] sm:$0xf]
  %v550 = vsel %vm548, %v352, %v549
  %551 = vst [vmem:[#allocation2] sm:$0xf] %v550
  %vm552 = vcmask 1040384
  %vm553 = vsmask.f32 256
  %vm554 = vmand %vm552, %vm553
  %v555 = vld [vmem:[#allocation2 + $0x4] sm:$0x1]
  %v556 = vsel %vm554, %v353, %v555
  %557 = vst [vmem:[#allocation2 + $0x4] sm:$0x1] %v556
  %v558 = vld [vmem:[#allocation2 + $0x8] sm:$0xf]
  %v559 = vsel %vm548, %v360, %v558
  %560 = vst [vmem:[#allocation2 + $0x8] sm:$0xf] %v559
  %v561 = vld [vmem:[#allocation2 + $0xc] sm:$0x1]
  %v562 = vsel %vm554, %v361, %v561
  %563 = vst [vmem:[#allocation2 + $0xc] sm:$0x1] %v562
  %v564 = vld [vmem:[#allocation2 + $0x10] sm:$0xf]
  %v565 = vsel %vm548, %v368, %v564
  %566 = vst [vmem:[#allocation2 + $0x10] sm:$0xf] %v565
  %v567 = vld [vmem:[#allocation2 + $0x14] sm:$0x1]
  %v568 = vsel %vm554, %v369, %v567
  %569 = vst [vmem:[#allocation2 + $0x14] sm:$0x1] %v568
  %v570 = vld [vmem:[#allocation2 + $0x18] sm:$0xf]
  %v571 = vsel %vm548, %v376, %v570
  %572 = vst [vmem:[#allocation2 + $0x18] sm:$0xf] %v571
  %v573 = vld [vmem:[#allocation2 + $0x1c] sm:$0x1]
  %v574 = vsel %vm554, %v377, %v573
  %575 = vst [vmem:[#allocation2 + $0x1c] sm:$0x1] %v574
  %v576 = vld [vmem:[#allocation2 + $0x20] sm:$0xf]
  %v577 = vsel %vm548, %v384, %v576
  %578 = vst [vmem:[#allocation2 + $0x20] sm:$0xf] %v577
  %v579 = vld [vmem:[#allocation2 + $0x24] sm:$0x1]
  %v580 = vsel %vm554, %v385, %v579
  %581 = vst [vmem:[#allocation2 + $0x24] sm:$0x1] %v580
  %v582 = vld [vmem:[#allocation2 + $0x28] sm:$0xf]
  %v583 = vsel %vm548, %v392, %v582
  %584 = vst [vmem:[#allocation2 + $0x28] sm:$0xf] %v583
  %v585 = vld [vmem:[#allocation2 + $0x2c] sm:$0x1]
  %v586 = vsel %vm554, %v393, %v585
  %587 = vst [vmem:[#allocation2 + $0x2c] sm:$0x1] %v586
  %v588 = vld [vmem:[#allocation2 + $0x30] sm:$0xf]
  %v589 = vsel %vm548, %v400, %v588
  %590 = vst [vmem:[#allocation2 + $0x30] sm:$0xf] %v589
  %v591 = vld [vmem:[#allocation2 + $0x34] sm:$0x1]
  %v592 = vsel %vm554, %v401, %v591
  %593 = vst [vmem:[#allocation2 + $0x34] sm:$0x1] %v592
  %v594 = vld [vmem:[#allocation2 + $0x38] sm:$0xf]
  %v595 = vsel %vm548, %v408, %v594
  %596 = vst [vmem:[#allocation2 + $0x38] sm:$0xf] %v595
  %v597 = vld [vmem:[#allocation2 + $0x3c] sm:$0x1]
  %v598 = vsel %vm554, %v409, %v597
  %599 = vst [vmem:[#allocation2 + $0x3c] sm:$0x1] %v598
  %v600 = vld [vmem:[#allocation2 + $0x40] sm:$0xf]
  %v601 = vsel %vm548, %v416, %v600
  %602 = vst [vmem:[#allocation2 + $0x40] sm:$0xf] %v601
  %v603 = vld [vmem:[#allocation2 + $0x44] sm:$0x1]
  %v604 = vsel %vm554, %v417, %v603
  %605 = vst [vmem:[#allocation2 + $0x44] sm:$0x1] %v604
  %v606 = vld [vmem:[#allocation2 + $0x48] sm:$0xf]
  %v607 = vsel %vm548, %v424, %v606
  %608 = vst [vmem:[#allocation2 + $0x48] sm:$0xf] %v607
  %v609 = vld [vmem:[#allocation2 + $0x4c] sm:$0x1]
  %v610 = vsel %vm554, %v425, %v609
  %611 = vst [vmem:[#allocation2 + $0x4c] sm:$0x1] %v610
  %v612 = vld [vmem:[#allocation2 + $0x50] sm:$0xf]
  %v613 = vsel %vm548, %v432, %v612
  %614 = vst [vmem:[#allocation2 + $0x50] sm:$0xf] %v613
  %v615 = vld [vmem:[#allocation2 + $0x54] sm:$0x1]
  %v616 = vsel %vm554, %v433, %v615
  %617 = vst [vmem:[#allocation2 + $0x54] sm:$0x1] %v616
  %v618 = vld [vmem:[#allocation2 + $0x58] sm:$0xf]
  %v619 = vsel %vm548, %v440, %v618
  %620 = vst [vmem:[#allocation2 + $0x58] sm:$0xf] %v619
  %v621 = vld [vmem:[#allocation2 + $0x5c] sm:$0x1]
  %v622 = vsel %vm554, %v441, %v621
  %623 = vst [vmem:[#allocation2 + $0x5c] sm:$0x1] %v622
  %v624 = vld [vmem:[#allocation2 + $0x60] sm:$0xf]
  %v625 = vsel %vm548, %v448, %v624
  %626 = vst [vmem:[#allocation2 + $0x60] sm:$0xf] %v625
  %v627 = vld [vmem:[#allocation2 + $0x64] sm:$0x1]
  %v628 = vsel %vm554, %v449, %v627
  %629 = vst [vmem:[#allocation2 + $0x64] sm:$0x1] %v628
  %v630 = vld [vmem:[#allocation2 + $0x68] sm:$0xf]
  %v631 = vsel %vm548, %v456, %v630
  %632 = vst [vmem:[#allocation2 + $0x68] sm:$0xf] %v631
  %v633 = vld [vmem:[#allocation2 + $0x6c] sm:$0x1]
  %v634 = vsel %vm554, %v457, %v633
  %635 = vst [vmem:[#allocation2 + $0x6c] sm:$0x1] %v634
  %v636 = vld [vmem:[#allocation2 + $0x70] sm:$0xf]
  %v637 = vsel %vm548, %v464, %v636
  %638 = vst [vmem:[#allocation2 + $0x70] sm:$0xf] %v637
  %v639 = vld [vmem:[#allocation2 + $0x74] sm:$0x1]
  %v640 = vsel %vm554, %v465, %v639
  %641 = vst [vmem:[#allocation2 + $0x74] sm:$0x1] %v640
  %v642 = vld [vmem:[#allocation2 + $0x78] sm:$0xf]
  %v643 = vsel %vm548, %v472, %v642
  %644 = vst [vmem:[#allocation2 + $0x78] sm:$0xf] %v643
  %v645 = vld [vmem:[#allocation2 + $0x7c] sm:$0x1]
  %v646 = vsel %vm554, %v473, %v645
  %647 = vst [vmem:[#allocation2 + $0x7c] sm:$0x1] %v646
  %v648 = vld [vmem:[#allocation2 + $0x80] sm:$0xf]
  %v649 = vsel %vm548, %v480, %v648
  %650 = vst [vmem:[#allocation2 + $0x80] sm:$0xf] %v649
  %v651 = vld [vmem:[#allocation2 + $0x84] sm:$0x1]
  %v652 = vsel %vm554, %v481, %v651
  %653 = vst [vmem:[#allocation2 + $0x84] sm:$0x1] %v652
  %v654 = vld [vmem:[#allocation2 + $0x88] sm:$0xf]
  %v655 = vsel %vm548, %v488, %v654
  %656 = vst [vmem:[#allocation2 + $0x88] sm:$0xf] %v655
  %v657 = vld [vmem:[#allocation2 + $0x8c] sm:$0x1]
  %v658 = vsel %vm554, %v489, %v657
  %659 = vst [vmem:[#allocation2 + $0x8c] sm:$0x1] %v658
  %v660 = vld [vmem:[#allocation2 + $0x90] sm:$0xf]
  %v661 = vsel %vm548, %v496, %v660
  %662 = vst [vmem:[#allocation2 + $0x90] sm:$0xf] %v661
  %v663 = vld [vmem:[#allocation2 + $0x94] sm:$0x1]
  %v664 = vsel %vm554, %v497, %v663
  %665 = vst [vmem:[#allocation2 + $0x94] sm:$0x1] %v664
  %v666 = vld [vmem:[#allocation2 + $0x98] sm:$0xf]
  %v667 = vsel %vm548, %v504, %v666
  %668 = vst [vmem:[#allocation2 + $0x98] sm:$0xf] %v667
  %v669 = vld [vmem:[#allocation2 + $0x9c] sm:$0x1]
  %v670 = vsel %vm554, %v505, %v669
  %671 = vst [vmem:[#allocation2 + $0x9c] sm:$0x1] %v670
  %v672 = vld [vmem:[#allocation2] sm:$0x1]
  %v673 = vsel %vm554, 0, %v672
  %674 = vst [vmem:[#allocation2] sm:$0x1] %v673
  %v675 = vld [vmem:[#allocation2 + $0x8] sm:$0x1]
  %v676 = vsel %vm554, 0, %v675
  %677 = vst [vmem:[#allocation2 + $0x8] sm:$0x1] %v676
  %v678 = vld [vmem:[#allocation2 + $0x10] sm:$0x1]
  %v679 = vsel %vm554, 0, %v678
  %680 = vst [vmem:[#allocation2 + $0x10] sm:$0x1] %v679
  %v681 = vld [vmem:[#allocation2 + $0x18] sm:$0x1]
  %v682 = vsel %vm554, 0, %v681
  %683 = vst [vmem:[#allocation2 + $0x18] sm:$0x1] %v682
  %v684 = vld [vmem:[#allocation2 + $0x20] sm:$0x1]
  %v685 = vsel %vm554, 0, %v684
  %686 = vst [vmem:[#allocation2 + $0x20] sm:$0x1] %v685
  %v687 = vld [vmem:[#allocation2 + $0x28] sm:$0x1]
  %v688 = vsel %vm554, 0, %v687
  %689 = vst [vmem:[#allocation2 + $0x28] sm:$0x1] %v688
  %v690 = vld [vmem:[#allocation2 + $0x30] sm:$0x1]
  %v691 = vsel %vm554, 0, %v690
  %692 = vst [vmem:[#allocation2 + $0x30] sm:$0x1] %v691
  %v693 = vld [vmem:[#allocation2 + $0x38] sm:$0x1]
  %v694 = vsel %vm554, 0, %v693
  %695 = vst [vmem:[#allocation2 + $0x38] sm:$0x1] %v694
  %v696 = vld [vmem:[#allocation2 + $0x40] sm:$0x1]
  %v697 = vsel %vm554, 0, %v696
  %698 = vst [vmem:[#allocation2 + $0x40] sm:$0x1] %v697
  %v699 = vld [vmem:[#allocation2 + $0x48] sm:$0x1]
  %v700 = vsel %vm554, 0, %v699
  %701 = vst [vmem:[#allocation2 + $0x48] sm:$0x1] %v700
  %v702 = vld [vmem:[#allocation2 + $0x50] sm:$0x1]
  %v703 = vsel %vm554, 0, %v702
  %704 = vst [vmem:[#allocation2 + $0x50] sm:$0x1] %v703
  %v705 = vld [vmem:[#allocation2 + $0x58] sm:$0x1]
  %v706 = vsel %vm554, 0, %v705
  %707 = vst [vmem:[#allocation2 + $0x58] sm:$0x1] %v706
  %v708 = vld [vmem:[#allocation2 + $0x60] sm:$0x1]
  %v709 = vsel %vm554, 0, %v708
  %710 = vst [vmem:[#allocation2 + $0x60] sm:$0x1] %v709
  %v711 = vld [vmem:[#allocation2 + $0x68] sm:$0x1]
  %v712 = vsel %vm554, 0, %v711
  %713 = vst [vmem:[#allocation2 + $0x68] sm:$0x1] %v712
  %v714 = vld [vmem:[#allocation2 + $0x70] sm:$0x1]
  %v715 = vsel %vm554, 0, %v714
  %716 = vst [vmem:[#allocation2 + $0x70] sm:$0x1] %v715
  %v717 = vld [vmem:[#allocation2 + $0x78] sm:$0x1]
  %v718 = vsel %vm554, 0, %v717
  %719 = vst [vmem:[#allocation2 + $0x78] sm:$0x1] %v718
  %v720 = vld [vmem:[#allocation2 + $0x80] sm:$0x1]
  %v721 = vsel %vm554, 0, %v720
  %722 = vst [vmem:[#allocation2 + $0x80] sm:$0x1] %v721
  %v723 = vld [vmem:[#allocation2 + $0x88] sm:$0x1]
  %v724 = vsel %vm554, 0, %v723
  %725 = vst [vmem:[#allocation2 + $0x88] sm:$0x1] %v724
  %v726 = vld [vmem:[#allocation2 + $0x90] sm:$0x1]
  %v727 = vsel %vm554, 0, %v726
  %728 = vst [vmem:[#allocation2 + $0x90] sm:$0x1] %v727
  %v729 = vld [vmem:[#allocation2 + $0x98] sm:$0x1]
  %v730 = vsel %vm554, 0, %v729
  %731 = vst [vmem:[#allocation2 + $0x98] sm:$0x1] %v730
  %vm732 = vmand %vm552, %vm547
  %v733 = vld [vmem:[#allocation2 + $0x4] sm:$0x1]
  %v734 = vsel %vm732, 0, %v733
  %735 = vst [vmem:[#allocation2 + $0x4] sm:$0x1] %v734
  %v736 = vld [vmem:[#allocation2 + $0xc] sm:$0x1]
  %v737 = vsel %vm732, 0, %v736
  %738 = vst [vmem:[#allocation2 + $0xc] sm:$0x1] %v737
  %v739 = vld [vmem:[#allocation2 + $0x14] sm:$0x1]
  %v740 = vsel %vm732, 0, %v739
  %741 = vst [vmem:[#allocation2 + $0x14] sm:$0x1] %v740
  %v742 = vld [vmem:[#allocation2 + $0x1c] sm:$0x1]
  %v743 = vsel %vm732, 0, %v742
  %744 = vst [vmem:[#allocation2 + $0x1c] sm:$0x1] %v743
  %v745 = vld [vmem:[#allocation2 + $0x24] sm:$0x1]
  %v746 = vsel %vm732, 0, %v745
  %747 = vst [vmem:[#allocation2 + $0x24] sm:$0x1] %v746
  %v748 = vld [vmem:[#allocation2 + $0x2c] sm:$0x1]
  %v749 = vsel %vm732, 0, %v748
  %750 = vst [vmem:[#allocation2 + $0x2c] sm:$0x1] %v749
  %v751 = vld [vmem:[#allocation2 + $0x34] sm:$0x1]
  %v752 = vsel %vm732, 0, %v751
  %753 = vst [vmem:[#allocation2 + $0x34] sm:$0x1] %v752
  %v754 = vld [vmem:[#allocation2 + $0x3c] sm:$0x1]
  %v755 = vsel %vm732, 0, %v754
  %756 = vst [vmem:[#allocation2 + $0x3c] sm:$0x1] %v755
  %v757 = vld [vmem:[#allocation2 + $0x44] sm:$0x1]
  %v758 = vsel %vm732, 0, %v757
  %759 = vst [vmem:[#allocation2 + $0x44] sm:$0x1] %v758
  %v760 = vld [vmem:[#allocation2 + $0x4c] sm:$0x1]
  %v761 = vsel %vm732, 0, %v760
  %762 = vst [vmem:[#allocation2 + $0x4c] sm:$0x1] %v761
  %v763 = vld [vmem:[#allocation2 + $0x54] sm:$0x1]
  %v764 = vsel %vm732, 0, %v763
  %765 = vst [vmem:[#allocation2 + $0x54] sm:$0x1] %v764
  %v766 = vld [vmem:[#allocation2 + $0x5c] sm:$0x1]
  %v767 = vsel %vm732, 0, %v766
  %768 = vst [vmem:[#allocation2 + $0x5c] sm:$0x1] %v767
  %v769 = vld [vmem:[#allocation2 + $0x64] sm:$0x1]
  %v770 = vsel %vm732, 0, %v769
  %771 = vst [vmem:[#allocation2 + $0x64] sm:$0x1] %v770
  %v772 = vld [vmem:[#allocation2 + $0x6c] sm:$0x1]
  %v773 = vsel %vm732, 0, %v772
  %774 = vst [vmem:[#allocation2 + $0x6c] sm:$0x1] %v773
  %v775 = vld [vmem:[#allocation2 + $0x74] sm:$0x1]
  %v776 = vsel %vm732, 0, %v775
  %777 = vst [vmem:[#allocation2 + $0x74] sm:$0x1] %v776
  %v778 = vld [vmem:[#allocation2 + $0x7c] sm:$0x1]
  %v779 = vsel %vm732, 0, %v778
  %780 = vst [vmem:[#allocation2 + $0x7c] sm:$0x1] %v779
  %v781 = vld [vmem:[#allocation2 + $0x84] sm:$0x1]
  %v782 = vsel %vm732, 0, %v781
  %783 = vst [vmem:[#allocation2 + $0x84] sm:$0x1] %v782
  %v784 = vld [vmem:[#allocation2 + $0x8c] sm:$0x1]
  %v785 = vsel %vm732, 0, %v784
  %786 = vst [vmem:[#allocation2 + $0x8c] sm:$0x1] %v785
  %v787 = vld [vmem:[#allocation2 + $0x94] sm:$0x1]
  %v788 = vsel %vm732, 0, %v787
  %789 = vst [vmem:[#allocation2 + $0x94] sm:$0x1] %v788
  %v790 = vld [vmem:[#allocation2 + $0x9c] sm:$0x1]
  %v791 = vsel %vm732, 0, %v790
  %792 = vst [vmem:[#allocation2 + $0x9c] sm:$0x1] %v791
  %p793 = scmp.eq.s32.totalorder 0, 0
  // Predicated region
  $region30: #{bottleneck_forward.1} parent=0 // pred_check
    %p794 = pneg %p793
  $region31: #{bottleneck_forward.1} parent=0 // pred_check_branch
    %796 = sbr.rel (%p794) target = $region33
  $region32: #{bottleneck_forward.1} parent=0 // pred_region
    %797 = vst [vmem:[#allocation2] sm:$0xf] 0
    %798 = vst [vmem:[#allocation2 + $0x4] sm:$0x1] 0
    %799 = vst [vmem:[#allocation2 + $0x50] sm:$0xf] 0
    %800 = vst [vmem:[#allocation2 + $0x54] sm:$0x1] 0
    %s801 = scalar_lea.vmem [#allocation2], 72
    %802 = vst [vmem:[%s801] sm:$0xf] 0
    %803 = vst [vmem:[%s801 + $0x4] sm:$0x1] 0
    %804 = vst [vmem:[%s801 + $0x50] sm:$0xf] 0
    %805 = vst [vmem:[%s801 + $0x54] sm:$0x1] 0
  $region33: #{bottleneck_forward.1} parent=0 // pred_fallthru
    _
  %v806 = vld [vmem:[#allocation2] sm:$0xf]
  %v807 = vld [vmem:[#allocation2 + $0x8] sm:$0xf]
  %v808 = vld [vmem:[#allocation2 + $0x10] sm:$0xf]
  %v809 = vld [vmem:[#allocation2 + $0x18] sm:$0xf]
  %v810 = vld [vmem:[#allocation2 + $0x20] sm:$0xf]
  %v811 = vld [vmem:[#allocation2 + $0x28] sm:$0xf]
  %v812 = vld [vmem:[#allocation2 + $0x30] sm:$0xf]
  %v813 = vld [vmem:[#allocation2 + $0x38] sm:$0xf]
  %v814 = vld [vmem:[#allocation2 + $0x50] sm:$0xf]
  %v815 = vld [vmem:[#allocation2 + $0x58] sm:$0xf]
  %v816 = vld [vmem:[#allocation2 + $0x60] sm:$0xf]
  %v817 = vld [vmem:[#allocation2 + $0x68] sm:$0xf]
  %v818 = vld [vmem:[#allocation2 + $0x70] sm:$0xf]
  %v819 = vld [vmem:[#allocation2 + $0x78] sm:$0xf]
  %v820 = vld [vmem:[#allocation2 + $0x80] sm:$0xf]
  %v821 = vld [vmem:[#allocation2 + $0x88] sm:$0xf]
  %v822 = vld [vmem:[%s3] sm:$0xf]
  %v823 = vld [vmem:[%s3 + $0x4] sm:$0xf]
  %v824 = vld [vmem:[%s3 + $0x8] sm:$0xf]
  %v825 = vld [vmem:[%s3 + $0xc] sm:$0xf]
  %v826 = vld [vmem:[%s3 + $0x10] sm:$0xf]
  %v827 = vld [vmem:[%s3 + $0x14] sm:$0xf]
  %v828 = vld [vmem:[%s3 + $0x18] sm:$0xf]
  %v829 = vld [vmem:[%s3 + $0x1c] sm:$0xf]
  %v830 = vld [vmem:[%s3 + $0x20] sm:$0xf]
  %v831 = vld [vmem:[%s3 + $0x24] sm:$0xf]
  %v832 = vld [vmem:[%s3 + $0x28] sm:$0xf]
  %v833 = vld [vmem:[%s3 + $0x2c] sm:$0xf]
  %v834 = vld [vmem:[%s3 + $0x30] sm:$0xf]
  %v835 = vld [vmem:[%s3 + $0x34] sm:$0xf]
  %v836 = vld [vmem:[%s3 + $0x38] sm:$0xf]
  %v837 = vld [vmem:[%s3 + $0x3c] sm:$0xf]
  %v838 = vld [vmem:[#allocation2 + $0x4] sm:$0x1]
  %v839 = vld [vmem:[#allocation2 + $0xc] sm:$0x1]
  %v840 = vld [vmem:[#allocation2 + $0x14] sm:$0x1]
  %v841 = vld [vmem:[#allocation2 + $0x1c] sm:$0x1]
  %v842 = vld [vmem:[#allocation2 + $0x24] sm:$0x1]
  %v843 = vld [vmem:[#allocation2 + $0x2c] sm:$0x1]
  %v844 = vld [vmem:[#allocation2 + $0x34] sm:$0x1]
  %v845 = vld [vmem:[#allocation2 + $0x3c] sm:$0x1]
  %v846 = vld [vmem:[#allocation2 + $0x54] sm:$0x1]
  %v847 = vld [vmem:[#allocation2 + $0x5c] sm:$0x1]
  %v848 = vld [vmem:[#allocation2 + $0x64] sm:$0x1]
  %v849 = vld [vmem:[#allocation2 + $0x6c] sm:$0x1]
  %v850 = vld [vmem:[#allocation2 + $0x74] sm:$0x1]
  %v851 = vld [vmem:[#allocation2 + $0x7c] sm:$0x1]
  %v852 = vld [vmem:[#allocation2 + $0x84] sm:$0x1]
  %v853 = vld [vmem:[#allocation2 + $0x8c] sm:$0x1]
  %vm854 = vsmask.f32 3328
  %vm855 = vsmask.f32 7440
  %vm856 = vmor %vm854, %vm855
  %v858 = vshrl.u32 %v806, 16
  %v860 = vrot.slane %v858, 4
  %v861 = vshll.u32 %v806, 16
  %v863 = vrot.slane %v861, 5
  %v864 = vor.u32 %v860, %v863
  %v865 = vrot.slane %v864, 4
  %v867 = vshll.u32 %v838, 16
  %v869 = vrot.slane %v867, 5
  %v870 = vsel %vm856, %v865, %v869
  %v872 = vshrl.u32 %v807, 16
  %v874 = vrot.slane %v872, 4
  %v875 = vshll.u32 %v807, 16
  %v877 = vrot.slane %v875, 5
  %v878 = vor.u32 %v874, %v877
  %v879 = vrot.slane %v878, 4
  %v881 = vshll.u32 %v839, 16
  %v883 = vrot.slane %v881, 5
  %v884 = vsel %vm856, %v879, %v883
  %v886 = vshrl.u32 %v808, 16
  %v888 = vrot.slane %v886, 4
  %v889 = vshll.u32 %v808, 16
  %v891 = vrot.slane %v889, 5
  %v892 = vor.u32 %v888, %v891
  %v893 = vrot.slane %v892, 4
  %v895 = vshll.u32 %v840, 16
  %v897 = vrot.slane %v895, 5
  %v898 = vsel %vm856, %v893, %v897
  %v900 = vshrl.u32 %v809, 16
  %v902 = vrot.slane %v900, 4
  %v903 = vshll.u32 %v809, 16
  %v905 = vrot.slane %v903, 5
  %v906 = vor.u32 %v902, %v905
  %v907 = vrot.slane %v906, 4
  %v909 = vshll.u32 %v841, 16
  %v911 = vrot.slane %v909, 5
  %v912 = vsel %vm856, %v907, %v911
  %v914 = vshrl.u32 %v810, 16
  %v916 = vrot.slane %v914, 4
  %v917 = vshll.u32 %v810, 16
  %v919 = vrot.slane %v917, 5
  %v920 = vor.u32 %v916, %v919
  %v921 = vrot.slane %v920, 4
  %v923 = vshll.u32 %v842, 16
  %v925 = vrot.slane %v923, 5
  %v926 = vsel %vm856, %v921, %v925
  %v928 = vshrl.u32 %v811, 16
  %v930 = vrot.slane %v928, 4
  %v931 = vshll.u32 %v811, 16
  %v933 = vrot.slane %v931, 5
  %v934 = vor.u32 %v930, %v933
  %v935 = vrot.slane %v934, 4
  %v937 = vshll.u32 %v843, 16
  %v939 = vrot.slane %v937, 5
  %v940 = vsel %vm856, %v935, %v939
  %v942 = vshrl.u32 %v812, 16
  %v944 = vrot.slane %v942, 4
  %v945 = vshll.u32 %v812, 16
  %v947 = vrot.slane %v945, 5
  %v948 = vor.u32 %v944, %v947
  %v949 = vrot.slane %v948, 4
  %v951 = vshll.u32 %v844, 16
  %v953 = vrot.slane %v951, 5
  %v954 = vsel %vm856, %v949, %v953
  %v956 = vshrl.u32 %v813, 16
  %v958 = vrot.slane %v956, 4
  %v959 = vshll.u32 %v813, 16
  %v961 = vrot.slane %v959, 5
  %v962 = vor.u32 %v958, %v961
  %v963 = vrot.slane %v962, 4
  %v965 = vshll.u32 %v845, 16
  %v967 = vrot.slane %v965, 5
  %v968 = vsel %vm856, %v963, %v967
  %v970 = vshrl.u32 %v814, 16
  %v972 = vrot.slane %v970, 4
  %v973 = vshll.u32 %v814, 16
  %v975 = vrot.slane %v973, 5
  %v976 = vor.u32 %v972, %v975
  %v977 = vrot.slane %v976, 4
  %v979 = vshll.u32 %v846, 16
  %v981 = vrot.slane %v979, 5
  %v982 = vsel %vm856, %v977, %v981
  %v984 = vshrl.u32 %v815, 16
  %v986 = vrot.slane %v984, 4
  %v987 = vshll.u32 %v815, 16
  %v989 = vrot.slane %v987, 5
  %v990 = vor.u32 %v986, %v989
  %v991 = vrot.slane %v990, 4
  %v993 = vshll.u32 %v847, 16
  %v995 = vrot.slane %v993, 5
  %v996 = vsel %vm856, %v991, %v995
  %v998 = vshrl.u32 %v816, 16
  %v1000 = vrot.slane %v998, 4
  %v1001 = vshll.u32 %v816, 16
  %v1003 = vrot.slane %v1001, 5
  %v1004 = vor.u32 %v1000, %v1003
  %v1005 = vrot.slane %v1004, 4
  %v1007 = vshll.u32 %v848, 16
  %v1009 = vrot.slane %v1007, 5
  %v1010 = vsel %vm856, %v1005, %v1009
  %v1012 = vshrl.u32 %v817, 16
  %v1014 = vrot.slane %v1012, 4
  %v1015 = vshll.u32 %v817, 16
  %v1017 = vrot.slane %v1015, 5
  %v1018 = vor.u32 %v1014, %v1017
  %v1019 = vrot.slane %v1018, 4
  %v1021 = vshll.u32 %v849, 16
  %v1023 = vrot.slane %v1021, 5
  %v1024 = vsel %vm856, %v1019, %v1023
  %v1026 = vshrl.u32 %v818, 16
  %v1028 = vrot.slane %v1026, 4
  %v1029 = vshll.u32 %v818, 16
  %v1031 = vrot.slane %v1029, 5
  %v1032 = vor.u32 %v1028, %v1031
  %v1033 = vrot.slane %v1032, 4
  %v1035 = vshll.u32 %v850, 16
  %v1037 = vrot.slane %v1035, 5
  %v1038 = vsel %vm856, %v1033, %v1037
  %v1040 = vshrl.u32 %v819, 16
  %v1042 = vrot.slane %v1040, 4
  %v1043 = vshll.u32 %v819, 16
  %v1045 = vrot.slane %v1043, 5
  %v1046 = vor.u32 %v1042, %v1045
  %v1047 = vrot.slane %v1046, 4
  %v1049 = vshll.u32 %v851, 16
  %v1051 = vrot.slane %v1049, 5
  %v1052 = vsel %vm856, %v1047, %v1051
  %v1054 = vshrl.u32 %v820, 16
  %v1056 = vrot.slane %v1054, 4
  %v1057 = vshll.u32 %v820, 16
  %v1059 = vrot.slane %v1057, 5
  %v1060 = vor.u32 %v1056, %v1059
  %v1061 = vrot.slane %v1060, 4
  %v1063 = vshll.u32 %v852, 16
  %v1065 = vrot.slane %v1063, 5
  %v1066 = vsel %vm856, %v1061, %v1065
  %v1068 = vshrl.u32 %v821, 16
  %v1070 = vrot.slane %v1068, 4
  %v1071 = vshll.u32 %v821, 16
  %v1073 = vrot.slane %v1071, 5
  %v1074 = vor.u32 %v1070, %v1073
  %v1075 = vrot.slane %v1074, 4
  %v1077 = vshll.u32 %v853, 16
  %v1079 = vrot.slane %v1077, 5
  %v1080 = vsel %vm856, %v1075, %v1079
  %v1081 = vld [vmem:[%s3 + $0x40] sm:$0xf]
  %v1082 = vld [vmem:[%s3 + $0x44] sm:$0xf]
  %v1083 = vld [vmem:[%s3 + $0x48] sm:$0xf]
  %v1084 = vld [vmem:[%s3 + $0x4c] sm:$0xf]
  %v1085 = vld [vmem:[%s3 + $0x50] sm:$0xf]
  %v1086 = vld [vmem:[%s3 + $0x54] sm:$0xf]
  %v1087 = vld [vmem:[%s3 + $0x58] sm:$0xf]
  %v1088 = vld [vmem:[%s3 + $0x5c] sm:$0xf]
  %v1089 = vld [vmem:[%s3 + $0x60] sm:$0xf]
  %v1090 = vld [vmem:[%s3 + $0x64] sm:$0xf]
  %v1091 = vld [vmem:[%s3 + $0x68] sm:$0xf]
  %v1092 = vld [vmem:[%s3 + $0x6c] sm:$0xf]
  %v1093 = vld [vmem:[%s3 + $0x70] sm:$0xf]
  %v1094 = vld [vmem:[%s3 + $0x74] sm:$0xf]
  %v1095 = vld [vmem:[%s3 + $0x78] sm:$0xf]
  %v1096 = vld [vmem:[%s3 + $0x7c] sm:$0xf]
  %v1097 = vunpack.c.l.b16 %v870
  %v1098 = vunpack.c.l.b16 %v884
  %v1099 = vunpack.c.l.b16 %v898
  %v1100 = vunpack.c.l.b16 %v912
  %v1101 = vunpack.c.l.b16 %v926
  %v1102 = vunpack.c.l.b16 %v940
  %v1103 = vunpack.c.l.b16 %v954
  %v1104 = vunpack.c.l.b16 %v968
  %v1105 = vunpack.c.l.b16 %v982
  %v1106 = vunpack.c.l.b16 %v996
  %v1107 = vunpack.c.l.b16 %v1010
  %v1108 = vunpack.c.l.b16 %v1024
  %v1109 = vunpack.c.l.b16 %v1038
  %v1110 = vunpack.c.l.b16 %v1052
  %v1111 = vunpack.c.l.b16 %v1066
  %v1112 = vunpack.c.l.b16 %v1080
  %v1113 = vpack.c.b16 %v1098, %v1097
  %v1114 = vpack.c.b16 %v1100, %v1099
  %v1115 = vpack.c.b16 %v1102, %v1101
  %v1116 = vpack.c.b16 %v1104, %v1103
  %v1117 = vpack.c.b16 %v1106, %v1105
  %v1118 = vpack.c.b16 %v1108, %v1107
  %v1119 = vpack.c.b16 %v1110, %v1109
  %v1120 = vpack.c.b16 %v1112, %v1111
  %v1145 = vunpack.c.l.b16 %v1081
  %v1146 = vunpack.c.l.b16 %v1082
  %v1147 = vunpack.c.l.b16 %v1083
  %v1148 = vunpack.c.l.b16 %v1084
  %v1149 = vunpack.c.l.b16 %v1085
  %v1150 = vunpack.c.l.b16 %v1086
  %v1151 = vunpack.c.l.b16 %v1087
  %v1152 = vunpack.c.l.b16 %v1088
  %v1153 = vunpack.c.l.b16 %v1089
  %v1154 = vunpack.c.l.b16 %v1090
  %v1155 = vunpack.c.l.b16 %v1091
  %v1156 = vunpack.c.l.b16 %v1092
  %v1157 = vunpack.c.l.b16 %v1093
  %v1158 = vunpack.c.l.b16 %v1094
  %v1159 = vunpack.c.l.b16 %v1095
  %v1160 = vunpack.c.l.b16 %v1096
  %v1161 = vpack.c.b16 %v1146, %v1145
  %v1162 = vpack.c.b16 %v1148, %v1147
  %v1163 = vpack.c.b16 %v1150, %v1149
  %v1164 = vpack.c.b16 %v1152, %v1151
  %v1165 = vpack.c.b16 %v1154, %v1153
  %v1166 = vpack.c.b16 %v1156, %v1155
  %v1167 = vpack.c.b16 %v1158, %v1157
  %v1168 = vpack.c.b16 %v1160, %v1159
  %1177 = vmatprep.subr.bf16.mxu0 0
  %1178 = vmatpush1.bf16.msra.mxu0 %v1161
  %1179 = vmatprep.subr.bf16.mxu0 0
  %1180 = vmatpush1.bf16.msra.mxu0 %v1162
  %1181 = vmatprep.subr.bf16.mxu0 0
  %1182 = vmatpush1.bf16.msra.mxu0 %v1163
  %1183 = vmatprep.subr.bf16.mxu0 0
  %1184 = vmatpush1.bf16.msra.mxu0 %v1164
  %1185 = vmatprep.subr.bf16.mxu0 0
  %1186 = vmatpush1.bf16.msra.mxu0 %v1165
  %1187 = vmatprep.subr.bf16.mxu0 0
  %1188 = vmatpush1.bf16.msra.mxu0 %v1166
  %1189 = vmatprep.subr.bf16.mxu0 0
  %1190 = vmatpush1.bf16.msra.mxu0 %v1167
  %1191 = vmatprep.subr.bf16.mxu0 0
  %1192 = vmatpush1.bf16.msra.mxu0 %v1168
  %1193 = vmatprep.subr.bf16.mxu0 0
  %1194 = vmatpush1.bf16.msra.mxu0 0
  %1195 = vmatprep.subr.bf16.mxu0 0
  %1196 = vmatpush1.bf16.msra.mxu0 0
  %1197 = vmatprep.subr.bf16.mxu0 0
  %1198 = vmatpush1.bf16.msra.mxu0 0
  %1199 = vmatprep.subr.bf16.mxu0 0
  %1200 = vmatpush1.bf16.msra.mxu0 0
  %1201 = vmatprep.subr.bf16.mxu0 0
  %1202 = vmatpush1.bf16.msra.mxu0 0
  %1203 = vmatprep.subr.bf16.mxu0 0
  %1204 = vmatpush1.bf16.msra.mxu0 0
  %1205 = vmatprep.subr.bf16.mxu0 0
  %1206 = vmatpush1.bf16.msra.mxu0 0
  %1207 = vmatprep.subr.bf16.mxu0 0
  %1208 = vmatpush1.bf16.msra.mxu0 0
  %1209 = vmatprep.mubr.bf16.mxu0 0
  %1210 = vmatmul.mubr.bf16.gmra.mrb[0].mxu0 %v1113
  %v1211 = vpop.f32.mrb[0].mxu0
  %v1212 = vadd.f32 0.0, %v1211
  %v1213 = vpop.f32.mrb[0].mxu0
  %v1214 = vpop.f32.mrb[0].mxu0
  %v1215 = vadd.f32 0.0, %v1214
  %v1216 = vpop.f32.mrb[0].mxu0
  %1217 = vmatprep.mubr.bf16.mxu0 0
  %1218 = vmatmul.mubr.bf16.gmra.mrb[0].mxu0 %v1114
  %v1219 = vpop.f32.mrb[0].mxu0
  %v1220 = vadd.f32 0.0, %v1219
  %v1221 = vpop.f32.mrb[0].mxu0
  %v1222 = vpop.f32.mrb[0].mxu0
  %v1223 = vadd.f32 0.0, %v1222
  %v1224 = vpop.f32.mrb[0].mxu0
  %1225 = vmatprep.mubr.bf16.mxu0 0
  %1226 = vmatmul.mubr.bf16.gmra.mrb[0].mxu0 %v1115
  %v1227 = vpop.f32.mrb[0].mxu0
  %v1228 = vadd.f32 0.0, %v1227
  %v1229 = vpop.f32.mrb[0].mxu0
  %v1230 = vpop.f32.mrb[0].mxu0
  %v1231 = vadd.f32 0.0, %v1230
  %v1232 = vpop.f32.mrb[0].mxu0
  %1233 = vmatprep.mubr.bf16.mxu0 0
  %1234 = vmatmul.mubr.bf16.gmra.mrb[0].mxu0 %v1116
  %v1235 = vpop.f32.mrb[0].mxu0
  %v1236 = vadd.f32 0.0, %v1235
  %v1237 = vpop.f32.mrb[0].mxu0
  %v1238 = vpop.f32.mrb[0].mxu0
  %v1239 = vadd.f32 0.0, %v1238
  %v1240 = vpop.f32.mrb[0].mxu0
  %1241 = vmatprep.mubr.bf16.mxu0 0
  %1242 = vmatmul.mubr.bf16.gmra.mrb[0].mxu0 %v1117
  %v1243 = vpop.f32.mrb[0].mxu0
  %v1244 = vadd.f32 0.0, %v1243
  %v1245 = vpop.f32.mrb[0].mxu0
  %v1246 = vpop.f32.mrb[0].mxu0
  %v1247 = vadd.f32 0.0, %v1246
  %v1248 = vpop.f32.mrb[0].mxu0
  %1249 = vmatprep.mubr.bf16.mxu0 0
  %1250 = vmatmul.mubr.bf16.gmra.mrb[0].mxu0 %v1118
  %v1251 = vpop.f32.mrb[0].mxu0
  %v1252 = vadd.f32 0.0, %v1251
  %v1253 = vpop.f32.mrb[0].mxu0
  %v1254 = vpop.f32.mrb[0].mxu0
  %v1255 = vadd.f32 0.0, %v1254
  %v1256 = vpop.f32.mrb[0].mxu0
  %1257 = vmatprep.mubr.bf16.mxu0 0
  %1258 = vmatmul.mubr.bf16.gmra.mrb[0].mxu0 %v1119
  %v1259 = vpop.f32.mrb[0].mxu0
  %v1260 = vadd.f32 0.0, %v1259
  %v1261 = vpop.f32.mrb[0].mxu0
  %v1262 = vpop.f32.mrb[0].mxu0
  %v1263 = vadd.f32 0.0, %v1262
  %v1264 = vpop.f32.mrb[0].mxu0
  %1265 = vmatprep.mubr.bf16.mxu0 0
  %1266 = vmatmul.mubr.bf16.gmra.mrb[0].mxu0 %v1120
  %v1267 = vpop.f32.mrb[0].mxu0
  %v1268 = vadd.f32 0.0, %v1267
  %v1269 = vpop.f32.mrb[0].mxu0
  %v1270 = vpop.f32.mrb[0].mxu0
  %v1271 = vadd.f32 0.0, %v1270
  %v1272 = vpop.f32.mrb[0].mxu0
  %1273 = vdwg.mxu0
  %v1290 = vunpack.c.l.b16 %v806
  %v1291 = vunpack.c.l.b16 %v807
  %v1292 = vunpack.c.l.b16 %v808
  %v1293 = vunpack.c.l.b16 %v809
  %v1294 = vunpack.c.l.b16 %v810
  %v1295 = vunpack.c.l.b16 %v811
  %v1296 = vunpack.c.l.b16 %v812
  %v1297 = vunpack.c.l.b16 %v813
  %v1298 = vunpack.c.l.b16 %v814
  %v1299 = vunpack.c.l.b16 %v815
  %v1300 = vunpack.c.l.b16 %v816
  %v1301 = vunpack.c.l.b16 %v817
  %v1302 = vunpack.c.l.b16 %v818
  %v1303 = vunpack.c.l.b16 %v819
  %v1304 = vunpack.c.l.b16 %v820
  %v1305 = vunpack.c.l.b16 %v821
  %v1306 = vpack.c.b16 %v1291, %v1290
  %v1307 = vpack.c.b16 %v1293, %v1292
  %v1308 = vpack.c.b16 %v1295, %v1294
  %v1309 = vpack.c.b16 %v1297, %v1296
  %v1310 = vpack.c.b16 %v1299, %v1298
  %v1311 = vpack.c.b16 %v1301, %v1300
  %v1312 = vpack.c.b16 %v1303, %v1302
  %v1313 = vpack.c.b16 %v1305, %v1304
  %v1338 = vunpack.c.l.b16 %v822
  %v1339 = vunpack.c.l.b16 %v823
  %v1340 = vunpack.c.l.b16 %v824
  %v1341 = vunpack.c.l.b16 %v825
  %v1342 = vunpack.c.l.b16 %v826
  %v1343 = vunpack.c.l.b16 %v827
  %v1344 = vunpack.c.l.b16 %v828
  %v1345 = vunpack.c.l.b16 %v829
  %v1346 = vunpack.c.l.b16 %v830
  %v1347 = vunpack.c.l.b16 %v831
  %v1348 = vunpack.c.l.b16 %v832
  %v1349 = vunpack.c.l.b16 %v833
  %v1350 = vunpack.c.l.b16 %v834
  %v1351 = vunpack.c.l.b16 %v835
  %v1352 = vunpack.c.l.b16 %v836
  %v1353 = vunpack.c.l.b16 %v837
  %v1354 = vpack.c.b16 %v1339, %v1338
  %v1355 = vpack.c.b16 %v1341, %v1340
  %v1356 = vpack.c.b16 %v1343, %v1342
  %v1357 = vpack.c.b16 %v1345, %v1344
  %v1358 = vpack.c.b16 %v1347, %v1346
  %v1359 = vpack.c.b16 %v1349, %v1348
  %v1360 = vpack.c.b16 %v1351, %v1350
  %v1361 = vpack.c.b16 %v1353, %v1352
  %1370 = vmatprep.subr.bf16.mxu0 0
  %1371 = vmatpush1.bf16.msra.mxu0 %v1354
  %1372 = vmatprep.subr.bf16.mxu0 0
  %1373 = vmatpush1.bf16.msra.mxu0 %v1355
  %1374 = vmatprep.subr.bf16.mxu0 0
  %1375 = vmatpush1.bf16.msra.mxu0 %v1356
  %1376 = vmatprep.subr.bf16.mxu0 0
  %1377 = vmatpush1.bf16.msra.mxu0 %v1357
  %1378 = vmatprep.subr.bf16.mxu0 0
  %1379 = vmatpush1.bf16.msra.mxu0 %v1358
  %1380 = vmatprep.subr.bf16.mxu0 0
  %1381 = vmatpush1.bf16.msra.mxu0 %v1359
  %1382 = vmatprep.subr.bf16.mxu0 0
  %1383 = vmatpush1.bf16.msra.mxu0 %v1360
  %1384 = vmatprep.subr.bf16.mxu0 0
  %1385 = vmatpush1.bf16.msra.mxu0 %v1361
  %1386 = vmatprep.subr.bf16.mxu0 0
  %1387 = vmatpush1.bf16.msra.mxu0 0
  %1388 = vmatprep.subr.bf16.mxu0 0
  %1389 = vmatpush1.bf16.msra.mxu0 0
  %1390 = vmatprep.subr.bf16.mxu0 0
  %1391 = vmatpush1.bf16.msra.mxu0 0
  %1392 = vmatprep.subr.bf16.mxu0 0
  %1393 = vmatpush1.bf16.msra.mxu0 0
  %1394 = vmatprep.subr.bf16.mxu0 0
  %1395 = vmatpush1.bf16.msra.mxu0 0
  %1396 = vmatprep.subr.bf16.mxu0 0
  %1397 = vmatpush1.bf16.msra.mxu0 0
  %1398 = vmatprep.subr.bf16.mxu0 0
  %1399 = vmatpush1.bf16.msra.mxu0 0
  %1400 = vmatprep.subr.bf16.mxu0 0
  %1401 = vmatpush1.bf16.msra.mxu0 0
  %1402 = vmatprep.mubr.bf16.mxu0 0
  %1403 = vmatmul.mubr.bf16.gmra.mrb[0].mxu0 %v1306
  %v1404 = vpop.f32.mrb[0].mxu0
  %v1405 = vadd.f32 %v1212, %v1404
  %v1406 = vpop.f32.mrb[0].mxu0
  %v1407 = vpop.f32.mrb[0].mxu0
  %v1408 = vadd.f32 %v1215, %v1407
  %v1409 = vpop.f32.mrb[0].mxu0
  %1410 = vmatprep.mubr.bf16.mxu0 0
  %1411 = vmatmul.mubr.bf16.gmra.mrb[0].mxu0 %v1307
  %v1412 = vpop.f32.mrb[0].mxu0
  %v1413 = vadd.f32 %v1220, %v1412
  %v1414 = vpop.f32.mrb[0].mxu0
  %v1415 = vpop.f32.mrb[0].mxu0
  %v1416 = vadd.f32 %v1223, %v1415
  %v1417 = vpop.f32.mrb[0].mxu0
  %1418 = vmatprep.mubr.bf16.mxu0 0
  %1419 = vmatmul.mubr.bf16.gmra.mrb[0].mxu0 %v1308
  %v1420 = vpop.f32.mrb[0].mxu0
  %v1421 = vadd.f32 %v1228, %v1420
  %v1422 = vpop.f32.mrb[0].mxu0
  %v1423 = vpop.f32.mrb[0].mxu0
  %v1424 = vadd.f32 %v1231, %v1423
  %v1425 = vpop.f32.mrb[0].mxu0
  %1426 = vmatprep.mubr.bf16.mxu0 0
  %1427 = vmatmul.mubr.bf16.gmra.mrb[0].mxu0 %v1309
  %v1428 = vpop.f32.mrb[0].mxu0
  %v1429 = vadd.f32 %v1236, %v1428
  %v1430 = vpop.f32.mrb[0].mxu0
  %v1431 = vpop.f32.mrb[0].mxu0
  %v1432 = vadd.f32 %v1239, %v1431
  %v1433 = vpop.f32.mrb[0].mxu0
  %1434 = vmatprep.mubr.bf16.mxu0 0
  %1435 = vmatmul.mubr.bf16.gmra.mrb[0].mxu0 %v1310
  %v1436 = vpop.f32.mrb[0].mxu0
  %v1437 = vadd.f32 %v1244, %v1436
  %v1438 = vpop.f32.mrb[0].mxu0
  %v1439 = vpop.f32.mrb[0].mxu0
  %v1440 = vadd.f32 %v1247, %v1439
  %v1441 = vpop.f32.mrb[0].mxu0
  %1442 = vmatprep.mubr.bf16.mxu0 0
  %1443 = vmatmul.mubr.bf16.gmra.mrb[0].mxu0 %v1311
  %v1444 = vpop.f32.mrb[0].mxu0
  %v1445 = vadd.f32 %v1252, %v1444
  %v1446 = vpop.f32.mrb[0].mxu0
  %v1447 = vpop.f32.mrb[0].mxu0
  %v1448 = vadd.f32 %v1255, %v1447
  %v1449 = vpop.f32.mrb[0].mxu0
  %1450 = vmatprep.mubr.bf16.mxu0 0
  %1451 = vmatmul.mubr.bf16.gmra.mrb[0].mxu0 %v1312
  %v1452 = vpop.f32.mrb[0].mxu0
  %v1453 = vadd.f32 %v1260, %v1452
  %v1454 = vpop.f32.mrb[0].mxu0
  %v1455 = vpop.f32.mrb[0].mxu0
  %v1456 = vadd.f32 %v1263, %v1455
  %v1457 = vpop.f32.mrb[0].mxu0
  %1458 = vmatprep.mubr.bf16.mxu0 0
  %1459 = vmatmul.mubr.bf16.gmra.mrb[0].mxu0 %v1313
  %v1460 = vpop.f32.mrb[0].mxu0
  %v1461 = vadd.f32 %v1268, %v1460
  %v1462 = vpop.f32.mrb[0].mxu0
  %v1463 = vpop.f32.mrb[0].mxu0
  %v1464 = vadd.f32 %v1271, %v1463
  %v1465 = vpop.f32.mrb[0].mxu0
  %1466 = vdwg.mxu0
  %v1467 = vld [vmem:[#allocation2] sm:$0xe]
  %v1468 = vld [vmem:[#allocation2 + $0x8] sm:$0xe]
  %v1469 = vld [vmem:[#allocation2 + $0x10] sm:$0xe]
  %v1470 = vld [vmem:[#allocation2 + $0x18] sm:$0xe]
  %v1471 = vld [vmem:[#allocation2 + $0x20] sm:$0xe]
  %v1472 = vld [vmem:[#allocation2 + $0x28] sm:$0xe]
  %v1473 = vld [vmem:[#allocation2 + $0x30] sm:$0xe]
  %v1474 = vld [vmem:[#allocation2 + $0x38] sm:$0xe]
  %v1475 = vld [vmem:[#allocation2 + $0x50] sm:$0xe]
  %v1476 = vld [vmem:[#allocation2 + $0x58] sm:$0xe]
  %v1477 = vld [vmem:[#allocation2 + $0x60] sm:$0xe]
  %v1478 = vld [vmem:[#allocation2 + $0x68] sm:$0xe]
  %v1479 = vld [vmem:[#allocation2 + $0x70] sm:$0xe]
  %v1480 = vld [vmem:[#allocation2 + $0x78] sm:$0xe]
  %v1481 = vld [vmem:[#allocation2 + $0x80] sm:$0xe]
  %v1482 = vld [vmem:[#allocation2 + $0x88] sm:$0xe]
  %vm1515 = vcmask 1042432
  %vm1516 = vcmask 1046532
  %vm1517 = vmor %vm1515, %vm1516
  %v1518 = vrot.slane %v1467, 5
  %v1519 = vrot.slane %v1518, 4
  %v1520 = vrot.slane %v838, 5
  %v1521 = vsel %vm1517, %v1519, %v1520
  %v1522 = vrot.slane %v1468, 5
  %v1523 = vrot.slane %v1522, 4
  %v1524 = vrot.slane %v839, 5
  %v1525 = vsel %vm1517, %v1523, %v1524
  %v1526 = vrot.slane %v1469, 5
  %v1527 = vrot.slane %v1526, 4
  %v1528 = vrot.slane %v840, 5
  %v1529 = vsel %vm1517, %v1527, %v1528
  %v1530 = vrot.slane %v1470, 5
  %v1531 = vrot.slane %v1530, 4
  %v1532 = vrot.slane %v841, 5
  %v1533 = vsel %vm1517, %v1531, %v1532
  %v1534 = vrot.slane %v1471, 5
  %v1535 = vrot.slane %v1534, 4
  %v1536 = vrot.slane %v842, 5
  %v1537 = vsel %vm1517, %v1535, %v1536
  %v1538 = vrot.slane %v1472, 5
  %v1539 = vrot.slane %v1538, 4
  %v1540 = vrot.slane %v843, 5
  %v1541 = vsel %vm1517, %v1539, %v1540
  %v1542 = vrot.slane %v1473, 5
  %v1543 = vrot.slane %v1542, 4
  %v1544 = vrot.slane %v844, 5
  %v1545 = vsel %vm1517, %v1543, %v1544
  %v1546 = vrot.slane %v1474, 5
  %v1547 = vrot.slane %v1546, 4
  %v1548 = vrot.slane %v845, 5
  %v1549 = vsel %vm1517, %v1547, %v1548
  %v1550 = vrot.slane %v1475, 5
  %v1551 = vrot.slane %v1550, 4
  %v1552 = vrot.slane %v846, 5
  %v1553 = vsel %vm1517, %v1551, %v1552
  %v1554 = vrot.slane %v1476, 5
  %v1555 = vrot.slane %v1554, 4
  %v1556 = vrot.slane %v847, 5
  %v1557 = vsel %vm1517, %v1555, %v1556
  %v1558 = vrot.slane %v1477, 5
  %v1559 = vrot.slane %v1558, 4
  %v1560 = vrot.slane %v848, 5
  %v1561 = vsel %vm1517, %v1559, %v1560
  %v1562 = vrot.slane %v1478, 5
  %v1563 = vrot.slane %v1562, 4
  %v1564 = vrot.slane %v849, 5
  %v1565 = vsel %vm1517, %v1563, %v1564
  %v1566 = vrot.slane %v1479, 5
  %v1567 = vrot.slane %v1566, 4
  %v1568 = vrot.slane %v850, 5
  %v1569 = vsel %vm1517, %v1567, %v1568
  %v1570 = vrot.slane %v1480, 5
  %v1571 = vrot.slane %v1570, 4
  %v1572 = vrot.slane %v851, 5
  %v1573 = vsel %vm1517, %v1571, %v1572
  %v1574 = vrot.slane %v1481, 5
  %v1575 = vrot.slane %v1574, 4
  %v1576 = vrot.slane %v852, 5
  %v1577 = vsel %vm1517, %v1575, %v1576
  %v1578 = vrot.slane %v1482, 5
  %v1579 = vrot.slane %v1578, 4
  %v1580 = vrot.slane %v853, 5
  %v1581 = vsel %vm1517, %v1579, %v1580
  %v1582 = vld [vmem:[%s3 + $0x80] sm:$0xf]
  %v1583 = vld [vmem:[%s3 + $0x84] sm:$0xf]
  %v1584 = vld [vmem:[%s3 + $0x88] sm:$0xf]
  %v1585 = vld [vmem:[%s3 + $0x8c] sm:$0xf]
  %v1586 = vld [vmem:[%s3 + $0x90] sm:$0xf]
  %v1587 = vld [vmem:[%s3 + $0x94] sm:$0xf]
  %v1588 = vld [vmem:[%s3 + $0x98] sm:$0xf]
  %v1589 = vld [vmem:[%s3 + $0x9c] sm:$0xf]
  %v1590 = vld [vmem:[%s3 + $0xa0] sm:$0xf]
  %v1591 = vld [vmem:[%s3 + $0xa4] sm:$0xf]
  %v1592 = vld [vmem:[%s3 + $0xa8] sm:$0xf]
  %v1593 = vld [vmem:[%s3 + $0xac] sm:$0xf]
  %v1594 = vld [vmem:[%s3 + $0xb0] sm:$0xf]
  %v1595 = vld [vmem:[%s3 + $0xb4] sm:$0xf]
  %v1596 = vld [vmem:[%s3 + $0xb8] sm:$0xf]
  %v1597 = vld [vmem:[%s3 + $0xbc] sm:$0xf]
  %v1598 = vunpack.c.l.b16 %v1521
  %v1599 = vunpack.c.l.b16 %v1525
  %v1600 = vunpack.c.l.b16 %v1529
  %v1601 = vunpack.c.l.b16 %v1533
  %v1602 = vunpack.c.l.b16 %v1537
  %v1603 = vunpack.c.l.b16 %v1541
  %v1604 = vunpack.c.l.b16 %v1545
  %v1605 = vunpack.c.l.b16 %v1549
  %v1606 = vunpack.c.l.b16 %v1553
  %v1607 = vunpack.c.l.b16 %v1557
  %v1608 = vunpack.c.l.b16 %v1561
  %v1609 = vunpack.c.l.b16 %v1565
  %v1610 = vunpack.c.l.b16 %v1569
  %v1611 = vunpack.c.l.b16 %v1573
  %v1612 = vunpack.c.l.b16 %v1577
  %v1613 = vunpack.c.l.b16 %v1581
  %v1614 = vpack.c.b16 %v1599, %v1598
  %v1615 = vpack.c.b16 %v1601, %v1600
  %v1616 = vpack.c.b16 %v1603, %v1602
  %v1617 = vpack.c.b16 %v1605, %v1604
  %v1618 = vpack.c.b16 %v1607, %v1606
  %v1619 = vpack.c.b16 %v1609, %v1608
  %v1620 = vpack.c.b16 %v1611, %v1610
  %v1621 = vpack.c.b16 %v1613, %v1612
  %v1646 = vunpack.c.l.b16 %v1582
  %v1647 = vunpack.c.l.b16 %v1583
  %v1648 = vunpack.c.l.b16 %v1584
  %v1649 = vunpack.c.l.b16 %v1585
  %v1650 = vunpack.c.l.b16 %v1586
  %v1651 = vunpack.c.l.b16 %v1587
  %v1652 = vunpack.c.l.b16 %v1588
  %v1653 = vunpack.c.l.b16 %v1589
  %v1654 = vunpack.c.l.b16 %v1590
  %v1655 = vunpack.c.l.b16 %v1591
  %v1656 = vunpack.c.l.b16 %v1592
  %v1657 = vunpack.c.l.b16 %v1593
  %v1658 = vunpack.c.l.b16 %v1594
  %v1659 = vunpack.c.l.b16 %v1595
  %v1660 = vunpack.c.l.b16 %v1596
  %v1661 = vunpack.c.l.b16 %v1597
  %v1662 = vpack.c.b16 %v1647, %v1646
  %v1663 = vpack.c.b16 %v1649, %v1648
  %v1664 = vpack.c.b16 %v1651, %v1650
  %v1665 = vpack.c.b16 %v1653, %v1652
  %v1666 = vpack.c.b16 %v1655, %v1654
  %v1667 = vpack.c.b16 %v1657, %v1656
  %v1668 = vpack.c.b16 %v1659, %v1658
  %v1669 = vpack.c.b16 %v1661, %v1660
  %1678 = vmatprep.subr.bf16.mxu0 0
  %1679 = vmatpush1.bf16.msra.mxu0 %v1662
  %1680 = vmatprep.subr.bf16.mxu0 0
  %1681 = vmatpush1.bf16.msra.mxu0 %v1663
  %1682 = vmatprep.subr.bf16.mxu0 0
  %1683 = vmatpush1.bf16.msra.mxu0 %v1664
  %1684 = vmatprep.subr.bf16.mxu0 0
  %1685 = vmatpush1.bf16.msra.mxu0 %v1665
  %1686 = vmatprep.subr.bf16.mxu0 0
  %1687 = vmatpush1.bf16.msra.mxu0 %v1666
  %1688 = vmatprep.subr.bf16.mxu0 0
  %1689 = vmatpush1.bf16.msra.mxu0 %v1667
  %1690 = vmatprep.subr.bf16.mxu0 0
  %1691 = vmatpush1.bf16.msra.mxu0 %v1668
  %1692 = vmatprep.subr.bf16.mxu0 0
  %1693 = vmatpush1.bf16.msra.mxu0 %v1669
  %1694 = vmatprep.subr.bf16.mxu0 0
  %1695 = vmatpush1.bf16.msra.mxu0 0
  %1696 = vmatprep.subr.bf16.mxu0 0
  %1697 = vmatpush1.bf16.msra.mxu0 0
  %1698 = vmatprep.subr.bf16.mxu0 0
  %1699 = vmatpush1.bf16.msra.mxu0 0
  %1700 = vmatprep.subr.bf16.mxu0 0
  %1701 = vmatpush1.bf16.msra.mxu0 0
  %1702 = vmatprep.subr.bf16.mxu0 0
  %1703 = vmatpush1.bf16.msra.mxu0 0
  %1704 = vmatprep.subr.bf16.mxu0 0
  %1705 = vmatpush1.bf16.msra.mxu0 0
  %1706 = vmatprep.subr.bf16.mxu0 0
  %1707 = vmatpush1.bf16.msra.mxu0 0
  %1708 = vmatprep.subr.bf16.mxu0 0
  %1709 = vmatpush1.bf16.msra.mxu0 0
  %1710 = vmatprep.mubr.bf16.mxu0 0
  %1711 = vmatmul.mubr.bf16.gmra.mrb[0].mxu0 %v1614
  %v1712 = vpop.f32.mrb[0].mxu0
  %v1713 = vadd.f32 0.0, %v1712
  %v1714 = vpop.f32.mrb[0].mxu0
  %v1715 = vpop.f32.mrb[0].mxu0
  %v1716 = vadd.f32 0.0, %v1715
  %v1717 = vpop.f32.mrb[0].mxu0
  %1718 = vmatprep.mubr.bf16.mxu0 0
  %1719 = vmatmul.mubr.bf16.gmra.mrb[0].mxu0 %v1615
  %v1720 = vpop.f32.mrb[0].mxu0
  %v1721 = vadd.f32 0.0, %v1720
  %v1722 = vpop.f32.mrb[0].mxu0
  %v1723 = vpop.f32.mrb[0].mxu0
  %v1724 = vadd.f32 0.0, %v1723
  %v1725 = vpop.f32.mrb[0].mxu0
  %1726 = vmatprep.mubr.bf16.mxu0 0
  %1727 = vmatmul.mubr.bf16.gmra.mrb[0].mxu0 %v1616
  %v1728 = vpop.f32.mrb[0].mxu0
  %v1729 = vadd.f32 0.0, %v1728
  %v1730 = vpop.f32.mrb[0].mxu0
  %v1731 = vpop.f32.mrb[0].mxu0
  %v1732 = vadd.f32 0.0, %v1731
  %v1733 = vpop.f32.mrb[0].mxu0
  %1734 = vmatprep.mubr.bf16.mxu0 0
  %1735 = vmatmul.mubr.bf16.gmra.mrb[0].mxu0 %v1617
  %v1736 = vpop.f32.mrb[0].mxu0
  %v1737 = vadd.f32 0.0, %v1736
  %v1738 = vpop.f32.mrb[0].mxu0
  %v1739 = vpop.f32.mrb[0].mxu0
  %v1740 = vadd.f32 0.0, %v1739
  %v1741 = vpop.f32.mrb[0].mxu0
  %1742 = vmatprep.mubr.bf16.mxu0 0
  %1743 = vmatmul.mubr.bf16.gmra.mrb[0].mxu0 %v1618
  %v1744 = vpop.f32.mrb[0].mxu0
  %v1745 = vadd.f32 0.0, %v1744
  %v1746 = vpop.f32.mrb[0].mxu0
  %v1747 = vpop.f32.mrb[0].mxu0
  %v1748 = vadd.f32 0.0, %v1747
  %v1749 = vpop.f32.mrb[0].mxu0
  %1750 = vmatprep.mubr.bf16.mxu0 0
  %1751 = vmatmul.mubr.bf16.gmra.mrb[0].mxu0 %v1619
  %v1752 = vpop.f32.mrb[0].mxu0
  %v1753 = vadd.f32 0.0, %v1752
  %v1754 = vpop.f32.mrb[0].mxu0
  %v1755 = vpop.f32.mrb[0].mxu0
  %v1756 = vadd.f32 0.0, %v1755
  %v1757 = vpop.f32.mrb[0].mxu0
  %1758 = vmatprep.mubr.bf16.mxu0 0
  %1759 = vmatmul.mubr.bf16.gmra.mrb[0].mxu0 %v1620
  %v1760 = vpop.f32.mrb[0].mxu0
  %v1761 = vadd.f32 0.0, %v1760
  %v1762 = vpop.f32.mrb[0].mxu0
  %v1763 = vpop.f32.mrb[0].mxu0
  %v1764 = vadd.f32 0.0, %v1763
  %v1765 = vpop.f32.mrb[0].mxu0
  %1766 = vmatprep.mubr.bf16.mxu0 0
  %1767 = vmatmul.mubr.bf16.gmra.mrb[0].mxu0 %v1621
  %v1768 = vpop.f32.mrb[0].mxu0
  %v1769 = vadd.f32 0.0, %v1768
  %v1770 = vpop.f32.mrb[0].mxu0
  %v1771 = vpop.f32.mrb[0].mxu0
  %v1772 = vadd.f32 0.0, %v1771
  %v1773 = vpop.f32.mrb[0].mxu0
  %1774 = vdwg.mxu0
  %v1775 = vadd.f32 %v1405, %v1713
  %v1776 = vadd.f32 %v1408, %v1716
  %v1777 = vadd.f32 %v1413, %v1721
  %v1778 = vadd.f32 %v1416, %v1724
  %v1779 = vadd.f32 %v1421, %v1729
  %v1780 = vadd.f32 %v1424, %v1732
  %v1781 = vadd.f32 %v1429, %v1737
  %v1782 = vadd.f32 %v1432, %v1740
  %v1783 = vadd.f32 %v1437, %v1745
  %v1784 = vadd.f32 %v1440, %v1748
  %v1785 = vadd.f32 %v1445, %v1753
  %v1786 = vadd.f32 %v1448, %v1756
  %v1787 = vadd.f32 %v1453, %v1761
  %v1788 = vadd.f32 %v1456, %v1764
  %v1789 = vadd.f32 %v1461, %v1769
  %v1790 = vadd.f32 %v1464, %v1772
  %s1791 = scalar_lea.vmem [#allocation2], 8
  %v1792 = vld [vmem:[%s1791] sm:$0xf]
  %v1793 = vld [vmem:[%s1791 + $0x8] sm:$0xf]
  %v1794 = vld [vmem:[%s1791 + $0x10] sm:$0xf]
  %v1795 = vld [vmem:[%s1791 + $0x18] sm:$0xf]
  %v1796 = vld [vmem:[%s1791 + $0x20] sm:$0xf]
  %v1797 = vld [vmem:[%s1791 + $0x28] sm:$0xf]
  %v1798 = vld [vmem:[%s1791 + $0x30] sm:$0xf]
  %v1799 = vld [vmem:[%s1791 + $0x38] sm:$0xf]
  %v1800 = vld [vmem:[%s1791 + $0x50] sm:$0xf]
  %v1801 = vld [vmem:[%s1791 + $0x58] sm:$0xf]
  %v1802 = vld [vmem:[%s1791 + $0x60] sm:$0xf]
  %v1803 = vld [vmem:[%s1791 + $0x68] sm:$0xf]
  %v1804 = vld [vmem:[%s1791 + $0x70] sm:$0xf]
  %v1805 = vld [vmem:[%s1791 + $0x78] sm:$0xf]
  %v1806 = vld [vmem:[%s1791 + $0x80] sm:$0xf]
  %v1807 = vld [vmem:[%s1791 + $0x88] sm:$0xf]
  %v1808 = vld [vmem:[%s3 + $0xc0] sm:$0xf]
  %v1809 = vld [vmem:[%s3 + $0xc4] sm:$0xf]
  %v1810 = vld [vmem:[%s3 + $0xc8] sm:$0xf]
  %v1811 = vld [vmem:[%s3 + $0xcc] sm:$0xf]
  %v1812 = vld [vmem:[%s3 + $0xd0] sm:$0xf]
  %v1813 = vld [vmem:[%s3 + $0xd4] sm:$0xf]
  %v1814 = vld [vmem:[%s3 + $0xd8] sm:$0xf]
  %v1815 = vld [vmem:[%s3 + $0xdc] sm:$0xf]
  %v1816 = vld [vmem:[%s3 + $0xe0] sm:$0xf]
  %v1817 = vld [vmem:[%s3 + $0xe4] sm:$0xf]
  %v1818 = vld [vmem:[%s3 + $0xe8] sm:$0xf]
  %v1819 = vld [vmem:[%s3 + $0xec] sm:$0xf]
  %v1820 = vld [vmem:[%s3 + $0xf0] sm:$0xf]
  %v1821 = vld [vmem:[%s3 + $0xf4] sm:$0xf]
  %v1822 = vld [vmem:[%s3 + $0xf8] sm:$0xf]
  %v1823 = vld [vmem:[%s3 + $0xfc] sm:$0xf]
  %v1840 = vunpack.c.l.b16 %v1792
  %v1841 = vunpack.c.l.b16 %v1793
  %v1842 = vunpack.c.l.b16 %v1794
  %v1843 = vunpack.c.l.b16 %v1795
  %v1844 = vunpack.c.l.b16 %v1796
  %v1845 = vunpack.c.l.b16 %v1797
  %v1846 = vunpack.c.l.b16 %v1798
  %v1847 = vunpack.c.l.b16 %v1799
  %v1848 = vunpack.c.l.b16 %v1800
  %v1849 = vunpack.c.l.b16 %v1801
  %v1850 = vunpack.c.l.b16 %v1802
  %v1851 = vunpack.c.l.b16 %v1803
  %v1852 = vunpack.c.l.b16 %v1804
  %v1853 = vunpack.c.l.b16 %v1805
  %v1854 = vunpack.c.l.b16 %v1806
  %v1855 = vunpack.c.l.b16 %v1807
  %v1856 = vpack.c.b16 %v1841, %v1840
  %v1857 = vpack.c.b16 %v1843, %v1842
  %v1858 = vpack.c.b16 %v1845, %v1844
  %v1859 = vpack.c.b16 %v1847, %v1846
  %v1860 = vpack.c.b16 %v1849, %v1848
  %v1861 = vpack.c.b16 %v1851, %v1850
  %v1862 = vpack.c.b16 %v1853, %v1852
  %v1863 = vpack.c.b16 %v1855, %v1854
  %v1888 = vunpack.c.l.b16 %v1808
  %v1889 = vunpack.c.l.b16 %v1809
  %v1890 = vunpack.c.l.b16 %v1810
  %v1891 = vunpack.c.l.b16 %v1811
  %v1892 = vunpack.c.l.b16 %v1812
  %v1893 = vunpack.c.l.b16 %v1813
  %v1894 = vunpack.c.l.b16 %v1814
  %v1895 = vunpack.c.l.b16 %v1815
  %v1896 = vunpack.c.l.b16 %v1816
  %v1897 = vunpack.c.l.b16 %v1817
  %v1898 = vunpack.c.l.b16 %v1818
  %v1899 = vunpack.c.l.b16 %v1819
  %v1900 = vunpack.c.l.b16 %v1820
  %v1901 = vunpack.c.l.b16 %v1821
  %v1902 = vunpack.c.l.b16 %v1822
  %v1903 = vunpack.c.l.b16 %v1823
  %v1904 = vpack.c.b16 %v1889, %v1888
  %v1905 = vpack.c.b16 %v1891, %v1890
  %v1906 = vpack.c.b16 %v1893, %v1892
  %v1907 = vpack.c.b16 %v1895, %v1894
  %v1908 = vpack.c.b16 %v1897, %v1896
  %v1909 = vpack.c.b16 %v1899, %v1898
  %v1910 = vpack.c.b16 %v1901, %v1900
  %v1911 = vpack.c.b16 %v1903, %v1902
  %1920 = vmatprep.subr.bf16.mxu0 0
  %1921 = vmatpush1.bf16.msra.mxu0 %v1904
  %1922 = vmatprep.subr.bf16.mxu0 0
  %1923 = vmatpush1.bf16.msra.mxu0 %v1905
  %1924 = vmatprep.subr.bf16.mxu0 0
  %1925 = vmatpush1.bf16.msra.mxu0 %v1906
  %1926 = vmatprep.subr.bf16.mxu0 0
  %1927 = vmatpush1.bf16.msra.mxu0 %v1907
  %1928 = vmatprep.subr.bf16.mxu0 0
  %1929 = vmatpush1.bf16.msra.mxu0 %v1908
  %1930 = vmatprep.subr.bf16.mxu0 0
  %1931 = vmatpush1.bf16.msra.mxu0 %v1909
  %1932 = vmatprep.subr.bf16.mxu0 0
  %1933 = vmatpush1.bf16.msra.mxu0 %v1910
  %1934 = vmatprep.subr.bf16.mxu0 0
  %1935 = vmatpush1.bf16.msra.mxu0 %v1911
  %1936 = vmatprep.subr.bf16.mxu0 0
  %1937 = vmatpush1.bf16.msra.mxu0 0
  %1938 = vmatprep.subr.bf16.mxu0 0
  %1939 = vmatpush1.bf16.msra.mxu0 0
  %1940 = vmatprep.subr.bf16.mxu0 0
  %1941 = vmatpush1.bf16.msra.mxu0 0
  %1942 = vmatprep.subr.bf16.mxu0 0
  %1943 = vmatpush1.bf16.msra.mxu0 0
  %1944 = vmatprep.subr.bf16.mxu0 0
  %1945 = vmatpush1.bf16.msra.mxu0 0
  %1946 = vmatprep.subr.bf16.mxu0 0
  %1947 = vmatpush1.bf16.msra.mxu0 0
  %1948 = vmatprep.subr.bf16.mxu0 0
  %1949 = vmatpush1.bf16.msra.mxu0 0
  %1950 = vmatprep.subr.bf16.mxu0 0
  %1951 = vmatpush1.bf16.msra.mxu0 0
  %1952 = vmatprep.mubr.bf16.mxu0 0
  %1953 = vmatmul.mubr.bf16.gmra.mrb[0].mxu0 %v1856
  %v1954 = vpop.f32.mrb[0].mxu0
  %v1955 = vadd.f32 0.0, %v1954
  %v1956 = vpop.f32.mrb[0].mxu0
  %v1957 = vpop.f32.mrb[0].mxu0
  %v1958 = vadd.f32 0.0, %v1957
  %v1959 = vpop.f32.mrb[0].mxu0
  %1960 = vmatprep.mubr.bf16.mxu0 0
  %1961 = vmatmul.mubr.bf16.gmra.mrb[0].mxu0 %v1857
  %v1962 = vpop.f32.mrb[0].mxu0
  %v1963 = vadd.f32 0.0, %v1962
  %v1964 = vpop.f32.mrb[0].mxu0
  %v1965 = vpop.f32.mrb[0].mxu0
  %v1966 = vadd.f32 0.0, %v1965
  %v1967 = vpop.f32.mrb[0].mxu0
  %1968 = vmatprep.mubr.bf16.mxu0 0
  %1969 = vmatmul.mubr.bf16.gmra.mrb[0].mxu0 %v1858
  %v1970 = vpop.f32.mrb[0].mxu0
  %v1971 = vadd.f32 0.0, %v1970
  %v1972 = vpop.f32.mrb[0].mxu0
  %v1973 = vpop.f32.mrb[0].mxu0
  %v1974 = vadd.f32 0.0, %v1973
  %v1975 = vpop.f32.mrb[0].mxu0
  %1976 = vmatprep.mubr.bf16.mxu0 0
  %1977 = vmatmul.mubr.bf16.gmra.mrb[0].mxu0 %v1859
  %v1978 = vpop.f32.mrb[0].mxu0
  %v1979 = vadd.f32 0.0, %v1978
  %v1980 = vpop.f32.mrb[0].mxu0
  %v1981 = vpop.f32.mrb[0].mxu0
  %v1982 = vadd.f32 0.0, %v1981
  %v1983 = vpop.f32.mrb[0].mxu0
  %1984 = vmatprep.mubr.bf16.mxu0 0
  %1985 = vmatmul.mubr.bf16.gmra.mrb[0].mxu0 %v1860
  %v1986 = vpop.f32.mrb[0].mxu0
  %v1987 = vadd.f32 0.0, %v1986
  %v1988 = vpop.f32.mrb[0].mxu0
  %v1989 = vpop.f32.mrb[0].mxu0
  %v1990 = vadd.f32 0.0, %v1989
  %v1991 = vpop.f32.mrb[0].mxu0
  %1992 = vmatprep.mubr.bf16.mxu0 0
  %1993 = vmatmul.mubr.bf16.gmra.mrb[0].mxu0 %v1861
  %v1994 = vpop.f32.mrb[0].mxu0
  %v1995 = vadd.f32 0.0, %v1994
  %v1996 = vpop.f32.mrb[0].mxu0
  %v1997 = vpop.f32.mrb[0].mxu0
  %v1998 = vadd.f32 0.0, %v1997
  %v1999 = vpop.f32.mrb[0].mxu0
  %2000 = vmatprep.mubr.bf16.mxu0 0
  %2001 = vmatmul.mubr.bf16.gmra.mrb[0].mxu0 %v1862
  %v2002 = vpop.f32.mrb[0].mxu0
  %v2003 = vadd.f32 0.0, %v2002
  %v2004 = vpop.f32.mrb[0].mxu0
  %v2005 = vpop.f32.mrb[0].mxu0
  %v2006 = vadd.f32 0.0, %v2005
  %v2007 = vpop.f32.mrb[0].mxu0
  %2008 = vmatprep.mubr.bf16.mxu0 0
  %2009 = vmatmul.mubr.bf16.gmra.mrb[0].mxu0 %v1863
  %v2010 = vpop.f32.mrb[0].mxu0
  %v2011 = vadd.f32 0.0, %v2010
  %v2012 = vpop.f32.mrb[0].mxu0
  %v2013 = vpop.f32.mrb[0].mxu0
  %v2014 = vadd.f32 0.0, %v2013
  %v2015 = vpop.f32.mrb[0].mxu0
  %2016 = vdwg.mxu0
  %v2017 = vadd.f32 %v1775, %v1955
  %v2018 = vadd.f32 %v1776, %v1958
  %v2019 = vadd.f32 %v1777, %v1963
  %v2020 = vadd.f32 %v1778, %v1966
  %v2021 = vadd.f32 %v1779, %v1971
  %v2022 = vadd.f32 %v1780, %v1974
  %v2023 = vadd.f32 %v1781, %v1979
  %v2024 = vadd.f32 %v1782, %v1982
  %v2025 = vadd.f32 %v1783, %v1987
  %v2026 = vadd.f32 %v1784, %v1990
  %v2027 = vadd.f32 %v1785, %v1995
  %v2028 = vadd.f32 %v1786, %v1998
  %v2029 = vadd.f32 %v1787, %v2003
  %v2030 = vadd.f32 %v1788, %v2006
  %v2031 = vadd.f32 %v1789, %v2011
  %v2032 = vadd.f32 %v1790, %v2014
  %v2033 = vld [vmem:[%s1791] sm:$0xf]
  %v2034 = vld [vmem:[%s1791 + $0x4] sm:$0x1]
  %v2035 = vld [vmem:[%s1791 + $0x8] sm:$0xf]
  %v2036 = vld [vmem:[%s1791 + $0xc] sm:$0x1]
  %v2037 = vld [vmem:[%s1791 + $0x10] sm:$0xf]
  %v2038 = vld [vmem:[%s1791 + $0x14] sm:$0x1]
  %v2039 = vld [vmem:[%s1791 + $0x18] sm:$0xf]
  %v2040 = vld [vmem:[%s1791 + $0x1c] sm:$0x1]
  %v2041 = vld [vmem:[%s1791 + $0x20] sm:$0xf]
  %v2042 = vld [vmem:[%s1791 + $0x24] sm:$0x1]
  %v2043 = vld [vmem:[%s1791 + $0x28] sm:$0xf]
  %v2044 = vld [vmem:[%s1791 + $0x2c] sm:$0x1]
  %v2045 = vld [vmem:[%s1791 + $0x30] sm:$0xf]
  %v2046 = vld [vmem:[%s1791 + $0x34] sm:$0x1]
  %v2047 = vld [vmem:[%s1791 + $0x38] sm:$0xf]
  %v2048 = vld [vmem:[%s1791 + $0x3c] sm:$0x1]
  %v2049 = vld [vmem:[%s1791 + $0x50] sm:$0xf]
  %v2050 = vld [vmem:[%s1791 + $0x54] sm:$0x1]
  %v2051 = vld [vmem:[%s1791 + $0x58] sm:$0xf]
  %v2052 = vld [vmem:[%s1791 + $0x5c] sm:$0x1]
  %v2053 = vld [vmem:[%s1791 + $0x60] sm:$0xf]
  %v2054 = vld [vmem:[%s1791 + $0x64] sm:$0x1]
  %v2055 = vld [vmem:[%s1791 + $0x68] sm:$0xf]
  %v2056 = vld [vmem:[%s1791 + $0x6c] sm:$0x1]
  %v2057 = vld [vmem:[%s1791 + $0x70] sm:$0xf]
  %v2058 = vld [vmem:[%s1791 + $0x74] sm:$0x1]
  %v2059 = vld [vmem:[%s1791 + $0x78] sm:$0xf]
  %v2060 = vld [vmem:[%s1791 + $0x7c] sm:$0x1]
  %v2061 = vld [vmem:[%s1791 + $0x80] sm:$0xf]
  %v2062 = vld [vmem:[%s1791 + $0x84] sm:$0x1]
  %v2063 = vld [vmem:[%s1791 + $0x88] sm:$0xf]
  %v2064 = vld [vmem:[%s1791 + $0x8c] sm:$0x1]
  %v2066 = vshrl.u32 %v2033, 16
  %v2068 = vrot.slane %v2066, 4
  %v2069 = vshll.u32 %v2033, 16
  %v2071 = vrot.slane %v2069, 5
  %v2072 = vor.u32 %v2068, %v2071
  %v2073 = vrot.slane %v2072, 4
  %v2075 = vshll.u32 %v2034, 16
  %v2077 = vrot.slane %v2075, 5
  %v2078 = vsel %vm856, %v2073, %v2077
  %v2080 = vshrl.u32 %v2035, 16
  %v2082 = vrot.slane %v2080, 4
  %v2083 = vshll.u32 %v2035, 16
  %v2085 = vrot.slane %v2083, 5
  %v2086 = vor.u32 %v2082, %v2085
  %v2087 = vrot.slane %v2086, 4
  %v2089 = vshll.u32 %v2036, 16
  %v2091 = vrot.slane %v2089, 5
  %v2092 = vsel %vm856, %v2087, %v2091
  %v2094 = vshrl.u32 %v2037, 16
  %v2096 = vrot.slane %v2094, 4
  %v2097 = vshll.u32 %v2037, 16
  %v2099 = vrot.slane %v2097, 5
  %v2100 = vor.u32 %v2096, %v2099
  %v2101 = vrot.slane %v2100, 4
  %v2103 = vshll.u32 %v2038, 16
  %v2105 = vrot.slane %v2103, 5
  %v2106 = vsel %vm856, %v2101, %v2105
  %v2108 = vshrl.u32 %v2039, 16
  %v2110 = vrot.slane %v2108, 4
  %v2111 = vshll.u32 %v2039, 16
  %v2113 = vrot.slane %v2111, 5
  %v2114 = vor.u32 %v2110, %v2113
  %v2115 = vrot.slane %v2114, 4
  %v2117 = vshll.u32 %v2040, 16
  %v2119 = vrot.slane %v2117, 5
  %v2120 = vsel %vm856, %v2115, %v2119
  %v2122 = vshrl.u32 %v2041, 16
  %v2124 = vrot.slane %v2122, 4
  %v2125 = vshll.u32 %v2041, 16
  %v2127 = vrot.slane %v2125, 5
  %v2128 = vor.u32 %v2124, %v2127
  %v2129 = vrot.slane %v2128, 4
  %v2131 = vshll.u32 %v2042, 16
  %v2133 = vrot.slane %v2131, 5
  %v2134 = vsel %vm856, %v2129, %v2133
  %v2136 = vshrl.u32 %v2043, 16
  %v2138 = vrot.slane %v2136, 4
  %v2139 = vshll.u32 %v2043, 16
  %v2141 = vrot.slane %v2139, 5
  %v2142 = vor.u32 %v2138, %v2141
  %v2143 = vrot.slane %v2142, 4
  %v2145 = vshll.u32 %v2044, 16
  %v2147 = vrot.slane %v2145, 5
  %v2148 = vsel %vm856, %v2143, %v2147
  %v2150 = vshrl.u32 %v2045, 16
  %v2152 = vrot.slane %v2150, 4
  %v2153 = vshll.u32 %v2045, 16
  %v2155 = vrot.slane %v2153, 5
  %v2156 = vor.u32 %v2152, %v2155
  %v2157 = vrot.slane %v2156, 4
  %v2159 = vshll.u32 %v2046, 16
  %v2161 = vrot.slane %v2159, 5
  %v2162 = vsel %vm856, %v2157, %v2161
  %v2164 = vshrl.u32 %v2047, 16
  %v2166 = vrot.slane %v2164, 4
  %v2167 = vshll.u32 %v2047, 16
  %v2169 = vrot.slane %v2167, 5
  %v2170 = vor.u32 %v2166, %v2169
  %v2171 = vrot.slane %v2170, 4
  %v2173 = vshll.u32 %v2048, 16
  %v2175 = vrot.slane %v2173, 5
  %v2176 = vsel %vm856, %v2171, %v2175
  %v2178 = vshrl.u32 %v2049, 16
  %v2180 = vrot.slane %v2178, 4
  %v2181 = vshll.u32 %v2049, 16
  %v2183 = vrot.slane %v2181, 5
  %v2184 = vor.u32 %v2180, %v2183
  %v2185 = vrot.slane %v2184, 4
  %v2187 = vshll.u32 %v2050, 16
  %v2189 = vrot.slane %v2187, 5
  %v2190 = vsel %vm856, %v2185, %v2189
  %v2192 = vshrl.u32 %v2051, 16
  %v2194 = vrot.slane %v2192, 4
  %v2195 = vshll.u32 %v2051, 16
  %v2197 = vrot.slane %v2195, 5
  %v2198 = vor.u32 %v2194, %v2197
  %v2199 = vrot.slane %v2198, 4
  %v2201 = vshll.u32 %v2052, 16
  %v2203 = vrot.slane %v2201, 5
  %v2204 = vsel %vm856, %v2199, %v2203
  %v2206 = vshrl.u32 %v2053, 16
  %v2208 = vrot.slane %v2206, 4
  %v2209 = vshll.u32 %v2053, 16
  %v2211 = vrot.slane %v2209, 5
  %v2212 = vor.u32 %v2208, %v2211
  %v2213 = vrot.slane %v2212, 4
  %v2215 = vshll.u32 %v2054, 16
  %v2217 = vrot.slane %v2215, 5
  %v2218 = vsel %vm856, %v2213, %v2217
  %v2220 = vshrl.u32 %v2055, 16
  %v2222 = vrot.slane %v2220, 4
  %v2223 = vshll.u32 %v2055, 16
  %v2225 = vrot.slane %v2223, 5
  %v2226 = vor.u32 %v2222, %v2225
  %v2227 = vrot.slane %v2226, 4
  %v2229 = vshll.u32 %v2056, 16
  %v2231 = vrot.slane %v2229, 5
  %v2232 = vsel %vm856, %v2227, %v2231
  %v2234 = vshrl.u32 %v2057, 16
  %v2236 = vrot.slane %v2234, 4
  %v2237 = vshll.u32 %v2057, 16
  %v2239 = vrot.slane %v2237, 5
  %v2240 = vor.u32 %v2236, %v2239
  %v2241 = vrot.slane %v2240, 4
  %v2243 = vshll.u32 %v2058, 16
  %v2245 = vrot.slane %v2243, 5
  %v2246 = vsel %vm856, %v2241, %v2245
  %v2248 = vshrl.u32 %v2059, 16
  %v2250 = vrot.slane %v2248, 4
  %v2251 = vshll.u32 %v2059, 16
  %v2253 = vrot.slane %v2251, 5
  %v2254 = vor.u32 %v2250, %v2253
  %v2255 = vrot.slane %v2254, 4
  %v2257 = vshll.u32 %v2060, 16
  %v2259 = vrot.slane %v2257, 5
  %v2260 = vsel %vm856, %v2255, %v2259
  %v2262 = vshrl.u32 %v2061, 16
  %v2264 = vrot.slane %v2262, 4
  %v2265 = vshll.u32 %v2061, 16
  %v2267 = vrot.slane %v2265, 5
  %v2268 = vor.u32 %v2264, %v2267
  %v2269 = vrot.slane %v2268, 4
  %v2271 = vshll.u32 %v2062, 16
  %v2273 = vrot.slane %v2271, 5
  %v2274 = vsel %vm856, %v2269, %v2273
  %v2276 = vshrl.u32 %v2063, 16
  %v2278 = vrot.slane %v2276, 4
  %v2279 = vshll.u32 %v2063, 16
  %v2281 = vrot.slane %v2279, 5
  %v2282 = vor.u32 %v2278, %v2281
  %v2283 = vrot.slane %v2282, 4
  %v2285 = vshll.u32 %v2064, 16
  %v2287 = vrot.slane %v2285, 5
  %v2288 = vsel %vm856, %v2283, %v2287
  %v2289 = vld [vmem:[%s3 + $0x100] sm:$0xf]
  %v2290 = vld [vmem:[%s3 + $0x104] sm:$0xf]
  %v2291 = vld [vmem:[%s3 + $0x108] sm:$0xf]
  %v2292 = vld [vmem:[%s3 + $0x10c] sm:$0xf]
  %v2293 = vld [vmem:[%s3 + $0x110] sm:$0xf]
  %v2294 = vld [vmem:[%s3 + $0x114] sm:$0xf]
  %v2295 = vld [vmem:[%s3 + $0x118] sm:$0xf]
  %v2296 = vld [vmem:[%s3 + $0x11c] sm:$0xf]
  %v2297 = vld [vmem:[%s3 + $0x120] sm:$0xf]
  %v2298 = vld [vmem:[%s3 + $0x124] sm:$0xf]
  %v2299 = vld [vmem:[%s3 + $0x128] sm:$0xf]
  %v2300 = vld [vmem:[%s3 + $0x12c] sm:$0xf]
  %v2301 = vld [vmem:[%s3 + $0x130] sm:$0xf]
  %v2302 = vld [vmem:[%s3 + $0x134] sm:$0xf]
  %v2303 = vld [vmem:[%s3 + $0x138] sm:$0xf]
  %v2304 = vld [vmem:[%s3 + $0x13c] sm:$0xf]
  %v2305 = vunpack.c.l.b16 %v2078
  %v2306 = vunpack.c.l.b16 %v2092
  %v2307 = vunpack.c.l.b16 %v2106
  %v2308 = vunpack.c.l.b16 %v2120
  %v2309 = vunpack.c.l.b16 %v2134
  %v2310 = vunpack.c.l.b16 %v2148
  %v2311 = vunpack.c.l.b16 %v2162
  %v2312 = vunpack.c.l.b16 %v2176
  %v2313 = vunpack.c.l.b16 %v2190
  %v2314 = vunpack.c.l.b16 %v2204
  %v2315 = vunpack.c.l.b16 %v2218
  %v2316 = vunpack.c.l.b16 %v2232
  %v2317 = vunpack.c.l.b16 %v2246
  %v2318 = vunpack.c.l.b16 %v2260
  %v2319 = vunpack.c.l.b16 %v2274
  %v2320 = vunpack.c.l.b16 %v2288
  %v2321 = vpack.c.b16 %v2306, %v2305
  %v2322 = vpack.c.b16 %v2308, %v2307
  %v2323 = vpack.c.b16 %v2310, %v2309
  %v2324 = vpack.c.b16 %v2312, %v2311
  %v2325 = vpack.c.b16 %v2314, %v2313
  %v2326 = vpack.c.b16 %v2316, %v2315
  %v2327 = vpack.c.b16 %v2318, %v2317
  %v2328 = vpack.c.b16 %v2320, %v2319
  %v2353 = vunpack.c.l.b16 %v2289
  %v2354 = vunpack.c.l.b16 %v2290
  %v2355 = vunpack.c.l.b16 %v2291
  %v2356 = vunpack.c.l.b16 %v2292
  %v2357 = vunpack.c.l.b16 %v2293
  %v2358 = vunpack.c.l.b16 %v2294
  %v2359 = vunpack.c.l.b16 %v2295
  %v2360 = vunpack.c.l.b16 %v2296
  %v2361 = vunpack.c.l.b16 %v2297
  %v2362 = vunpack.c.l.b16 %v2298
  %v2363 = vunpack.c.l.b16 %v2299
  %v2364 = vunpack.c.l.b16 %v2300
  %v2365 = vunpack.c.l.b16 %v2301
  %v2366 = vunpack.c.l.b16 %v2302
  %v2367 = vunpack.c.l.b16 %v2303
  %v2368 = vunpack.c.l.b16 %v2304
  %v2369 = vpack.c.b16 %v2354, %v2353
  %v2370 = vpack.c.b16 %v2356, %v2355
  %v2371 = vpack.c.b16 %v2358, %v2357
  %v2372 = vpack.c.b16 %v2360, %v2359
  %v2373 = vpack.c.b16 %v2362, %v2361
  %v2374 = vpack.c.b16 %v2364, %v2363
  %v2375 = vpack.c.b16 %v2366, %v2365
  %v2376 = vpack.c.b16 %v2368, %v2367
  %2385 = vmatprep.subr.bf16.mxu0 0
  %2386 = vmatpush1.bf16.msra.mxu0 %v2369
  %2387 = vmatprep.subr.bf16.mxu0 0
  %2388 = vmatpush1.bf16.msra.mxu0 %v2370
  %2389 = vmatprep.subr.bf16.mxu0 0
  %2390 = vmatpush1.bf16.msra.mxu0 %v2371
  %2391 = vmatprep.subr.bf16.mxu0 0
  %2392 = vmatpush1.bf16.msra.mxu0 %v2372
  %2393 = vmatprep.subr.bf16.mxu0 0
  %2394 = vmatpush1.bf16.msra.mxu0 %v2373
  %2395 = vmatprep.subr.bf16.mxu0 0
  %2396 = vmatpush1.bf16.msra.mxu0 %v2374
  %2397 = vmatprep.subr.bf16.mxu0 0
  %2398 = vmatpush1.bf16.msra.mxu0 %v2375
  %2399 = vmatprep.subr.bf16.mxu0 0
  %2400 = vmatpush1.bf16.msra.mxu0 %v2376
  %2401 = vmatprep.subr.bf16.mxu0 0
  %2402 = vmatpush1.bf16.msra.mxu0 0
  %2403 = vmatprep.subr.bf16.mxu0 0
  %2404 = vmatpush1.bf16.msra.mxu0 0
  %2405 = vmatprep.subr.bf16.mxu0 0
  %2406 = vmatpush1.bf16.msra.mxu0 0
  %2407 = vmatprep.subr.bf16.mxu0 0
  %2408 = vmatpush1.bf16.msra.mxu0 0
  %2409 = vmatprep.subr.bf16.mxu0 0
  %2410 = vmatpush1.bf16.msra.mxu0 0
  %2411 = vmatprep.subr.bf16.mxu0 0
  %2412 = vmatpush1.bf16.msra.mxu0 0
  %2413 = vmatprep.subr.bf16.mxu0 0
  %2414 = vmatpush1.bf16.msra.mxu0 0
  %2415 = vmatprep.subr.bf16.mxu0 0
  %2416 = vmatpush1.bf16.msra.mxu0 0
  %2417 = vmatprep.mubr.bf16.mxu0 0
  %2418 = vmatmul.mubr.bf16.gmra.mrb[0].mxu0 %v2321
  %v2419 = vpop.f32.mrb[0].mxu0
  %v2420 = vadd.f32 0.0, %v2419
  %v2421 = vpop.f32.mrb[0].mxu0
  %v2422 = vpop.f32.mrb[0].mxu0
  %v2423 = vadd.f32 0.0, %v2422
  %v2424 = vpop.f32.mrb[0].mxu0
  %2425 = vmatprep.mubr.bf16.mxu0 0
  %2426 = vmatmul.mubr.bf16.gmra.mrb[0].mxu0 %v2322
  %v2427 = vpop.f32.mrb[0].mxu0
  %v2428 = vadd.f32 0.0, %v2427
  %v2429 = vpop.f32.mrb[0].mxu0
  %v2430 = vpop.f32.mrb[0].mxu0
  %v2431 = vadd.f32 0.0, %v2430
  %v2432 = vpop.f32.mrb[0].mxu0
  %2433 = vmatprep.mubr.bf16.mxu0 0
  %2434 = vmatmul.mubr.bf16.gmra.mrb[0].mxu0 %v2323
  %v2435 = vpop.f32.mrb[0].mxu0
  %v2436 = vadd.f32 0.0, %v2435
  %v2437 = vpop.f32.mrb[0].mxu0
  %v2438 = vpop.f32.mrb[0].mxu0
  %v2439 = vadd.f32 0.0, %v2438
  %v2440 = vpop.f32.mrb[0].mxu0
  %2441 = vmatprep.mubr.bf16.mxu0 0
  %2442 = vmatmul.mubr.bf16.gmra.mrb[0].mxu0 %v2324
  %v2443 = vpop.f32.mrb[0].mxu0
  %v2444 = vadd.f32 0.0, %v2443
  %v2445 = vpop.f32.mrb[0].mxu0
  %v2446 = vpop.f32.mrb[0].mxu0
  %v2447 = vadd.f32 0.0, %v2446
  %v2448 = vpop.f32.mrb[0].mxu0
  %2449 = vmatprep.mubr.bf16.mxu0 0
  %2450 = vmatmul.mubr.bf16.gmra.mrb[0].mxu0 %v2325
  %v2451 = vpop.f32.mrb[0].mxu0
  %v2452 = vadd.f32 0.0, %v2451
  %v2453 = vpop.f32.mrb[0].mxu0
  %v2454 = vpop.f32.mrb[0].mxu0
  %v2455 = vadd.f32 0.0, %v2454
  %v2456 = vpop.f32.mrb[0].mxu0
  %2457 = vmatprep.mubr.bf16.mxu0 0
  %2458 = vmatmul.mubr.bf16.gmra.mrb[0].mxu0 %v2326
  %v2459 = vpop.f32.mrb[0].mxu0
  %v2460 = vadd.f32 0.0, %v2459
  %v2461 = vpop.f32.mrb[0].mxu0
  %v2462 = vpop.f32.mrb[0].mxu0
  %v2463 = vadd.f32 0.0, %v2462
  %v2464 = vpop.f32.mrb[0].mxu0
  %2465 = vmatprep.mubr.bf16.mxu0 0
  %2466 = vmatmul.mubr.bf16.gmra.mrb[0].mxu0 %v2327
  %v2467 = vpop.f32.mrb[0].mxu0
  %v2468 = vadd.f32 0.0, %v2467
  %v2469 = vpop.f32.mrb[0].mxu0
  %v2470 = vpop.f32.mrb[0].mxu0
  %v2471 = vadd.f32 0.0, %v2470
  %v2472 = vpop.f32.mrb[0].mxu0
  %2473 = vmatprep.mubr.bf16.mxu0 0
  %2474 = vmatmul.mubr.bf16.gmra.mrb[0].mxu0 %v2328
  %v2475 = vpop.f32.mrb[0].mxu0
  %v2476 = vadd.f32 0.0, %v2475
  %v2477 = vpop.f32.mrb[0].mxu0
  %v2478 = vpop.f32.mrb[0].mxu0
  %v2479 = vadd.f32 0.0, %v2478
  %v2480 = vpop.f32.mrb[0].mxu0
  %2481 = vdwg.mxu0
  %v2482 = vadd.f32 %v2017, %v2420
  %v2483 = vadd.f32 %v2018, %v2423
  %v2484 = vadd.f32 %v2019, %v2428
  %v2485 = vadd.f32 %v2020, %v2431
  %v2486 = vadd.f32 %v2021, %v2436
  %v2487 = vadd.f32 %v2022, %v2439
  %v2488 = vadd.f32 %v2023, %v2444
  %v2489 = vadd.f32 %v2024, %v2447
  %v2490 = vadd.f32 %v2025, %v2452
  %v2491 = vadd.f32 %v2026, %v2455
  %v2492 = vadd.f32 %v2027, %v2460
  %v2493 = vadd.f32 %v2028, %v2463
  %v2494 = vadd.f32 %v2029, %v2468
  %v2495 = vadd.f32 %v2030, %v2471
  %v2496 = vadd.f32 %v2031, %v2476
  %v2497 = vadd.f32 %v2032, %v2479
  %v2498 = vld [vmem:[%s1791] sm:$0xe]
  %v2499 = vld [vmem:[%s1791 + $0x8] sm:$0xe]
  %v2500 = vld [vmem:[%s1791 + $0x10] sm:$0xe]
  %v2501 = vld [vmem:[%s1791 + $0x18] sm:$0xe]
  %v2502 = vld [vmem:[%s1791 + $0x20] sm:$0xe]
  %v2503 = vld [vmem:[%s1791 + $0x28] sm:$0xe]
  %v2504 = vld [vmem:[%s1791 + $0x30] sm:$0xe]
  %v2505 = vld [vmem:[%s1791 + $0x38] sm:$0xe]
  %v2506 = vld [vmem:[%s1791 + $0x50] sm:$0xe]
  %v2507 = vld [vmem:[%s1791 + $0x58] sm:$0xe]
  %v2508 = vld [vmem:[%s1791 + $0x60] sm:$0xe]
  %v2509 = vld [vmem:[%s1791 + $0x68] sm:$0xe]
  %v2510 = vld [vmem:[%s1791 + $0x70] sm:$0xe]
  %v2511 = vld [vmem:[%s1791 + $0x78] sm:$0xe]
  %v2512 = vld [vmem:[%s1791 + $0x80] sm:$0xe]
  %v2513 = vld [vmem:[%s1791 + $0x88] sm:$0xe]
  %v2546 = vrot.slane %v2498, 5
  %v2547 = vrot.slane %v2546, 4
  %v2548 = vrot.slane %v2034, 5
  %v2549 = vsel %vm1517, %v2547, %v2548
  %v2550 = vrot.slane %v2499, 5
  %v2551 = vrot.slane %v2550, 4
  %v2552 = vrot.slane %v2036, 5
  %v2553 = vsel %vm1517, %v2551, %v2552
  %v2554 = vrot.slane %v2500, 5
  %v2555 = vrot.slane %v2554, 4
  %v2556 = vrot.slane %v2038, 5
  %v2557 = vsel %vm1517, %v2555, %v2556
  %v2558 = vrot.slane %v2501, 5
  %v2559 = vrot.slane %v2558, 4
  %v2560 = vrot.slane %v2040, 5
  %v2561 = vsel %vm1517, %v2559, %v2560
  %v2562 = vrot.slane %v2502, 5
  %v2563 = vrot.slane %v2562, 4
  %v2564 = vrot.slane %v2042, 5
  %v2565 = vsel %vm1517, %v2563, %v2564
  %v2566 = vrot.slane %v2503, 5
  %v2567 = vrot.slane %v2566, 4
  %v2568 = vrot.slane %v2044, 5
  %v2569 = vsel %vm1517, %v2567, %v2568
  %v2570 = vrot.slane %v2504, 5
  %v2571 = vrot.slane %v2570, 4
  %v2572 = vrot.slane %v2046, 5
  %v2573 = vsel %vm1517, %v2571, %v2572
  %v2574 = vrot.slane %v2505, 5
  %v2575 = vrot.slane %v2574, 4
  %v2576 = vrot.slane %v2048, 5
  %v2577 = vsel %vm1517, %v2575, %v2576
  %v2578 = vrot.slane %v2506, 5
  %v2579 = vrot.slane %v2578, 4
  %v2580 = vrot.slane %v2050, 5
  %v2581 = vsel %vm1517, %v2579, %v2580
  %v2582 = vrot.slane %v2507, 5
  %v2583 = vrot.slane %v2582, 4
  %v2584 = vrot.slane %v2052, 5
  %v2585 = vsel %vm1517, %v2583, %v2584
  %v2586 = vrot.slane %v2508, 5
  %v2587 = vrot.slane %v2586, 4
  %v2588 = vrot.slane %v2054, 5
  %v2589 = vsel %vm1517, %v2587, %v2588
  %v2590 = vrot.slane %v2509, 5
  %v2591 = vrot.slane %v2590, 4
  %v2592 = vrot.slane %v2056, 5
  %v2593 = vsel %vm1517, %v2591, %v2592
  %v2594 = vrot.slane %v2510, 5
  %v2595 = vrot.slane %v2594, 4
  %v2596 = vrot.slane %v2058, 5
  %v2597 = vsel %vm1517, %v2595, %v2596
  %v2598 = vrot.slane %v2511, 5
  %v2599 = vrot.slane %v2598, 4
  %v2600 = vrot.slane %v2060, 5
  %v2601 = vsel %vm1517, %v2599, %v2600
  %v2602 = vrot.slane %v2512, 5
  %v2603 = vrot.slane %v2602, 4
  %v2604 = vrot.slane %v2062, 5
  %v2605 = vsel %vm1517, %v2603, %v2604
  %v2606 = vrot.slane %v2513, 5
  %v2607 = vrot.slane %v2606, 4
  %v2608 = vrot.slane %v2064, 5
  %v2609 = vsel %vm1517, %v2607, %v2608
  %v2610 = vld [vmem:[%s3 + $0x140] sm:$0xf]
  %v2611 = vld [vmem:[%s3 + $0x144] sm:$0xf]
  %v2612 = vld [vmem:[%s3 + $0x148] sm:$0xf]
  %v2613 = vld [vmem:[%s3 + $0x14c] sm:$0xf]
  %v2614 = vld [vmem:[%s3 + $0x150] sm:$0xf]
  %v2615 = vld [vmem:[%s3 + $0x154] sm:$0xf]
  %v2616 = vld [vmem:[%s3 + $0x158] sm:$0xf]
  %v2617 = vld [vmem:[%s3 + $0x15c] sm:$0xf]
  %v2618 = vld [vmem:[%s3 + $0x160] sm:$0xf]
  %v2619 = vld [vmem:[%s3 + $0x164] sm:$0xf]
  %v2620 = vld [vmem:[%s3 + $0x168] sm:$0xf]
  %v2621 = vld [vmem:[%s3 + $0x16c] sm:$0xf]
  %v2622 = vld [vmem:[%s3 + $0x170] sm:$0xf]
  %v2623 = vld [vmem:[%s3 + $0x174] sm:$0xf]
  %v2624 = vld [vmem:[%s3 + $0x178] sm:$0xf]
  %v2625 = vld [vmem:[%s3 + $0x17c] sm:$0xf]
  %v2626 = vunpack.c.l.b16 %v2549
  %v2627 = vunpack.c.l.b16 %v2553
  %v2628 = vunpack.c.l.b16 %v2557
  %v2629 = vunpack.c.l.b16 %v2561
  %v2630 = vunpack.c.l.b16 %v2565
  %v2631 = vunpack.c.l.b16 %v2569
  %v2632 = vunpack.c.l.b16 %v2573
  %v2633 = vunpack.c.l.b16 %v2577
  %v2634 = vunpack.c.l.b16 %v2581
  %v2635 = vunpack.c.l.b16 %v2585
  %v2636 = vunpack.c.l.b16 %v2589
  %v2637 = vunpack.c.l.b16 %v2593
  %v2638 = vunpack.c.l.b16 %v2597
  %v2639 = vunpack.c.l.b16 %v2601
  %v2640 = vunpack.c.l.b16 %v2605
  %v2641 = vunpack.c.l.b16 %v2609
  %v2642 = vpack.c.b16 %v2627, %v2626
  %v2643 = vpack.c.b16 %v2629, %v2628
  %v2644 = vpack.c.b16 %v2631, %v2630
  %v2645 = vpack.c.b16 %v2633, %v2632
  %v2646 = vpack.c.b16 %v2635, %v2634
  %v2647 = vpack.c.b16 %v2637, %v2636
  %v2648 = vpack.c.b16 %v2639, %v2638
  %v2649 = vpack.c.b16 %v2641, %v2640
  %v2674 = vunpack.c.l.b16 %v2610
  %v2675 = vunpack.c.l.b16 %v2611
  %v2676 = vunpack.c.l.b16 %v2612
  %v2677 = vunpack.c.l.b16 %v2613
  %v2678 = vunpack.c.l.b16 %v2614
  %v2679 = vunpack.c.l.b16 %v2615
  %v2680 = vunpack.c.l.b16 %v2616
  %v2681 = vunpack.c.l.b16 %v2617
  %v2682 = vunpack.c.l.b16 %v2618
  %v2683 = vunpack.c.l.b16 %v2619
  %v2684 = vunpack.c.l.b16 %v2620
  %v2685 = vunpack.c.l.b16 %v2621
  %v2686 = vunpack.c.l.b16 %v2622
  %v2687 = vunpack.c.l.b16 %v2623
  %v2688 = vunpack.c.l.b16 %v2624
  %v2689 = vunpack.c.l.b16 %v2625
  %v2690 = vpack.c.b16 %v2675, %v2674
  %v2691 = vpack.c.b16 %v2677, %v2676
  %v2692 = vpack.c.b16 %v2679, %v2678
  %v2693 = vpack.c.b16 %v2681, %v2680
  %v2694 = vpack.c.b16 %v2683, %v2682
  %v2695 = vpack.c.b16 %v2685, %v2684
  %v2696 = vpack.c.b16 %v2687, %v2686
  %v2697 = vpack.c.b16 %v2689, %v2688
  %2706 = vmatprep.subr.bf16.mxu0 0
  %2707 = vmatpush1.bf16.msra.mxu0 %v2690
  %2708 = vmatprep.subr.bf16.mxu0 0
  %2709 = vmatpush1.bf16.msra.mxu0 %v2691
  %2710 = vmatprep.subr.bf16.mxu0 0
  %2711 = vmatpush1.bf16.msra.mxu0 %v2692
  %2712 = vmatprep.subr.bf16.mxu0 0
  %2713 = vmatpush1.bf16.msra.mxu0 %v2693
  %2714 = vmatprep.subr.bf16.mxu0 0
  %2715 = vmatpush1.bf16.msra.mxu0 %v2694
  %2716 = vmatprep.subr.bf16.mxu0 0
  %2717 = vmatpush1.bf16.msra.mxu0 %v2695
  %2718 = vmatprep.subr.bf16.mxu0 0
  %2719 = vmatpush1.bf16.msra.mxu0 %v2696
  %2720 = vmatprep.subr.bf16.mxu0 0
  %2721 = vmatpush1.bf16.msra.mxu0 %v2697
  %2722 = vmatprep.subr.bf16.mxu0 0
  %2723 = vmatpush1.bf16.msra.mxu0 0
  %2724 = vmatprep.subr.bf16.mxu0 0
  %2725 = vmatpush1.bf16.msra.mxu0 0
  %2726 = vmatprep.subr.bf16.mxu0 0
  %2727 = vmatpush1.bf16.msra.mxu0 0
  %2728 = vmatprep.subr.bf16.mxu0 0
  %2729 = vmatpush1.bf16.msra.mxu0 0
  %2730 = vmatprep.subr.bf16.mxu0 0
  %2731 = vmatpush1.bf16.msra.mxu0 0
  %2732 = vmatprep.subr.bf16.mxu0 0
  %2733 = vmatpush1.bf16.msra.mxu0 0
  %2734 = vmatprep.subr.bf16.mxu0 0
  %2735 = vmatpush1.bf16.msra.mxu0 0
  %2736 = vmatprep.subr.bf16.mxu0 0
  %2737 = vmatpush1.bf16.msra.mxu0 0
  %2738 = vmatprep.mubr.bf16.mxu0 0
  %2739 = vmatmul.mubr.bf16.gmra.mrb[0].mxu0 %v2642
  %v2740 = vpop.f32.mrb[0].mxu0
  %v2741 = vadd.f32 0.0, %v2740
  %v2742 = vpop.f32.mrb[0].mxu0
  %v2743 = vpop.f32.mrb[0].mxu0
  %v2744 = vadd.f32 0.0, %v2743
  %v2745 = vpop.f32.mrb[0].mxu0
  %2746 = vmatprep.mubr.bf16.mxu0 0
  %2747 = vmatmul.mubr.bf16.gmra.mrb[0].mxu0 %v2643
  %v2748 = vpop.f32.mrb[0].mxu0
  %v2749 = vadd.f32 0.0, %v2748
  %v2750 = vpop.f32.mrb[0].mxu0
  %v2751 = vpop.f32.mrb[0].mxu0
  %v2752 = vadd.f32 0.0, %v2751
  %v2753 = vpop.f32.mrb[0].mxu0
  %2754 = vmatprep.mubr.bf16.mxu0 0
  %2755 = vmatmul.mubr.bf16.gmra.mrb[0].mxu0 %v2644
  %v2756 = vpop.f32.mrb[0].mxu0
  %v2757 = vadd.f32 0.0, %v2756
  %v2758 = vpop.f32.mrb[0].mxu0
  %v2759 = vpop.f32.mrb[0].mxu0
  %v2760 = vadd.f32 0.0, %v2759
  %v2761 = vpop.f32.mrb[0].mxu0
  %2762 = vmatprep.mubr.bf16.mxu0 0
  %2763 = vmatmul.mubr.bf16.gmra.mrb[0].mxu0 %v2645
  %v2764 = vpop.f32.mrb[0].mxu0
  %v2765 = vadd.f32 0.0, %v2764
  %v2766 = vpop.f32.mrb[0].mxu0
  %v2767 = vpop.f32.mrb[0].mxu0
  %v2768 = vadd.f32 0.0, %v2767
  %v2769 = vpop.f32.mrb[0].mxu0
  %2770 = vmatprep.mubr.bf16.mxu0 0
  %2771 = vmatmul.mubr.bf16.gmra.mrb[0].mxu0 %v2646
  %v2772 = vpop.f32.mrb[0].mxu0
  %v2773 = vadd.f32 0.0, %v2772
  %v2774 = vpop.f32.mrb[0].mxu0
  %v2775 = vpop.f32.mrb[0].mxu0
  %v2776 = vadd.f32 0.0, %v2775
  %v2777 = vpop.f32.mrb[0].mxu0
  %2778 = vmatprep.mubr.bf16.mxu0 0
  %2779 = vmatmul.mubr.bf16.gmra.mrb[0].mxu0 %v2647
  %v2780 = vpop.f32.mrb[0].mxu0
  %v2781 = vadd.f32 0.0, %v2780
  %v2782 = vpop.f32.mrb[0].mxu0
  %v2783 = vpop.f32.mrb[0].mxu0
  %v2784 = vadd.f32 0.0, %v2783
  %v2785 = vpop.f32.mrb[0].mxu0
  %2786 = vmatprep.mubr.bf16.mxu0 0
  %2787 = vmatmul.mubr.bf16.gmra.mrb[0].mxu0 %v2648
  %v2788 = vpop.f32.mrb[0].mxu0
  %v2789 = vadd.f32 0.0, %v2788
  %v2790 = vpop.f32.mrb[0].mxu0
  %v2791 = vpop.f32.mrb[0].mxu0
  %v2792 = vadd.f32 0.0, %v2791
  %v2793 = vpop.f32.mrb[0].mxu0
  %2794 = vmatprep.mubr.bf16.mxu0 0
  %2795 = vmatmul.mubr.bf16.gmra.mrb[0].mxu0 %v2649
  %v2796 = vpop.f32.mrb[0].mxu0
  %v2797 = vadd.f32 0.0, %v2796
  %v2798 = vpop.f32.mrb[0].mxu0
  %v2799 = vpop.f32.mrb[0].mxu0
  %v2800 = vadd.f32 0.0, %v2799
  %v2801 = vpop.f32.mrb[0].mxu0
  %2802 = vdwg.mxu0
  %v2803 = vadd.f32 %v2482, %v2741
  %v2804 = vadd.f32 %v2483, %v2744
  %v2805 = vadd.f32 %v2484, %v2749
  %v2806 = vadd.f32 %v2485, %v2752
  %v2807 = vadd.f32 %v2486, %v2757
  %v2808 = vadd.f32 %v2487, %v2760
  %v2809 = vadd.f32 %v2488, %v2765
  %v2810 = vadd.f32 %v2489, %v2768
  %v2811 = vadd.f32 %v2490, %v2773
  %v2812 = vadd.f32 %v2491, %v2776
  %v2813 = vadd.f32 %v2492, %v2781
  %v2814 = vadd.f32 %v2493, %v2784
  %v2815 = vadd.f32 %v2494, %v2789
  %v2816 = vadd.f32 %v2495, %v2792
  %v2817 = vadd.f32 %v2496, %v2797
  %v2818 = vadd.f32 %v2497, %v2800
  %s2819 = scalar_lea.vmem [#allocation2], 16
  %v2820 = vld [vmem:[%s2819] sm:$0xf]
  %v2821 = vld [vmem:[%s2819 + $0x8] sm:$0xf]
  %v2822 = vld [vmem:[%s2819 + $0x10] sm:$0xf]
  %v2823 = vld [vmem:[%s2819 + $0x18] sm:$0xf]
  %v2824 = vld [vmem:[%s2819 + $0x20] sm:$0xf]
  %v2825 = vld [vmem:[%s2819 + $0x28] sm:$0xf]
  %v2826 = vld [vmem:[%s2819 + $0x30] sm:$0xf]
  %v2827 = vld [vmem:[%s2819 + $0x38] sm:$0xf]
  %v2828 = vld [vmem:[%s2819 + $0x50] sm:$0xf]
  %v2829 = vld [vmem:[%s2819 + $0x58] sm:$0xf]
  %v2830 = vld [vmem:[%s2819 + $0x60] sm:$0xf]
  %v2831 = vld [vmem:[%s2819 + $0x68] sm:$0xf]
  %v2832 = vld [vmem:[%s2819 + $0x70] sm:$0xf]
  %v2833 = vld [vmem:[%s2819 + $0x78] sm:$0xf]
  %v2834 = vld [vmem:[%s2819 + $0x80] sm:$0xf]
  %v2835 = vld [vmem:[%s2819 + $0x88] sm:$0xf]
  %v2836 = vld [vmem:[%s3 + $0x180] sm:$0xf]
  %v2837 = vld [vmem:[%s3 + $0x184] sm:$0xf]
  %v2838 = vld [vmem:[%s3 + $0x188] sm:$0xf]
  %v2839 = vld [vmem:[%s3 + $0x18c] sm:$0xf]
  %v2840 = vld [vmem:[%s3 + $0x190] sm:$0xf]
  %v2841 = vld [vmem:[%s3 + $0x194] sm:$0xf]
  %v2842 = vld [vmem:[%s3 + $0x198] sm:$0xf]
  %v2843 = vld [vmem:[%s3 + $0x19c] sm:$0xf]
  %v2844 = vld [vmem:[%s3 + $0x1a0] sm:$0xf]
  %v2845 = vld [vmem:[%s3 + $0x1a4] sm:$0xf]
  %v2846 = vld [vmem:[%s3 + $0x1a8] sm:$0xf]
  %v2847 = vld [vmem:[%s3 + $0x1ac] sm:$0xf]
  %v2848 = vld [vmem:[%s3 + $0x1b0] sm:$0xf]
  %v2849 = vld [vmem:[%s3 + $0x1b4] sm:$0xf]
  %v2850 = vld [vmem:[%s3 + $0x1b8] sm:$0xf]
  %v2851 = vld [vmem:[%s3 + $0x1bc] sm:$0xf]
  %v2868 = vunpack.c.l.b16 %v2820
  %v2869 = vunpack.c.l.b16 %v2821
  %v2870 = vunpack.c.l.b16 %v2822
  %v2871 = vunpack.c.l.b16 %v2823
  %v2872 = vunpack.c.l.b16 %v2824
  %v2873 = vunpack.c.l.b16 %v2825
  %v2874 = vunpack.c.l.b16 %v2826
  %v2875 = vunpack.c.l.b16 %v2827
  %v2876 = vunpack.c.l.b16 %v2828
  %v2877 = vunpack.c.l.b16 %v2829
  %v2878 = vunpack.c.l.b16 %v2830
  %v2879 = vunpack.c.l.b16 %v2831
  %v2880 = vunpack.c.l.b16 %v2832
  %v2881 = vunpack.c.l.b16 %v2833
  %v2882 = vunpack.c.l.b16 %v2834
  %v2883 = vunpack.c.l.b16 %v2835
  %v2884 = vpack.c.b16 %v2869, %v2868
  %v2885 = vpack.c.b16 %v2871, %v2870
  %v2886 = vpack.c.b16 %v2873, %v2872
  %v2887 = vpack.c.b16 %v2875, %v2874
  %v2888 = vpack.c.b16 %v2877, %v2876
  %v2889 = vpack.c.b16 %v2879, %v2878
  %v2890 = vpack.c.b16 %v2881, %v2880
  %v2891 = vpack.c.b16 %v2883, %v2882
  %v2916 = vunpack.c.l.b16 %v2836
  %v2917 = vunpack.c.l.b16 %v2837
  %v2918 = vunpack.c.l.b16 %v2838
  %v2919 = vunpack.c.l.b16 %v2839
  %v2920 = vunpack.c.l.b16 %v2840
  %v2921 = vunpack.c.l.b16 %v2841
  %v2922 = vunpack.c.l.b16 %v2842
  %v2923 = vunpack.c.l.b16 %v2843
  %v2924 = vunpack.c.l.b16 %v2844
  %v2925 = vunpack.c.l.b16 %v2845
  %v2926 = vunpack.c.l.b16 %v2846
  %v2927 = vunpack.c.l.b16 %v2847
  %v2928 = vunpack.c.l.b16 %v2848
  %v2929 = vunpack.c.l.b16 %v2849
  %v2930 = vunpack.c.l.b16 %v2850
  %v2931 = vunpack.c.l.b16 %v2851
  %v2932 = vpack.c.b16 %v2917, %v2916
  %v2933 = vpack.c.b16 %v2919, %v2918
  %v2934 = vpack.c.b16 %v2921, %v2920
  %v2935 = vpack.c.b16 %v2923, %v2922
  %v2936 = vpack.c.b16 %v2925, %v2924
  %v2937 = vpack.c.b16 %v2927, %v2926
  %v2938 = vpack.c.b16 %v2929, %v2928
  %v2939 = vpack.c.b16 %v2931, %v2930
  %2948 = vmatprep.subr.bf16.mxu0 0
  %2949 = vmatpush1.bf16.msra.mxu0 %v2932
  %2950 = vmatprep.subr.bf16.mxu0 0
  %2951 = vmatpush1.bf16.msra.mxu0 %v2933
  %2952 = vmatprep.subr.bf16.mxu0 0
  %2953 = vmatpush1.bf16.msra.mxu0 %v2934
  %2954 = vmatprep.subr.bf16.mxu0 0
  %2955 = vmatpush1.bf16.msra.mxu0 %v2935
  %2956 = vmatprep.subr.bf16.mxu0 0
  %2957 = vmatpush1.bf16.msra.mxu0 %v2936
  %2958 = vmatprep.subr.bf16.mxu0 0
  %2959 = vmatpush1.bf16.msra.mxu0 %v2937
  %2960 = vmatprep.subr.bf16.mxu0 0
  %2961 = vmatpush1.bf16.msra.mxu0 %v2938
  %2962 = vmatprep.subr.bf16.mxu0 0
  %2963 = vmatpush1.bf16.msra.mxu0 %v2939
  %2964 = vmatprep.subr.bf16.mxu0 0
  %2965 = vmatpush1.bf16.msra.mxu0 0
  %2966 = vmatprep.subr.bf16.mxu0 0
  %2967 = vmatpush1.bf16.msra.mxu0 0
  %2968 = vmatprep.subr.bf16.mxu0 0
  %2969 = vmatpush1.bf16.msra.mxu0 0
  %2970 = vmatprep.subr.bf16.mxu0 0
  %2971 = vmatpush1.bf16.msra.mxu0 0
  %2972 = vmatprep.subr.bf16.mxu0 0
  %2973 = vmatpush1.bf16.msra.mxu0 0
  %2974 = vmatprep.subr.bf16.mxu0 0
  %2975 = vmatpush1.bf16.msra.mxu0 0
  %2976 = vmatprep.subr.bf16.mxu0 0
  %2977 = vmatpush1.bf16.msra.mxu0 0
  %2978 = vmatprep.subr.bf16.mxu0 0
  %2979 = vmatpush1.bf16.msra.mxu0 0
  %2980 = vmatprep.mubr.bf16.mxu0 0
  %2981 = vmatmul.mubr.bf16.gmra.mrb[0].mxu0 %v2884
  %v2982 = vpop.f32.mrb[0].mxu0
  %v2983 = vadd.f32 0.0, %v2982
  %v2984 = vpop.f32.mrb[0].mxu0
  %v2985 = vpop.f32.mrb[0].mxu0
  %v2986 = vadd.f32 0.0, %v2985
  %v2987 = vpop.f32.mrb[0].mxu0
  %2988 = vmatprep.mubr.bf16.mxu0 0
  %2989 = vmatmul.mubr.bf16.gmra.mrb[0].mxu0 %v2885
  %v2990 = vpop.f32.mrb[0].mxu0
  %v2991 = vadd.f32 0.0, %v2990
  %v2992 = vpop.f32.mrb[0].mxu0
  %v2993 = vpop.f32.mrb[0].mxu0
  %v2994 = vadd.f32 0.0, %v2993
  %v2995 = vpop.f32.mrb[0].mxu0
  %2996 = vmatprep.mubr.bf16.mxu0 0
  %2997 = vmatmul.mubr.bf16.gmra.mrb[0].mxu0 %v2886
  %v2998 = vpop.f32.mrb[0].mxu0
  %v2999 = vadd.f32 0.0, %v2998
  %v3000 = vpop.f32.mrb[0].mxu0
  %v3001 = vpop.f32.mrb[0].mxu0
  %v3002 = vadd.f32 0.0, %v3001
  %v3003 = vpop.f32.mrb[0].mxu0
  %3004 = vmatprep.mubr.bf16.mxu0 0
  %3005 = vmatmul.mubr.bf16.gmra.mrb[0].mxu0 %v2887
  %v3006 = vpop.f32.mrb[0].mxu0
  %v3007 = vadd.f32 0.0, %v3006
  %v3008 = vpop.f32.mrb[0].mxu0
  %v3009 = vpop.f32.mrb[0].mxu0
  %v3010 = vadd.f32 0.0, %v3009
  %v3011 = vpop.f32.mrb[0].mxu0
  %3012 = vmatprep.mubr.bf16.mxu0 0
  %3013 = vmatmul.mubr.bf16.gmra.mrb[0].mxu0 %v2888
  %v3014 = vpop.f32.mrb[0].mxu0
  %v3015 = vadd.f32 0.0, %v3014
  %v3016 = vpop.f32.mrb[0].mxu0
  %v3017 = vpop.f32.mrb[0].mxu0
  %v3018 = vadd.f32 0.0, %v3017
  %v3019 = vpop.f32.mrb[0].mxu0
  %3020 = vmatprep.mubr.bf16.mxu0 0
  %3021 = vmatmul.mubr.bf16.gmra.mrb[0].mxu0 %v2889
  %v3022 = vpop.f32.mrb[0].mxu0
  %v3023 = vadd.f32 0.0, %v3022
  %v3024 = vpop.f32.mrb[0].mxu0
  %v3025 = vpop.f32.mrb[0].mxu0
  %v3026 = vadd.f32 0.0, %v3025
  %v3027 = vpop.f32.mrb[0].mxu0
  %3028 = vmatprep.mubr.bf16.mxu0 0
  %3029 = vmatmul.mubr.bf16.gmra.mrb[0].mxu0 %v2890
  %v3030 = vpop.f32.mrb[0].mxu0
  %v3031 = vadd.f32 0.0, %v3030
  %v3032 = vpop.f32.mrb[0].mxu0
  %v3033 = vpop.f32.mrb[0].mxu0
  %v3034 = vadd.f32 0.0, %v3033
  %v3035 = vpop.f32.mrb[0].mxu0
  %3036 = vmatprep.mubr.bf16.mxu0 0
  %3037 = vmatmul.mubr.bf16.gmra.mrb[0].mxu0 %v2891
  %v3038 = vpop.f32.mrb[0].mxu0
  %v3039 = vadd.f32 0.0, %v3038
  %v3040 = vpop.f32.mrb[0].mxu0
  %v3041 = vpop.f32.mrb[0].mxu0
  %v3042 = vadd.f32 0.0, %v3041
  %v3043 = vpop.f32.mrb[0].mxu0
  %3044 = vdwg.mxu0
  %v3045 = vadd.f32 %v2803, %v2983
  %v3046 = vadd.f32 %v2804, %v2986
  %v3047 = vadd.f32 %v2805, %v2991
  %v3048 = vadd.f32 %v2806, %v2994
  %v3049 = vadd.f32 %v2807, %v2999
  %v3050 = vadd.f32 %v2808, %v3002
  %v3051 = vadd.f32 %v2809, %v3007
  %v3052 = vadd.f32 %v2810, %v3010
  %v3053 = vadd.f32 %v2811, %v3015
  %v3054 = vadd.f32 %v2812, %v3018
  %v3055 = vadd.f32 %v2813, %v3023
  %v3056 = vadd.f32 %v2814, %v3026
  %v3057 = vadd.f32 %v2815, %v3031
  %v3058 = vadd.f32 %v2816, %v3034
  %v3059 = vadd.f32 %v2817, %v3039
  %v3060 = vadd.f32 %v2818, %v3042
  %v3061 = vld [vmem:[%s2819] sm:$0xf]
  %v3062 = vld [vmem:[%s2819 + $0x4] sm:$0x1]
  %v3063 = vld [vmem:[%s2819 + $0x8] sm:$0xf]
  %v3064 = vld [vmem:[%s2819 + $0xc] sm:$0x1]
  %v3065 = vld [vmem:[%s2819 + $0x10] sm:$0xf]
  %v3066 = vld [vmem:[%s2819 + $0x14] sm:$0x1]
  %v3067 = vld [vmem:[%s2819 + $0x18] sm:$0xf]
  %v3068 = vld [vmem:[%s2819 + $0x1c] sm:$0x1]
  %v3069 = vld [vmem:[%s2819 + $0x20] sm:$0xf]
  %v3070 = vld [vmem:[%s2819 + $0x24] sm:$0x1]
  %v3071 = vld [vmem:[%s2819 + $0x28] sm:$0xf]
  %v3072 = vld [vmem:[%s2819 + $0x2c] sm:$0x1]
  %v3073 = vld [vmem:[%s2819 + $0x30] sm:$0xf]
  %v3074 = vld [vmem:[%s2819 + $0x34] sm:$0x1]
  %v3075 = vld [vmem:[%s2819 + $0x38] sm:$0xf]
  %v3076 = vld [vmem:[%s2819 + $0x3c] sm:$0x1]
  %v3077 = vld [vmem:[%s2819 + $0x50] sm:$0xf]
  %v3078 = vld [vmem:[%s2819 + $0x54] sm:$0x1]
  %v3079 = vld [vmem:[%s2819 + $0x58] sm:$0xf]
  %v3080 = vld [vmem:[%s2819 + $0x5c] sm:$0x1]
  %v3081 = vld [vmem:[%s2819 + $0x60] sm:$0xf]
  %v3082 = vld [vmem:[%s2819 + $0x64] sm:$0x1]
  %v3083 = vld [vmem:[%s2819 + $0x68] sm:$0xf]
  %v3084 = vld [vmem:[%s2819 + $0x6c] sm:$0x1]
  %v3085 = vld [vmem:[%s2819 + $0x70] sm:$0xf]
  %v3086 = vld [vmem:[%s2819 + $0x74] sm:$0x1]
  %v3087 = vld [vmem:[%s2819 + $0x78] sm:$0xf]
  %v3088 = vld [vmem:[%s2819 + $0x7c] sm:$0x1]
  %v3089 = vld [vmem:[%s2819 + $0x80] sm:$0xf]
  %v3090 = vld [vmem:[%s2819 + $0x84] sm:$0x1]
  %v3091 = vld [vmem:[%s2819 + $0x88] sm:$0xf]
  %v3092 = vld [vmem:[%s2819 + $0x8c] sm:$0x1]
  %v3094 = vshrl.u32 %v3061, 16
  %v3096 = vrot.slane %v3094, 4
  %v3097 = vshll.u32 %v3061, 16
  %v3099 = vrot.slane %v3097, 5
  %v3100 = vor.u32 %v3096, %v3099
  %v3101 = vrot.slane %v3100, 4
  %v3103 = vshll.u32 %v3062, 16
  %v3105 = vrot.slane %v3103, 5
  %v3106 = vsel %vm856, %v3101, %v3105
  %v3108 = vshrl.u32 %v3063, 16
  %v3110 = vrot.slane %v3108, 4
  %v3111 = vshll.u32 %v3063, 16
  %v3113 = vrot.slane %v3111, 5
  %v3114 = vor.u32 %v3110, %v3113
  %v3115 = vrot.slane %v3114, 4
  %v3117 = vshll.u32 %v3064, 16
  %v3119 = vrot.slane %v3117, 5
  %v3120 = vsel %vm856, %v3115, %v3119
  %v3122 = vshrl.u32 %v3065, 16
  %v3124 = vrot.slane %v3122, 4
  %v3125 = vshll.u32 %v3065, 16
  %v3127 = vrot.slane %v3125, 5
  %v3128 = vor.u32 %v3124, %v3127
  %v3129 = vrot.slane %v3128, 4
  %v3131 = vshll.u32 %v3066, 16
  %v3133 = vrot.slane %v3131, 5
  %v3134 = vsel %vm856, %v3129, %v3133
  %v3136 = vshrl.u32 %v3067, 16
  %v3138 = vrot.slane %v3136, 4
  %v3139 = vshll.u32 %v3067, 16
  %v3141 = vrot.slane %v3139, 5
  %v3142 = vor.u32 %v3138, %v3141
  %v3143 = vrot.slane %v3142, 4
  %v3145 = vshll.u32 %v3068, 16
  %v3147 = vrot.slane %v3145, 5
  %v3148 = vsel %vm856, %v3143, %v3147
  %v3150 = vshrl.u32 %v3069, 16
  %v3152 = vrot.slane %v3150, 4
  %v3153 = vshll.u32 %v3069, 16
  %v3155 = vrot.slane %v3153, 5
  %v3156 = vor.u32 %v3152, %v3155
  %v3157 = vrot.slane %v3156, 4
  %v3159 = vshll.u32 %v3070, 16
  %v3161 = vrot.slane %v3159, 5
  %v3162 = vsel %vm856, %v3157, %v3161
  %v3164 = vshrl.u32 %v3071, 16
  %v3166 = vrot.slane %v3164, 4
  %v3167 = vshll.u32 %v3071, 16
  %v3169 = vrot.slane %v3167, 5
  %v3170 = vor.u32 %v3166, %v3169
  %v3171 = vrot.slane %v3170, 4
  %v3173 = vshll.u32 %v3072, 16
  %v3175 = vrot.slane %v3173, 5
  %v3176 = vsel %vm856, %v3171, %v3175
  %v3178 = vshrl.u32 %v3073, 16
  %v3180 = vrot.slane %v3178, 4
  %v3181 = vshll.u32 %v3073, 16
  %v3183 = vrot.slane %v3181, 5
  %v3184 = vor.u32 %v3180, %v3183
  %v3185 = vrot.slane %v3184, 4
  %v3187 = vshll.u32 %v3074, 16
  %v3189 = vrot.slane %v3187, 5
  %v3190 = vsel %vm856, %v3185, %v3189
  %v3192 = vshrl.u32 %v3075, 16
  %v3194 = vrot.slane %v3192, 4
  %v3195 = vshll.u32 %v3075, 16
  %v3197 = vrot.slane %v3195, 5
  %v3198 = vor.u32 %v3194, %v3197
  %v3199 = vrot.slane %v3198, 4
  %v3201 = vshll.u32 %v3076, 16
  %v3203 = vrot.slane %v3201, 5
  %v3204 = vsel %vm856, %v3199, %v3203
  %v3206 = vshrl.u32 %v3077, 16
  %v3208 = vrot.slane %v3206, 4
  %v3209 = vshll.u32 %v3077, 16
  %v3211 = vrot.slane %v3209, 5
  %v3212 = vor.u32 %v3208, %v3211
  %v3213 = vrot.slane %v3212, 4
  %v3215 = vshll.u32 %v3078, 16
  %v3217 = vrot.slane %v3215, 5
  %v3218 = vsel %vm856, %v3213, %v3217
  %v3220 = vshrl.u32 %v3079, 16
  %v3222 = vrot.slane %v3220, 4
  %v3223 = vshll.u32 %v3079, 16
  %v3225 = vrot.slane %v3223, 5
  %v3226 = vor.u32 %v3222, %v3225
  %v3227 = vrot.slane %v3226, 4
  %v3229 = vshll.u32 %v3080, 16
  %v3231 = vrot.slane %v3229, 5
  %v3232 = vsel %vm856, %v3227, %v3231
  %v3234 = vshrl.u32 %v3081, 16
  %v3236 = vrot.slane %v3234, 4
  %v3237 = vshll.u32 %v3081, 16
  %v3239 = vrot.slane %v3237, 5
  %v3240 = vor.u32 %v3236, %v3239
  %v3241 = vrot.slane %v3240, 4
  %v3243 = vshll.u32 %v3082, 16
  %v3245 = vrot.slane %v3243, 5
  %v3246 = vsel %vm856, %v3241, %v3245
  %v3248 = vshrl.u32 %v3083, 16
  %v3250 = vrot.slane %v3248, 4
  %v3251 = vshll.u32 %v3083, 16
  %v3253 = vrot.slane %v3251, 5
  %v3254 = vor.u32 %v3250, %v3253
  %v3255 = vrot.slane %v3254, 4
  %v3257 = vshll.u32 %v3084, 16
  %v3259 = vrot.slane %v3257, 5
  %v3260 = vsel %vm856, %v3255, %v3259
  %v3262 = vshrl.u32 %v3085, 16
  %v3264 = vrot.slane %v3262, 4
  %v3265 = vshll.u32 %v3085, 16
  %v3267 = vrot.slane %v3265, 5
  %v3268 = vor.u32 %v3264, %v3267
  %v3269 = vrot.slane %v3268, 4
  %v3271 = vshll.u32 %v3086, 16
  %v3273 = vrot.slane %v3271, 5
  %v3274 = vsel %vm856, %v3269, %v3273
  %v3276 = vshrl.u32 %v3087, 16
  %v3278 = vrot.slane %v3276, 4
  %v3279 = vshll.u32 %v3087, 16
  %v3281 = vrot.slane %v3279, 5
  %v3282 = vor.u32 %v3278, %v3281
  %v3283 = vrot.slane %v3282, 4
  %v3285 = vshll.u32 %v3088, 16
  %v3287 = vrot.slane %v3285, 5
  %v3288 = vsel %vm856, %v3283, %v3287
  %v3290 = vshrl.u32 %v3089, 16
  %v3292 = vrot.slane %v3290, 4
  %v3293 = vshll.u32 %v3089, 16
  %v3295 = vrot.slane %v3293, 5
  %v3296 = vor.u32 %v3292, %v3295
  %v3297 = vrot.slane %v3296, 4
  %v3299 = vshll.u32 %v3090, 16
  %v3301 = vrot.slane %v3299, 5
  %v3302 = vsel %vm856, %v3297, %v3301
  %v3304 = vshrl.u32 %v3091, 16
  %v3306 = vrot.slane %v3304, 4
  %v3307 = vshll.u32 %v3091, 16
  %v3309 = vrot.slane %v3307, 5
  %v3310 = vor.u32 %v3306, %v3309
  %v3311 = vrot.slane %v3310, 4
  %v3313 = vshll.u32 %v3092, 16
  %v3315 = vrot.slane %v3313, 5
  %v3316 = vsel %vm856, %v3311, %v3315
  %v3317 = vld [vmem:[%s3 + $0x1c0] sm:$0xf]
  %v3318 = vld [vmem:[%s3 + $0x1c4] sm:$0xf]
  %v3319 = vld [vmem:[%s3 + $0x1c8] sm:$0xf]
  %v3320 = vld [vmem:[%s3 + $0x1cc] sm:$0xf]
  %v3321 = vld [vmem:[%s3 + $0x1d0] sm:$0xf]
  %v3322 = vld [vmem:[%s3 + $0x1d4] sm:$0xf]
  %v3323 = vld [vmem:[%s3 + $0x1d8] sm:$0xf]
  %v3324 = vld [vmem:[%s3 + $0x1dc] sm:$0xf]
  %v3325 = vld [vmem:[%s3 + $0x1e0] sm:$0xf]
  %v3326 = vld [vmem:[%s3 + $0x1e4] sm:$0xf]
  %v3327 = vld [vmem:[%s3 + $0x1e8] sm:$0xf]
  %v3328 = vld [vmem:[%s3 + $0x1ec] sm:$0xf]
  %v3329 = vld [vmem:[%s3 + $0x1f0] sm:$0xf]
  %v3330 = vld [vmem:[%s3 + $0x1f4] sm:$0xf]
  %v3331 = vld [vmem:[%s3 + $0x1f8] sm:$0xf]
  %v3332 = vld [vmem:[%s3 + $0x1fc] sm:$0xf]
  %v3333 = vunpack.c.l.b16 %v3106
  %v3334 = vunpack.c.l.b16 %v3120
  %v3335 = vunpack.c.l.b16 %v3134
  %v3336 = vunpack.c.l.b16 %v3148
  %v3337 = vunpack.c.l.b16 %v3162
  %v3338 = vunpack.c.l.b16 %v3176
  %v3339 = vunpack.c.l.b16 %v3190
  %v3340 = vunpack.c.l.b16 %v3204
  %v3341 = vunpack.c.l.b16 %v3218
  %v3342 = vunpack.c.l.b16 %v3232
  %v3343 = vunpack.c.l.b16 %v3246
  %v3344 = vunpack.c.l.b16 %v3260
  %v3345 = vunpack.c.l.b16 %v3274
  %v3346 = vunpack.c.l.b16 %v3288
  %v3347 = vunpack.c.l.b16 %v3302
  %v3348 = vunpack.c.l.b16 %v3316
  %v3349 = vpack.c.b16 %v3334, %v3333
  %v3350 = vpack.c.b16 %v3336, %v3335
  %v3351 = vpack.c.b16 %v3338, %v3337
  %v3352 = vpack.c.b16 %v3340, %v3339
  %v3353 = vpack.c.b16 %v3342, %v3341
  %v3354 = vpack.c.b16 %v3344, %v3343
  %v3355 = vpack.c.b16 %v3346, %v3345
  %v3356 = vpack.c.b16 %v3348, %v3347
  %v3381 = vunpack.c.l.b16 %v3317
  %v3382 = vunpack.c.l.b16 %v3318
  %v3383 = vunpack.c.l.b16 %v3319
  %v3384 = vunpack.c.l.b16 %v3320
  %v3385 = vunpack.c.l.b16 %v3321
  %v3386 = vunpack.c.l.b16 %v3322
  %v3387 = vunpack.c.l.b16 %v3323
  %v3388 = vunpack.c.l.b16 %v3324
  %v3389 = vunpack.c.l.b16 %v3325
  %v3390 = vunpack.c.l.b16 %v3326
  %v3391 = vunpack.c.l.b16 %v3327
  %v3392 = vunpack.c.l.b16 %v3328
  %v3393 = vunpack.c.l.b16 %v3329
  %v3394 = vunpack.c.l.b16 %v3330
  %v3395 = vunpack.c.l.b16 %v3331
  %v3396 = vunpack.c.l.b16 %v3332
  %v3397 = vpack.c.b16 %v3382, %v3381
  %v3398 = vpack.c.b16 %v3384, %v3383
  %v3399 = vpack.c.b16 %v3386, %v3385
  %v3400 = vpack.c.b16 %v3388, %v3387
  %v3401 = vpack.c.b16 %v3390, %v3389
  %v3402 = vpack.c.b16 %v3392, %v3391
  %v3403 = vpack.c.b16 %v3394, %v3393
  %v3404 = vpack.c.b16 %v3396, %v3395
  %3413 = vmatprep.subr.bf16.mxu0 0
  %3414 = vmatpush1.bf16.msra.mxu0 %v3397
  %3415 = vmatprep.subr.bf16.mxu0 0
  %3416 = vmatpush1.bf16.msra.mxu0 %v3398
  %3417 = vmatprep.subr.bf16.mxu0 0
  %3418 = vmatpush1.bf16.msra.mxu0 %v3399
  %3419 = vmatprep.subr.bf16.mxu0 0
  %3420 = vmatpush1.bf16.msra.mxu0 %v3400
  %3421 = vmatprep.subr.bf16.mxu0 0
  %3422 = vmatpush1.bf16.msra.mxu0 %v3401
  %3423 = vmatprep.subr.bf16.mxu0 0
  %3424 = vmatpush1.bf16.msra.mxu0 %v3402
  %3425 = vmatprep.subr.bf16.mxu0 0
  %3426 = vmatpush1.bf16.msra.mxu0 %v3403
  %3427 = vmatprep.subr.bf16.mxu0 0
  %3428 = vmatpush1.bf16.msra.mxu0 %v3404
  %3429 = vmatprep.subr.bf16.mxu0 0
  %3430 = vmatpush1.bf16.msra.mxu0 0
  %3431 = vmatprep.subr.bf16.mxu0 0
  %3432 = vmatpush1.bf16.msra.mxu0 0
  %3433 = vmatprep.subr.bf16.mxu0 0
  %3434 = vmatpush1.bf16.msra.mxu0 0
  %3435 = vmatprep.subr.bf16.mxu0 0
  %3436 = vmatpush1.bf16.msra.mxu0 0
  %3437 = vmatprep.subr.bf16.mxu0 0
  %3438 = vmatpush1.bf16.msra.mxu0 0
  %3439 = vmatprep.subr.bf16.mxu0 0
  %3440 = vmatpush1.bf16.msra.mxu0 0
  %3441 = vmatprep.subr.bf16.mxu0 0
  %3442 = vmatpush1.bf16.msra.mxu0 0
  %3443 = vmatprep.subr.bf16.mxu0 0
  %3444 = vmatpush1.bf16.msra.mxu0 0
  %3445 = vmatprep.mubr.bf16.mxu0 0
  %3446 = vmatmul.mubr.bf16.gmra.mrb[0].mxu0 %v3349
  %v3447 = vpop.f32.mrb[0].mxu0
  %v3448 = vadd.f32 0.0, %v3447
  %v3449 = vpop.f32.mrb[0].mxu0
  %v3450 = vpop.f32.mrb[0].mxu0
  %v3451 = vadd.f32 0.0, %v3450
  %v3452 = vpop.f32.mrb[0].mxu0
  %3453 = vmatprep.mubr.bf16.mxu0 0
  %3454 = vmatmul.mubr.bf16.gmra.mrb[0].mxu0 %v3350
  %v3455 = vpop.f32.mrb[0].mxu0
  %v3456 = vadd.f32 0.0, %v3455
  %v3457 = vpop.f32.mrb[0].mxu0
  %v3458 = vpop.f32.mrb[0].mxu0
  %v3459 = vadd.f32 0.0, %v3458
  %v3460 = vpop.f32.mrb[0].mxu0
  %3461 = vmatprep.mubr.bf16.mxu0 0
  %3462 = vmatmul.mubr.bf16.gmra.mrb[0].mxu0 %v3351
  %v3463 = vpop.f32.mrb[0].mxu0
  %v3464 = vadd.f32 0.0, %v3463
  %v3465 = vpop.f32.mrb[0].mxu0
  %v3466 = vpop.f32.mrb[0].mxu0
  %v3467 = vadd.f32 0.0, %v3466
  %v3468 = vpop.f32.mrb[0].mxu0
  %3469 = vmatprep.mubr.bf16.mxu0 0
  %3470 = vmatmul.mubr.bf16.gmra.mrb[0].mxu0 %v3352
  %v3471 = vpop.f32.mrb[0].mxu0
  %v3472 = vadd.f32 0.0, %v3471
  %v3473 = vpop.f32.mrb[0].mxu0
  %v3474 = vpop.f32.mrb[0].mxu0
  %v3475 = vadd.f32 0.0, %v3474
  %v3476 = vpop.f32.mrb[0].mxu0
  %3477 = vmatprep.mubr.bf16.mxu0 0
  %3478 = vmatmul.mubr.bf16.gmra.mrb[0].mxu0 %v3353
  %v3479 = vpop.f32.mrb[0].mxu0
  %v3480 = vadd.f32 0.0, %v3479
  %v3481 = vpop.f32.mrb[0].mxu0
  %v3482 = vpop.f32.mrb[0].mxu0
  %v3483 = vadd.f32 0.0, %v3482
  %v3484 = vpop.f32.mrb[0].mxu0
  %3485 = vmatprep.mubr.bf16.mxu0 0
  %3486 = vmatmul.mubr.bf16.gmra.mrb[0].mxu0 %v3354
  %v3487 = vpop.f32.mrb[0].mxu0
  %v3488 = vadd.f32 0.0, %v3487
  %v3489 = vpop.f32.mrb[0].mxu0
  %v3490 = vpop.f32.mrb[0].mxu0
  %v3491 = vadd.f32 0.0, %v3490
  %v3492 = vpop.f32.mrb[0].mxu0
  %3493 = vmatprep.mubr.bf16.mxu0 0
  %3494 = vmatmul.mubr.bf16.gmra.mrb[0].mxu0 %v3355
  %v3495 = vpop.f32.mrb[0].mxu0
  %v3496 = vadd.f32 0.0, %v3495
  %v3497 = vpop.f32.mrb[0].mxu0
  %v3498 = vpop.f32.mrb[0].mxu0
  %v3499 = vadd.f32 0.0, %v3498
  %v3500 = vpop.f32.mrb[0].mxu0
  %3501 = vmatprep.mubr.bf16.mxu0 0
  %3502 = vmatmul.mubr.bf16.gmra.mrb[0].mxu0 %v3356
  %v3503 = vpop.f32.mrb[0].mxu0
  %v3504 = vadd.f32 0.0, %v3503
  %v3505 = vpop.f32.mrb[0].mxu0
  %v3506 = vpop.f32.mrb[0].mxu0
  %v3507 = vadd.f32 0.0, %v3506
  %v3508 = vpop.f32.mrb[0].mxu0
  %3509 = vdwg.mxu0
  %v3510 = vadd.f32 %v3045, %v3448
  %v3511 = vadd.f32 %v3046, %v3451
  %v3512 = vadd.f32 %v3047, %v3456
  %v3513 = vadd.f32 %v3048, %v3459
  %v3514 = vadd.f32 %v3049, %v3464
  %v3515 = vadd.f32 %v3050, %v3467
  %v3516 = vadd.f32 %v3051, %v3472
  %v3517 = vadd.f32 %v3052, %v3475
  %v3518 = vadd.f32 %v3053, %v3480
  %v3519 = vadd.f32 %v3054, %v3483
  %v3520 = vadd.f32 %v3055, %v3488
  %v3521 = vadd.f32 %v3056, %v3491
  %v3522 = vadd.f32 %v3057, %v3496
  %v3523 = vadd.f32 %v3058, %v3499
  %v3524 = vadd.f32 %v3059, %v3504
  %v3525 = vadd.f32 %v3060, %v3507
  %v3526 = vld [vmem:[%s2819] sm:$0xe]
  %v3527 = vld [vmem:[%s2819 + $0x8] sm:$0xe]
  %v3528 = vld [vmem:[%s2819 + $0x10] sm:$0xe]
  %v3529 = vld [vmem:[%s2819 + $0x18] sm:$0xe]
  %v3530 = vld [vmem:[%s2819 + $0x20] sm:$0xe]
  %v3531 = vld [vmem:[%s2819 + $0x28] sm:$0xe]
  %v3532 = vld [vmem:[%s2819 + $0x30] sm:$0xe]
  %v3533 = vld [vmem:[%s2819 + $0x38] sm:$0xe]
  %v3534 = vld [vmem:[%s2819 + $0x50] sm:$0xe]
  %v3535 = vld [vmem:[%s2819 + $0x58] sm:$0xe]
  %v3536 = vld [vmem:[%s2819 + $0x60] sm:$0xe]
  %v3537 = vld [vmem:[%s2819 + $0x68] sm:$0xe]
  %v3538 = vld [vmem:[%s2819 + $0x70] sm:$0xe]
  %v3539 = vld [vmem:[%s2819 + $0x78] sm:$0xe]
  %v3540 = vld [vmem:[%s2819 + $0x80] sm:$0xe]
  %v3541 = vld [vmem:[%s2819 + $0x88] sm:$0xe]
  %v3574 = vrot.slane %v3526, 5
  %v3575 = vrot.slane %v3574, 4
  %v3576 = vrot.slane %v3062, 5
  %v3577 = vsel %vm1517, %v3575, %v3576
  %v3578 = vrot.slane %v3527, 5
  %v3579 = vrot.slane %v3578, 4
  %v3580 = vrot.slane %v3064, 5
  %v3581 = vsel %vm1517, %v3579, %v3580
  %v3582 = vrot.slane %v3528, 5
  %v3583 = vrot.slane %v3582, 4
  %v3584 = vrot.slane %v3066, 5
  %v3585 = vsel %vm1517, %v3583, %v3584
  %v3586 = vrot.slane %v3529, 5
  %v3587 = vrot.slane %v3586, 4
  %v3588 = vrot.slane %v3068, 5
  %v3589 = vsel %vm1517, %v3587, %v3588
  %v3590 = vrot.slane %v3530, 5
  %v3591 = vrot.slane %v3590, 4
  %v3592 = vrot.slane %v3070, 5
  %v3593 = vsel %vm1517, %v3591, %v3592
  %v3594 = vrot.slane %v3531, 5
  %v3595 = vrot.slane %v3594, 4
  %v3596 = vrot.slane %v3072, 5
  %v3597 = vsel %vm1517, %v3595, %v3596
  %v3598 = vrot.slane %v3532, 5
  %v3599 = vrot.slane %v3598, 4
  %v3600 = vrot.slane %v3074, 5
  %v3601 = vsel %vm1517, %v3599, %v3600
  %v3602 = vrot.slane %v3533, 5
  %v3603 = vrot.slane %v3602, 4
  %v3604 = vrot.slane %v3076, 5
  %v3605 = vsel %vm1517, %v3603, %v3604
  %v3606 = vrot.slane %v3534, 5
  %v3607 = vrot.slane %v3606, 4
  %v3608 = vrot.slane %v3078, 5
  %v3609 = vsel %vm1517, %v3607, %v3608
  %v3610 = vrot.slane %v3535, 5
  %v3611 = vrot.slane %v3610, 4
  %v3612 = vrot.slane %v3080, 5
  %v3613 = vsel %vm1517, %v3611, %v3612
  %v3614 = vrot.slane %v3536, 5
  %v3615 = vrot.slane %v3614, 4
  %v3616 = vrot.slane %v3082, 5
  %v3617 = vsel %vm1517, %v3615, %v3616
  %v3618 = vrot.slane %v3537, 5
  %v3619 = vrot.slane %v3618, 4
  %v3620 = vrot.slane %v3084, 5
  %v3621 = vsel %vm1517, %v3619, %v3620
  %v3622 = vrot.slane %v3538, 5
  %v3623 = vrot.slane %v3622, 4
  %v3624 = vrot.slane %v3086, 5
  %v3625 = vsel %vm1517, %v3623, %v3624
  %v3626 = vrot.slane %v3539, 5
  %v3627 = vrot.slane %v3626, 4
  %v3628 = vrot.slane %v3088, 5
  %v3629 = vsel %vm1517, %v3627, %v3628
  %v3630 = vrot.slane %v3540, 5
  %v3631 = vrot.slane %v3630, 4
  %v3632 = vrot.slane %v3090, 5
  %v3633 = vsel %vm1517, %v3631, %v3632
  %v3634 = vrot.slane %v3541, 5
  %v3635 = vrot.slane %v3634, 4
  %v3636 = vrot.slane %v3092, 5
  %v3637 = vsel %vm1517, %v3635, %v3636
  %v3638 = vld [vmem:[%s3 + $0x200] sm:$0xf]
  %v3639 = vld [vmem:[%s3 + $0x204] sm:$0xf]
  %v3640 = vld [vmem:[%s3 + $0x208] sm:$0xf]
  %v3641 = vld [vmem:[%s3 + $0x20c] sm:$0xf]
  %v3642 = vld [vmem:[%s3 + $0x210] sm:$0xf]
  %v3643 = vld [vmem:[%s3 + $0x214] sm:$0xf]
  %v3644 = vld [vmem:[%s3 + $0x218] sm:$0xf]
  %v3645 = vld [vmem:[%s3 + $0x21c] sm:$0xf]
  %v3646 = vld [vmem:[%s3 + $0x220] sm:$0xf]
  %v3647 = vld [vmem:[%s3 + $0x224] sm:$0xf]
  %v3648 = vld [vmem:[%s3 + $0x228] sm:$0xf]
  %v3649 = vld [vmem:[%s3 + $0x22c] sm:$0xf]
  %v3650 = vld [vmem:[%s3 + $0x230] sm:$0xf]
  %v3651 = vld [vmem:[%s3 + $0x234] sm:$0xf]
  %v3652 = vld [vmem:[%s3 + $0x238] sm:$0xf]
  %v3653 = vld [vmem:[%s3 + $0x23c] sm:$0xf]
  %v3654 = vunpack.c.l.b16 %v3577
  %v3655 = vunpack.c.l.b16 %v3581
  %v3656 = vunpack.c.l.b16 %v3585
  %v3657 = vunpack.c.l.b16 %v3589
  %v3658 = vunpack.c.l.b16 %v3593
  %v3659 = vunpack.c.l.b16 %v3597
  %v3660 = vunpack.c.l.b16 %v3601
  %v3661 = vunpack.c.l.b16 %v3605
  %v3662 = vunpack.c.l.b16 %v3609
  %v3663 = vunpack.c.l.b16 %v3613
  %v3664 = vunpack.c.l.b16 %v3617
  %v3665 = vunpack.c.l.b16 %v3621
  %v3666 = vunpack.c.l.b16 %v3625
  %v3667 = vunpack.c.l.b16 %v3629
  %v3668 = vunpack.c.l.b16 %v3633
  %v3669 = vunpack.c.l.b16 %v3637
  %v3670 = vpack.c.b16 %v3655, %v3654
  %v3671 = vpack.c.b16 %v3657, %v3656
  %v3672 = vpack.c.b16 %v3659, %v3658
  %v3673 = vpack.c.b16 %v3661, %v3660
  %v3674 = vpack.c.b16 %v3663, %v3662
  %v3675 = vpack.c.b16 %v3665, %v3664
  %v3676 = vpack.c.b16 %v3667, %v3666
  %v3677 = vpack.c.b16 %v3669, %v3668
  %v3702 = vunpack.c.l.b16 %v3638
  %v3703 = vunpack.c.l.b16 %v3639
  %v3704 = vunpack.c.l.b16 %v3640
  %v3705 = vunpack.c.l.b16 %v3641
  %v3706 = vunpack.c.l.b16 %v3642
  %v3707 = vunpack.c.l.b16 %v3643
  %v3708 = vunpack.c.l.b16 %v3644
  %v3709 = vunpack.c.l.b16 %v3645
  %v3710 = vunpack.c.l.b16 %v3646
  %v3711 = vunpack.c.l.b16 %v3647
  %v3712 = vunpack.c.l.b16 %v3648
  %v3713 = vunpack.c.l.b16 %v3649
  %v3714 = vunpack.c.l.b16 %v3650
  %v3715 = vunpack.c.l.b16 %v3651
  %v3716 = vunpack.c.l.b16 %v3652
  %v3717 = vunpack.c.l.b16 %v3653
  %v3718 = vpack.c.b16 %v3703, %v3702
  %v3719 = vpack.c.b16 %v3705, %v3704
  %v3720 = vpack.c.b16 %v3707, %v3706
  %v3721 = vpack.c.b16 %v3709, %v3708
  %v3722 = vpack.c.b16 %v3711, %v3710
  %v3723 = vpack.c.b16 %v3713, %v3712
  %v3724 = vpack.c.b16 %v3715, %v3714
  %v3725 = vpack.c.b16 %v3717, %v3716
  %3734 = vmatprep.subr.bf16.mxu0 0
  %3735 = vmatpush1.bf16.msra.mxu0 %v3718
  %3736 = vmatprep.subr.bf16.mxu0 0
  %3737 = vmatpush1.bf16.msra.mxu0 %v3719
  %3738 = vmatprep.subr.bf16.mxu0 0
  %3739 = vmatpush1.bf16.msra.mxu0 %v3720
  %3740 = vmatprep.subr.bf16.mxu0 0
  %3741 = vmatpush1.bf16.msra.mxu0 %v3721
  %3742 = vmatprep.subr.bf16.mxu0 0
  %3743 = vmatpush1.bf16.msra.mxu0 %v3722
  %3744 = vmatprep.subr.bf16.mxu0 0
  %3745 = vmatpush1.bf16.msra.mxu0 %v3723
  %3746 = vmatprep.subr.bf16.mxu0 0
  %3747 = vmatpush1.bf16.msra.mxu0 %v3724
  %3748 = vmatprep.subr.bf16.mxu0 0
  %3749 = vmatpush1.bf16.msra.mxu0 %v3725
  %3750 = vmatprep.subr.bf16.mxu0 0
  %3751 = vmatpush1.bf16.msra.mxu0 0
  %3752 = vmatprep.subr.bf16.mxu0 0
  %3753 = vmatpush1.bf16.msra.mxu0 0
  %3754 = vmatprep.subr.bf16.mxu0 0
  %3755 = vmatpush1.bf16.msra.mxu0 0
  %3756 = vmatprep.subr.bf16.mxu0 0
  %3757 = vmatpush1.bf16.msra.mxu0 0
  %3758 = vmatprep.subr.bf16.mxu0 0
  %3759 = vmatpush1.bf16.msra.mxu0 0
  %3760 = vmatprep.subr.bf16.mxu0 0
  %3761 = vmatpush1.bf16.msra.mxu0 0
  %3762 = vmatprep.subr.bf16.mxu0 0
  %3763 = vmatpush1.bf16.msra.mxu0 0
  %3764 = vmatprep.subr.bf16.mxu0 0
  %3765 = vmatpush1.bf16.msra.mxu0 0
  %3766 = vmatprep.mubr.bf16.mxu0 0
  %3767 = vmatmul.mubr.bf16.gmra.mrb[0].mxu0 %v3670
  %v3768 = vpop.f32.mrb[0].mxu0
  %v3769 = vadd.f32 0.0, %v3768
  %v3770 = vpop.f32.mrb[0].mxu0
  %v3771 = vpop.f32.mrb[0].mxu0
  %v3772 = vadd.f32 0.0, %v3771
  %v3773 = vpop.f32.mrb[0].mxu0
  %3774 = vmatprep.mubr.bf16.mxu0 0
  %3775 = vmatmul.mubr.bf16.gmra.mrb[0].mxu0 %v3671
  %v3776 = vpop.f32.mrb[0].mxu0
  %v3777 = vadd.f32 0.0, %v3776
  %v3778 = vpop.f32.mrb[0].mxu0
  %v3779 = vpop.f32.mrb[0].mxu0
  %v3780 = vadd.f32 0.0, %v3779
  %v3781 = vpop.f32.mrb[0].mxu0
  %3782 = vmatprep.mubr.bf16.mxu0 0
  %3783 = vmatmul.mubr.bf16.gmra.mrb[0].mxu0 %v3672
  %v3784 = vpop.f32.mrb[0].mxu0
  %v3785 = vadd.f32 0.0, %v3784
  %v3786 = vpop.f32.mrb[0].mxu0
  %v3787 = vpop.f32.mrb[0].mxu0
  %v3788 = vadd.f32 0.0, %v3787
  %v3789 = vpop.f32.mrb[0].mxu0
  %3790 = vmatprep.mubr.bf16.mxu0 0
  %3791 = vmatmul.mubr.bf16.gmra.mrb[0].mxu0 %v3673
  %v3792 = vpop.f32.mrb[0].mxu0
  %v3793 = vadd.f32 0.0, %v3792
  %v3794 = vpop.f32.mrb[0].mxu0
  %v3795 = vpop.f32.mrb[0].mxu0
  %v3796 = vadd.f32 0.0, %v3795
  %v3797 = vpop.f32.mrb[0].mxu0
  %3798 = vmatprep.mubr.bf16.mxu0 0
  %3799 = vmatmul.mubr.bf16.gmra.mrb[0].mxu0 %v3674
  %v3800 = vpop.f32.mrb[0].mxu0
  %v3801 = vadd.f32 0.0, %v3800
  %v3802 = vpop.f32.mrb[0].mxu0
  %v3803 = vpop.f32.mrb[0].mxu0
  %v3804 = vadd.f32 0.0, %v3803
  %v3805 = vpop.f32.mrb[0].mxu0
  %3806 = vmatprep.mubr.bf16.mxu0 0
  %3807 = vmatmul.mubr.bf16.gmra.mrb[0].mxu0 %v3675
  %v3808 = vpop.f32.mrb[0].mxu0
  %v3809 = vadd.f32 0.0, %v3808
  %v3810 = vpop.f32.mrb[0].mxu0
  %v3811 = vpop.f32.mrb[0].mxu0
  %v3812 = vadd.f32 0.0, %v3811
  %v3813 = vpop.f32.mrb[0].mxu0
  %3814 = vmatprep.mubr.bf16.mxu0 0
  %3815 = vmatmul.mubr.bf16.gmra.mrb[0].mxu0 %v3676
  %v3816 = vpop.f32.mrb[0].mxu0
  %v3817 = vadd.f32 0.0, %v3816
  %v3818 = vpop.f32.mrb[0].mxu0
  %v3819 = vpop.f32.mrb[0].mxu0
  %v3820 = vadd.f32 0.0, %v3819
  %v3821 = vpop.f32.mrb[0].mxu0
  %3822 = vmatprep.mubr.bf16.mxu0 0
  %3823 = vmatmul.mubr.bf16.gmra.mrb[0].mxu0 %v3677
  %v3824 = vpop.f32.mrb[0].mxu0
  %v3825 = vadd.f32 0.0, %v3824
  %v3826 = vpop.f32.mrb[0].mxu0
  %v3827 = vpop.f32.mrb[0].mxu0
  %v3828 = vadd.f32 0.0, %v3827
  %v3829 = vpop.f32.mrb[0].mxu0
  %3830 = vdwg.mxu0
  %v3831 = vadd.f32 %v3510, %v3769
  %v3832 = vadd.f32 %v3511, %v3772
  %v3833 = vadd.f32 %v3512, %v3777
  %v3834 = vadd.f32 %v3513, %v3780
  %v3835 = vadd.f32 %v3514, %v3785
  %v3836 = vadd.f32 %v3515, %v3788
  %v3837 = vadd.f32 %v3516, %v3793
  %v3838 = vadd.f32 %v3517, %v3796
  %v3839 = vadd.f32 %v3518, %v3801
  %v3840 = vadd.f32 %v3519, %v3804
  %v3841 = vadd.f32 %v3520, %v3809
  %v3842 = vadd.f32 %v3521, %v3812
  %v3843 = vadd.f32 %v3522, %v3817
  %v3844 = vadd.f32 %v3523, %v3820
  %v3845 = vadd.f32 %v3524, %v3825
  %v3846 = vadd.f32 %v3525, %v3828
  %v3847 = vld [vmem:[%s4] sm:$0x1]
  %v3849 = vlaneseq
  %v3850 = vshrl.u32 %v3849, 7
  %v3851 = vsub.s32 0, %v3850
  %v3852 = vrot.slane %v3847, %v3851
  %v3854 = vadd.f32 %v3831, %v3852
  %v3855 = vadd.f32 %v3832, %v3852
  %v3856 = vadd.f32 %v3833, %v3852
  %v3857 = vadd.f32 %v3834, %v3852
  %v3858 = vadd.f32 %v3835, %v3852
  %v3859 = vadd.f32 %v3836, %v3852
  %v3860 = vadd.f32 %v3837, %v3852
  %v3861 = vadd.f32 %v3838, %v3852
  %v3862 = vadd.f32 %v3839, %v3852
  %v3863 = vadd.f32 %v3840, %v3852
  %v3864 = vadd.f32 %v3841, %v3852
  %v3865 = vadd.f32 %v3842, %v3852
  %v3866 = vadd.f32 %v3843, %v3852
  %v3867 = vadd.f32 %v3844, %v3852
  %v3868 = vadd.f32 %v3845, %v3852
  %v3869 = vadd.f32 %v3846, %v3852
  %v3870 = vmax.f32 %v3854, 0.0
  %v3871 = vmax.f32 %v3855, 0.0
  %v3872 = vmax.f32 %v3856, 0.0
  %v3873 = vmax.f32 %v3857, 0.0
  %v3874 = vmax.f32 %v3858, 0.0
  %v3875 = vmax.f32 %v3859, 0.0
  %v3876 = vmax.f32 %v3860, 0.0
  %v3877 = vmax.f32 %v3861, 0.0
  %v3878 = vmax.f32 %v3862, 0.0
  %v3879 = vmax.f32 %v3863, 0.0
  %v3880 = vmax.f32 %v3864, 0.0
  %v3881 = vmax.f32 %v3865, 0.0
  %v3882 = vmax.f32 %v3866, 0.0
  %v3883 = vmax.f32 %v3867, 0.0
  %v3884 = vmax.f32 %v3868, 0.0
  %v3885 = vmax.f32 %v3869, 0.0
  %v3886 = vpack.c.bf16 %v3871, %v3870
  %v3887 = vpack.c.bf16 %v3873, %v3872
  %v3888 = vpack.c.bf16 %v3875, %v3874
  %v3889 = vpack.c.bf16 %v3877, %v3876
  %v3890 = vpack.c.bf16 %v3879, %v3878
  %v3891 = vpack.c.bf16 %v3881, %v3880
  %v3892 = vpack.c.bf16 %v3883, %v3882
  %v3893 = vpack.c.bf16 %v3885, %v3884
  %v3894 = vld [vmem:[%s5] sm:$0xf]
  %v3895 = vld [vmem:[%s5 + $0x4] sm:$0xf]
  %v3896 = vld [vmem:[%s5 + $0x8] sm:$0xf]
  %v3897 = vld [vmem:[%s5 + $0xc] sm:$0xf]
  %v3898 = vld [vmem:[%s5 + $0x10] sm:$0xf]
  %v3899 = vld [vmem:[%s5 + $0x14] sm:$0xf]
  %v3900 = vld [vmem:[%s5 + $0x18] sm:$0xf]
  %v3901 = vld [vmem:[%s5 + $0x1c] sm:$0xf]
  %v3902 = vld [vmem:[%s5 + $0x20] sm:$0xf]
  %v3903 = vld [vmem:[%s5 + $0x24] sm:$0xf]
  %v3904 = vld [vmem:[%s5 + $0x28] sm:$0xf]
  %v3905 = vld [vmem:[%s5 + $0x2c] sm:$0xf]
  %v3906 = vld [vmem:[%s5 + $0x30] sm:$0xf]
  %v3907 = vld [vmem:[%s5 + $0x34] sm:$0xf]
  %v3908 = vld [vmem:[%s5 + $0x38] sm:$0xf]
  %v3909 = vld [vmem:[%s5 + $0x3c] sm:$0xf]
  %s3910 = scalar_lea.vmem %s48, 8
  %v3911 = vld [vmem:[%s3910] sm:$0xff]
  %v3912 = vld [vmem:[%s3910 + $0x8] sm:$0xff]
  %v3913 = vld [vmem:[%s3910 + $0x10] sm:$0xff]
  %v3914 = vld [vmem:[%s3910 + $0x18] sm:$0xff]
  %v3915 = vld [vmem:[%s3910 + $0x20] sm:$0xff]
  %v3916 = vld [vmem:[%s3910 + $0x28] sm:$0xff]
  %v3917 = vld [vmem:[%s3910 + $0x30] sm:$0xff]
  %v3918 = vld [vmem:[%s3910 + $0x38] sm:$0xff]
  %v3919 = vld [vmem:[%s3910 + $0x50] sm:$0xff]
  %v3920 = vld [vmem:[%s3910 + $0x58] sm:$0xff]
  %v3921 = vld [vmem:[%s3910 + $0x60] sm:$0xff]
  %v3922 = vld [vmem:[%s3910 + $0x68] sm:$0xff]
  %v3923 = vld [vmem:[%s3910 + $0x70] sm:$0xff]
  %v3924 = vld [vmem:[%s3910 + $0x78] sm:$0xff]
  %v3925 = vld [vmem:[%s3910 + $0x80] sm:$0xff]
  %v3926 = vld [vmem:[%s3910 + $0x88] sm:$0xff]
  %v3927 = vld [vmem:[%s6] sm:$0x1]
  %v3929 = vlaneseq
  %v3930 = vshrl.u32 %v3929, 7
  %v3931 = vsub.s32 0, %v3930
  %v3932 = vrot.slane %v3927, %v3931
  %v3950 = vunpack.c.l.b16 %v3894
  %v3951 = vunpack.c.l.b16 %v3895
  %v3952 = vunpack.c.l.b16 %v3896
  %v3953 = vunpack.c.l.b16 %v3897
  %v3954 = vunpack.c.l.b16 %v3898
  %v3955 = vunpack.c.l.b16 %v3899
  %v3956 = vunpack.c.l.b16 %v3900
  %v3957 = vunpack.c.l.b16 %v3901
  %v3958 = vunpack.c.l.b16 %v3902
  %v3959 = vunpack.c.l.b16 %v3903
  %v3960 = vunpack.c.l.b16 %v3904
  %v3961 = vunpack.c.l.b16 %v3905
  %v3962 = vunpack.c.l.b16 %v3906
  %v3963 = vunpack.c.l.b16 %v3907
  %v3964 = vunpack.c.l.b16 %v3908
  %v3965 = vunpack.c.l.b16 %v3909
  %v3966 = vpack.c.b16 %v3951, %v3950
  %v3967 = vpack.c.b16 %v3953, %v3952
  %v3968 = vpack.c.b16 %v3955, %v3954
  %v3969 = vpack.c.b16 %v3957, %v3956
  %v3970 = vpack.c.b16 %v3959, %v3958
  %v3971 = vpack.c.b16 %v3961, %v3960
  %v3972 = vpack.c.b16 %v3963, %v3962
  %v3973 = vpack.c.b16 %v3965, %v3964
  %3982 = vmatprep.subr.bf16.mxu0 0
  %3983 = vmatpush1.bf16.msra.mxu0 %v3966
  %3984 = vmatprep.subr.bf16.mxu0 0
  %3985 = vmatpush1.bf16.msra.mxu0 %v3967
  %3986 = vmatprep.subr.bf16.mxu0 0
  %3987 = vmatpush1.bf16.msra.mxu0 %v3968
  %3988 = vmatprep.subr.bf16.mxu0 0
  %3989 = vmatpush1.bf16.msra.mxu0 %v3969
  %3990 = vmatprep.subr.bf16.mxu0 0
  %3991 = vmatpush1.bf16.msra.mxu0 %v3970
  %3992 = vmatprep.subr.bf16.mxu0 0
  %3993 = vmatpush1.bf16.msra.mxu0 %v3971
  %3994 = vmatprep.subr.bf16.mxu0 0
  %3995 = vmatpush1.bf16.msra.mxu0 %v3972
  %3996 = vmatprep.subr.bf16.mxu0 0
  %3997 = vmatpush1.bf16.msra.mxu0 %v3973
  %3998 = vmatprep.subr.bf16.mxu0 0
  %3999 = vmatpush1.bf16.msra.mxu0 0
  %4000 = vmatprep.subr.bf16.mxu0 0
  %4001 = vmatpush1.bf16.msra.mxu0 0
  %4002 = vmatprep.subr.bf16.mxu0 0
  %4003 = vmatpush1.bf16.msra.mxu0 0
  %4004 = vmatprep.subr.bf16.mxu0 0
  %4005 = vmatpush1.bf16.msra.mxu0 0
  %4006 = vmatprep.subr.bf16.mxu0 0
  %4007 = vmatpush1.bf16.msra.mxu0 0
  %4008 = vmatprep.subr.bf16.mxu0 0
  %4009 = vmatpush1.bf16.msra.mxu0 0
  %4010 = vmatprep.subr.bf16.mxu0 0
  %4011 = vmatpush1.bf16.msra.mxu0 0
  %4012 = vmatprep.subr.bf16.mxu0 0
  %4013 = vmatpush1.bf16.msra.mxu0 0
  %4014 = vmatprep.mubr.bf16.mxu0 0
  %4015 = vmatmul.mubr.bf16.gmra.mrb[0].mxu0 %v3886
  %v4016 = vpop.f32.mrb[0].mxu0
  %v4017 = vadd.f32 %v3932, %v4016
  %v4018 = vpop.f32.mrb[0].mxu0
  %v4019 = vpop.f32.mrb[0].mxu0
  %v4020 = vadd.f32 %v3932, %v4019
  %v4021 = vpop.f32.mrb[0].mxu0
  %4022 = vmatprep.mubr.bf16.mxu0 0
  %4023 = vmatmul.mubr.bf16.gmra.mrb[0].mxu0 %v3887
  %v4024 = vpop.f32.mrb[0].mxu0
  %v4025 = vadd.f32 %v3932, %v4024
  %v4026 = vpop.f32.mrb[0].mxu0
  %v4027 = vpop.f32.mrb[0].mxu0
  %v4028 = vadd.f32 %v3932, %v4027
  %v4029 = vpop.f32.mrb[0].mxu0
  %4030 = vmatprep.mubr.bf16.mxu0 0
  %4031 = vmatmul.mubr.bf16.gmra.mrb[0].mxu0 %v3888
  %v4032 = vpop.f32.mrb[0].mxu0
  %v4033 = vadd.f32 %v3932, %v4032
  %v4034 = vpop.f32.mrb[0].mxu0
  %v4035 = vpop.f32.mrb[0].mxu0
  %v4036 = vadd.f32 %v3932, %v4035
  %v4037 = vpop.f32.mrb[0].mxu0
  %4038 = vmatprep.mubr.bf16.mxu0 0
  %4039 = vmatmul.mubr.bf16.gmra.mrb[0].mxu0 %v3889
  %v4040 = vpop.f32.mrb[0].mxu0
  %v4041 = vadd.f32 %v3932, %v4040
  %v4042 = vpop.f32.mrb[0].mxu0
  %v4043 = vpop.f32.mrb[0].mxu0
  %v4044 = vadd.f32 %v3932, %v4043
  %v4045 = vpop.f32.mrb[0].mxu0
  %4046 = vmatprep.mubr.bf16.mxu0 0
  %4047 = vmatmul.mubr.bf16.gmra.mrb[0].mxu0 %v3890
  %v4048 = vpop.f32.mrb[0].mxu0
  %v4049 = vadd.f32 %v3932, %v4048
  %v4050 = vpop.f32.mrb[0].mxu0
  %v4051 = vpop.f32.mrb[0].mxu0
  %v4052 = vadd.f32 %v3932, %v4051
  %v4053 = vpop.f32.mrb[0].mxu0
  %4054 = vmatprep.mubr.bf16.mxu0 0
  %4055 = vmatmul.mubr.bf16.gmra.mrb[0].mxu0 %v3891
  %v4056 = vpop.f32.mrb[0].mxu0
  %v4057 = vadd.f32 %v3932, %v4056
  %v4058 = vpop.f32.mrb[0].mxu0
  %v4059 = vpop.f32.mrb[0].mxu0
  %v4060 = vadd.f32 %v3932, %v4059
  %v4061 = vpop.f32.mrb[0].mxu0
  %4062 = vmatprep.mubr.bf16.mxu0 0
  %4063 = vmatmul.mubr.bf16.gmra.mrb[0].mxu0 %v3892
  %v4064 = vpop.f32.mrb[0].mxu0
  %v4065 = vadd.f32 %v3932, %v4064
  %v4066 = vpop.f32.mrb[0].mxu0
  %v4067 = vpop.f32.mrb[0].mxu0
  %v4068 = vadd.f32 %v3932, %v4067
  %v4069 = vpop.f32.mrb[0].mxu0
  %4070 = vmatprep.mubr.bf16.mxu0 0
  %4071 = vmatmul.mubr.bf16.gmra.mrb[0].mxu0 %v3893
  %v4072 = vpop.f32.mrb[0].mxu0
  %v4073 = vadd.f32 %v3932, %v4072
  %v4074 = vpop.f32.mrb[0].mxu0
  %v4075 = vpop.f32.mrb[0].mxu0
  %v4076 = vadd.f32 %v3932, %v4075
  %v4077 = vpop.f32.mrb[0].mxu0
  %4078 = vdwg.mxu0
  %v4079 = vadd.f32 %v4017, %v3911
  %v4080 = vadd.f32 %v4020, %v3912
  %v4081 = vadd.f32 %v4025, %v3913
  %v4082 = vadd.f32 %v4028, %v3914
  %v4083 = vadd.f32 %v4033, %v3915
  %v4084 = vadd.f32 %v4036, %v3916
  %v4085 = vadd.f32 %v4041, %v3917
  %v4086 = vadd.f32 %v4044, %v3918
  %v4087 = vadd.f32 %v4049, %v3919
  %v4088 = vadd.f32 %v4052, %v3920
  %v4089 = vadd.f32 %v4057, %v3921
  %v4090 = vadd.f32 %v4060, %v3922
  %v4091 = vadd.f32 %v4065, %v3923
  %v4092 = vadd.f32 %v4068, %v3924
  %v4093 = vadd.f32 %v4073, %v3925
  %v4094 = vadd.f32 %v4076, %v3926
  %v4095 = vmax.f32 %v4079, 0.0
  %v4096 = vmax.f32 %v4080, 0.0
  %v4097 = vmax.f32 %v4081, 0.0
  %v4098 = vmax.f32 %v4082, 0.0
  %v4099 = vmax.f32 %v4083, 0.0
  %v4100 = vmax.f32 %v4084, 0.0
  %v4101 = vmax.f32 %v4085, 0.0
  %v4102 = vmax.f32 %v4086, 0.0
  %v4103 = vmax.f32 %v4087, 0.0
  %v4104 = vmax.f32 %v4088, 0.0
  %v4105 = vmax.f32 %v4089, 0.0
  %v4106 = vmax.f32 %v4090, 0.0
  %v4107 = vmax.f32 %v4091, 0.0
  %v4108 = vmax.f32 %v4092, 0.0
  %v4109 = vmax.f32 %v4093, 0.0
  %v4110 = vmax.f32 %v4094, 0.0
  %4111 = vst [vmem:[%s7] sm:$0xff] %v4095
  %4112 = vst [vmem:[%s7 + $0x8] sm:$0xff] %v4096
  %4113 = vst [vmem:[%s7 + $0x10] sm:$0xff] %v4097
  %4114 = vst [vmem:[%s7 + $0x18] sm:$0xff] %v4098
  %4115 = vst [vmem:[%s7 + $0x20] sm:$0xff] %v4099
  %4116 = vst [vmem:[%s7 + $0x28] sm:$0xff] %v4100
  %4117 = vst [vmem:[%s7 + $0x30] sm:$0xff] %v4101
  %4118 = vst [vmem:[%s7 + $0x38] sm:$0xff] %v4102
  %4119 = vst [vmem:[%s7 + $0x40] sm:$0xff] %v4103
  %4120 = vst [vmem:[%s7 + $0x48] sm:$0xff] %v4104
  %4121 = vst [vmem:[%s7 + $0x50] sm:$0xff] %v4105
  %4122 = vst [vmem:[%s7 + $0x58] sm:$0xff] %v4106
  %4123 = vst [vmem:[%s7 + $0x60] sm:$0xff] %v4107
  %4124 = vst [vmem:[%s7 + $0x68] sm:$0xff] %v4108
  %4125 = vst [vmem:[%s7 + $0x70] sm:$0xff] %v4109
  %4126 = vst [vmem:[%s7 + $0x78] sm:$0xff] %v4110
  // Predicated region
  $region34: #{bottleneck_forward.1} parent=0 // pred_check
    _
  $region35: #{bottleneck_forward.1} parent=0 // pred_check_branch
    %4128 = sbr.rel (0) target = $region37
  $region36: #{bottleneck_forward.1} parent=0 // pred_region
    _
  $region37: #{bottleneck_forward.1} parent=0 // pred_fallthru
    _
  // Predicated region
  $region38: #{bottleneck_forward.1} parent=0 // pred_check
    _
  $region39: #{bottleneck_forward.1} parent=0 // pred_check_branch
    %4130 = sbr.rel (0) target = $region41
  $region40: #{bottleneck_forward.1} parent=0 // pred_region
    _
  $region41: #{bottleneck_forward.1} parent=0 // pred_fallthru
    _

</llo_original>
